<compile_context>
chip_gen: v5e
topology: v5e:2x2
jax: 0.10.0
libtpu: 0.0.40
codegen_flags: <defaults>
</compile_context>

<pallas_src>
import functools

import jax
import jax.numpy as jnp
from jax import lax
from jax.experimental import pallas as pl
from jax.experimental.pallas import tpu as pltpu  # noqa: F401  (kept for TPU-specific params if needed)


# ----------------------------------------------------------------------------
# Kernel: the entire encoder (all layers, all batch elements) in one program.
# ----------------------------------------------------------------------------
def _layer_norm(z, gamma, beta, eps=1e-12):
    mu = jnp.mean(z, axis=-1, keepdims=True)
    var = jnp.mean((z - mu) ** 2, axis=-1, keepdims=True)
    # rsqrt -> EUP slot (otherwise idle here); saves VPU divide+sqrt bundles.
    return gamma * ((z - mu) * lax.rsqrt(var + eps)) + beta


def encoder_kernel(x_ref, allx_ref, mask_ref,
                   wq_ref, bq_ref, wkv_ref, bkv_ref, wo_ref, bo_ref,
                   g1_ref, be1_ref, w1_ref, b1_ref, w2_ref, b2_ref,
                   g2_ref, be2_ref, out_ref, *, n_layers, n_head, batch):
    D = x_ref.shape[-1]
    d_head = D // n_head
    scale = jnp.float32(1.0 / (d_head ** 0.5))

    for b in range(batch):                      # static loop: whole batch fused
        x = x_ref[b].astype(jnp.float32)        # (Lq, D)  -- stays resident
        ax = allx_ref[b].astype(jnp.float32)    # (Lkv, D)
        # masked_fill(mask == 0, -1e4): compare hoisted out of layer/head loops
        # (mask is layer- and head-invariant).
        mask0 = mask_ref[b] == 0                # (Lq, Lkv) bool

        for l in range(n_layers):               # static loop: x never leaves VMEM
            # ---- projections: Q on x; K and V fused into one (D, 2D) matmul --
            q = jnp.dot(x, wq_ref[l],
                        preferred_element_type=jnp.float32) + bq_ref[l]
            q = q * scale                       # fold 1/sqrt(d_head) once, not per head
            kv = jnp.dot(ax, wkv_ref[l],
                         preferred_element_type=jnp.float32) + bkv_ref[l]

            wo = wo_ref[l]                      # (D, D)

            # ---- per-head scaled-dot-product attention (static head loop) ----
            attn = None
            for h in range(n_head):
                lo, hi = h * d_head, (h + 1) * d_head
                qh = q[:, lo:hi]                # (Lq, dh)
                kh = kv[:, lo:hi]               # (Lkv, dh)
                vh = kv[:, D + lo:D + hi]       # (Lkv, dh)
                # q @ k^T without materializing a transpose (contract last dims).
                s = lax.dot_general(qh, kh, (((1,), (1,)), ((), ())),
                                    preferred_element_type=jnp.float32)
                s = jnp.where(mask0, jnp.float32(-10000.0), s)
                s = s - jnp.max(s, axis=-1, keepdims=True)
                p = jnp.exp(s)
                # TODO(synk): pl.reciprocal(approx=True) would offload to the
                # idle EUP slot but perturbs numerics slightly; keep exact.
                p = p * pl.reciprocal(jnp.sum(p, axis=-1, keepdims=True),
                                      approx=False)
                oh = jnp.dot(p, vh, preferred_element_type=jnp.float32)  # (Lq, dh)
                # Fold the output projection per head -> no lane-concat of heads.
                contrib = jnp.dot(oh, wo[lo:hi, :],
                                  preferred_element_type=jnp.float32)
                attn = contrib if attn is None else attn + contrib
            attn = attn + bo_ref[l]

            # ---- residual + LayerNorm 1 (dropout = identity in eval mode) ----
            y1 = _layer_norm(x + attn, g1_ref[l], be1_ref[l])

            # ---- position-wise FFN ----
            h1 = jnp.dot(y1, w1_ref[l],
                         preferred_element_type=jnp.float32) + b1_ref[l]
            h1 = jnp.maximum(h1, 0.0)
            ffn = jnp.dot(h1, w2_ref[l],
                          preferred_element_type=jnp.float32) + b2_ref[l]

            # ---- residual + LayerNorm 2 ----
            x = _layer_norm(y1 + ffn, g2_ref[l], be2_ref[l])

        out_ref[b] = x.astype(out_ref.dtype)


# ----------------------------------------------------------------------------
# Wrapper: stack per-layer params once, then ONE pallas_call for everything.
# ----------------------------------------------------------------------------
def stack_layer_params(layer_params):
    """Stack per-layer params with a leading n_layers axis; fuse K/V weights."""
    st = lambda name: jnp.stack([p[name] for p in layer_params], axis=0)
    return dict(
        wq=st("wq"), bq=st("bq"),
        wkv=jnp.stack([jnp.concatenate([p["wk"], p["wv"]], axis=1)
                       for p in layer_params], axis=0),          # (L, D, 2D)
        bkv=jnp.stack([jnp.concatenate([p["bk"], p["bv"]], axis=1)
                       for p in layer_params], axis=0),          # (L, 1, 2D)
        wo=st("wo"), bo=st("bo"),
        g1=st("g1"), be1=st("be1"),
        w1=st("w1"), b1=st("b1"), w2=st("w2"), b2=st("b2"),
        g2=st("g2"), be2=st("be2"),
    )


def encoder_single_agg(x, all_x, src_mask, stacked, n_head):
    """Equivalent of Encoder_single_agg.forward in a single Pallas kernel."""
    B, Lq, D = x.shape
    n_layers = stacked["wq"].shape[0]

    kernel = functools.partial(encoder_kernel, n_layers=n_layers,
                               n_head=n_head, batch=B)
    # Grid-less call: every operand is a whole-array block DMA'd to VMEM once;
    # the kernel body runs exactly once (no per-grid-step overhead, no
    # per-layer HBM round trip of x, no weight re-DMA, no double-buffering).
    return pl.pallas_call(
        kernel,
        out_shape=jax.ShapeDtypeStruct((B, Lq, D), x.dtype),
    )(x, all_x, src_mask,
      stacked["wq"], stacked["bq"], stacked["wkv"], stacked["bkv"],
      stacked["wo"], stacked["bo"], stacked["g1"], stacked["be1"],
      stacked["w1"], stacked["b1"], stacked["w2"], stacked["b2"],
      stacked["g2"], stacked["be2"])


# ----------------------------------------------------------------------------
# Deterministic parameter initialization (nn.Linear-style uniform init).
# Weights are stored pre-transposed to (in, out) so the kernel does x @ W + b.
# ----------------------------------------------------------------------------
def init_layer_params(key, d_model, ffn_hidden):
    def lin(k, fan_in, fan_out):
        kw, kb = jax.random.split(k)
        bound = 1.0 / jnp.sqrt(fan_in)
        w = jax.random.uniform(kw, (fan_in, fan_out), jnp.float32, -bound, bound)
        b = jax.random.uniform(kb, (1, fan_out), jnp.float32, -bound, bound)
        return w, b

    ks = jax.random.split(key, 6)
    wq, bq = lin(ks[0], d_model, d_model)
    wk, bk = lin(ks[1], d_model, d_model)
    wv, bv = lin(ks[2], d_model, d_model)
    wo, bo = lin(ks[3], d_model, d_model)
    w1, b1 = lin(ks[4], d_model, ffn_hidden)
    w2, b2 = lin(ks[5], ffn_hidden, d_model)
    return dict(
        wq=wq, bq=bq, wk=wk, bk=bk, wv=wv, bv=bv, wo=wo, bo=bo,
        g1=jnp.ones((1, d_model), jnp.float32),
        be1=jnp.zeros((1, d_model), jnp.float32),
        w1=w1, b1=b1, w2=w2, b2=b2,
        g2=jnp.ones((1, d_model), jnp.float32),
        be2=jnp.zeros((1, d_model), jnp.float32),
    )


if __name__ == "__main__":
    # Small shapes consistent with the module:
    d_model, ffn_hidden, n_head, n_layers, drop_prob = 32, 64, 4, 2, 0.1
    B, Lq, Lkv = 2, 8, 8

    key = jax.random.PRNGKey(0)
    kx, kax, km, kp = jax.random.split(key, 4)

    x = jax.random.normal(kx, (B, Lq, d_model), jnp.float32)
    all_x = jax.random.normal(kax, (B, Lkv, d_model), jnp.float32)
    # src_mask: 1 = attend, 0 = masked (masked_fill(mask == 0, -10000))
    src_mask = (jax.random.uniform(km, (B, Lq, Lkv)) > 0.2).astype(jnp.float32)

    layer_params = [
        init_layer_params(k, d_model, ffn_hidden)
        for k in jax.random.split(kp, n_layers)
    ]
    stacked = stack_layer_params(layer_params)   # one-time prep, outside kernel

    out = encoder_single_agg(x, all_x, src_mask, stacked, n_head)
    out = jax.block_until_ready(out)
    assert out.shape == (B, Lq, d_model) and out.dtype == jnp.float32
    print("KERNEL_OK")
</pallas_src>

<mosaic_0001>
module attributes {stable_mosaic.version = 11 : i64} {
  func.func @encoder_kernel(%arg0: memref<2x8x32xf32, #tpu.memory_space<vmem>>, %arg1: memref<2x8x32xf32, #tpu.memory_space<vmem>>, %arg2: memref<2x8x8xf32, #tpu.memory_space<vmem>>, %arg3: memref<2x32x32xf32, #tpu.memory_space<vmem>>, %arg4: memref<2x1x32xf32, #tpu.memory_space<vmem>>, %arg5: memref<2x32x64xf32, #tpu.memory_space<vmem>>, %arg6: memref<2x1x64xf32, #tpu.memory_space<vmem>>, %arg7: memref<2x32x32xf32, #tpu.memory_space<vmem>>, %arg8: memref<2x1x32xf32, #tpu.memory_space<vmem>>, %arg9: memref<2x1x32xf32, #tpu.memory_space<vmem>>, %arg10: memref<2x1x32xf32, #tpu.memory_space<vmem>>, %arg11: memref<2x32x64xf32, #tpu.memory_space<vmem>>, %arg12: memref<2x1x64xf32, #tpu.memory_space<vmem>>, %arg13: memref<2x64x32xf32, #tpu.memory_space<vmem>>, %arg14: memref<2x1x32xf32, #tpu.memory_space<vmem>>, %arg15: memref<2x1x32xf32, #tpu.memory_space<vmem>>, %arg16: memref<2x1x32xf32, #tpu.memory_space<vmem>>, %arg17: memref<2x8x32xf32, #tpu.memory_space<vmem>>) attributes {dimension_semantics = [], scalar_prefetch = 0 : i64, scratch_operands = 0 : i64, tpu.core_type = #tpu.core_type<tc>} {
    %c0 = arith.constant 0 : index
    %c0_0 = arith.constant 0 : index
    %c0_1 = arith.constant 0 : index
    %0 = vector.load %arg0[%c0, %c0_0, %c0_1] : memref<2x8x32xf32, #tpu.memory_space<vmem>>, vector<1x8x32xf32>
    %1 = vector.shape_cast %0 : vector<1x8x32xf32> to vector<8x32xf32>
    %c0_2 = arith.constant 0 : index
    %c0_3 = arith.constant 0 : index
    %c0_4 = arith.constant 0 : index
    %2 = vector.load %arg1[%c0_2, %c0_3, %c0_4] : memref<2x8x32xf32, #tpu.memory_space<vmem>>, vector<1x8x32xf32>
    %3 = vector.shape_cast %2 : vector<1x8x32xf32> to vector<8x32xf32>
    %c0_5 = arith.constant 0 : index
    %c0_6 = arith.constant 0 : index
    %c0_7 = arith.constant 0 : index
    %4 = vector.load %arg2[%c0_5, %c0_6, %c0_7] : memref<2x8x8xf32, #tpu.memory_space<vmem>>, vector<1x8x8xf32>
    %5 = vector.shape_cast %4 : vector<1x8x8xf32> to vector<8x8xf32>
    %cst = arith.constant 0.000000e+00 : f32
    %6 = vector.broadcast %cst : f32 to vector<8x8xf32>
    %7 = arith.cmpf oeq, %5, %6 : vector<8x8xf32>
    %c0_8 = arith.constant 0 : index
    %c0_9 = arith.constant 0 : index
    %c0_10 = arith.constant 0 : index
    %8 = vector.load %arg3[%c0_8, %c0_9, %c0_10] : memref<2x32x32xf32, #tpu.memory_space<vmem>>, vector<1x32x32xf32>
    %9 = vector.shape_cast %8 : vector<1x32x32xf32> to vector<32x32xf32>
    %cst_11 = arith.constant dense<0.000000e+00> : vector<8x32xf32>
    %10 = tpu.matmul %1, %9, %cst_11 {dimension_numbers = #tpu.dot_dimension_numbers<[1], [0], [0], [1], [0, 0, 1, 1], [], []>} : vector<8x32xf32>, vector<32x32xf32>, vector<8x32xf32> -> vector<8x32xf32>
    %c0_12 = arith.constant 0 : index
    %c0_13 = arith.constant 0 : index
    %c0_14 = arith.constant 0 : index
    %11 = vector.load %arg4[%c0_12, %c0_13, %c0_14] : memref<2x1x32xf32, #tpu.memory_space<vmem>>, vector<1x1x32xf32>
    %12 = vector.shape_cast %11 : vector<1x1x32xf32> to vector<1x32xf32>
    %13 = vector.broadcast %12 : vector<1x32xf32> to vector<8x32xf32>
    %14 = arith.addf %10, %13 : vector<8x32xf32>
    %cst_15 = arith.constant 0.353553385 : f32
    %15 = vector.broadcast %cst_15 : f32 to vector<8x32xf32>
    %16 = arith.mulf %14, %15 : vector<8x32xf32>
    %c0_16 = arith.constant 0 : index
    %c0_17 = arith.constant 0 : index
    %c0_18 = arith.constant 0 : index
    %17 = vector.load %arg5[%c0_16, %c0_17, %c0_18] : memref<2x32x64xf32, #tpu.memory_space<vmem>>, vector<1x32x64xf32>
    %18 = vector.shape_cast %17 : vector<1x32x64xf32> to vector<32x64xf32>
    %cst_19 = arith.constant dense<0.000000e+00> : vector<8x64xf32>
    %19 = tpu.matmul %3, %18, %cst_19 {dimension_numbers = #tpu.dot_dimension_numbers<[1], [0], [0], [1], [0, 0, 1, 1], [], []>} : vector<8x32xf32>, vector<32x64xf32>, vector<8x64xf32> -> vector<8x64xf32>
    %c0_20 = arith.constant 0 : index
    %c0_21 = arith.constant 0 : index
    %c0_22 = arith.constant 0 : index
    %20 = vector.load %arg6[%c0_20, %c0_21, %c0_22] : memref<2x1x64xf32, #tpu.memory_space<vmem>>, vector<1x1x64xf32>
    %21 = vector.shape_cast %20 : vector<1x1x64xf32> to vector<1x64xf32>
    %22 = vector.broadcast %21 : vector<1x64xf32> to vector<8x64xf32>
    %23 = arith.addf %19, %22 : vector<8x64xf32>
    %c0_23 = arith.constant 0 : index
    %c0_24 = arith.constant 0 : index
    %c0_25 = arith.constant 0 : index
    %24 = vector.load %arg7[%c0_23, %c0_24, %c0_25] : memref<2x32x32xf32, #tpu.memory_space<vmem>>, vector<1x32x32xf32>
    %25 = vector.shape_cast %24 : vector<1x32x32xf32> to vector<32x32xf32>
    %26 = vector.extract_strided_slice %16 {offsets = [0, 0], sizes = [8, 8], strides = [1, 1]} : vector<8x32xf32> to vector<8x8xf32>
    %27 = vector.extract_strided_slice %23 {offsets = [0, 0], sizes = [8, 8], strides = [1, 1]} : vector<8x64xf32> to vector<8x8xf32>
    %28 = vector.extract_strided_slice %23 {offsets = [0, 32], sizes = [8, 8], strides = [1, 1]} : vector<8x64xf32> to vector<8x8xf32>
    %cst_26 = arith.constant dense<0.000000e+00> : vector<8x8xf32>
    %29 = tpu.matmul %26, %27, %cst_26 {dimension_numbers = #tpu.dot_dimension_numbers<[1], [1], [0], [0], [0, 0, 1, 0], [], []>} : vector<8x8xf32>, vector<8x8xf32>, vector<8x8xf32> -> vector<8x8xf32>
    %cst_27 = arith.constant -1.000000e+04 : f32
    %30 = vector.broadcast %cst_27 : f32 to vector<8x8xf32>
    %31 = arith.select %7, %30, %29 : vector<8x8xi1>, vector<8x8xf32>
    %cst_28 = arith.constant dense<0xFF800000> : vector<8xf32>
    %32 = vector.multi_reduction <maximumf>, %31, %cst_28 [1] : vector<8x8xf32> to vector<8xf32>
    %33 = vector.shape_cast %32 : vector<8xf32> to vector<8x1xf32>
    %34 = vector.broadcast %33 : vector<8x1xf32> to vector<8x8xf32>
    %35 = arith.subf %31, %34 : vector<8x8xf32>
    %36 = math.exp %35 : vector<8x8xf32>
    %cst_29 = arith.constant dense<0.000000e+00> : vector<8xf32>
    %37 = vector.multi_reduction <add>, %36, %cst_29 [1] : vector<8x8xf32> to vector<8xf32>
    %38 = vector.shape_cast %37 : vector<8xf32> to vector<8x1xf32>
    %39 = tpu.reciprocal %38 : vector<8x1xf32> -> vector<8x1xf32>
    %40 = vector.broadcast %39 : vector<8x1xf32> to vector<8x8xf32>
    %41 = arith.mulf %36, %40 : vector<8x8xf32>
    %cst_30 = arith.constant dense<0.000000e+00> : vector<8x8xf32>
    %42 = tpu.matmul %41, %28, %cst_30 {dimension_numbers = #tpu.dot_dimension_numbers<[1], [0], [0], [1], [0, 0, 1, 1], [], []>} : vector<8x8xf32>, vector<8x8xf32>, vector<8x8xf32> -> vector<8x8xf32>
    %43 = vector.extract_strided_slice %25 {offsets = [0, 0], sizes = [8, 32], strides = [1, 1]} : vector<32x32xf32> to vector<8x32xf32>
    %cst_31 = arith.constant dense<0.000000e+00> : vector<8x32xf32>
    %44 = tpu.matmul %42, %43, %cst_31 {dimension_numbers = #tpu.dot_dimension_numbers<[1], [0], [0], [1], [0, 0, 1, 1], [], []>} : vector<8x8xf32>, vector<8x32xf32>, vector<8x32xf32> -> vector<8x32xf32>
    %45 = vector.extract_strided_slice %16 {offsets = [0, 8], sizes = [8, 8], strides = [1, 1]} : vector<8x32xf32> to vector<8x8xf32>
    %46 = vector.extract_strided_slice %23 {offsets = [0, 8], sizes = [8, 8], strides = [1, 1]} : vector<8x64xf32> to vector<8x8xf32>
    %47 = vector.extract_strided_slice %23 {offsets = [0, 40], sizes = [8, 8], strides = [1, 1]} : vector<8x64xf32> to vector<8x8xf32>
    %cst_32 = arith.constant dense<0.000000e+00> : vector<8x8xf32>
    %48 = tpu.matmul %45, %46, %cst_32 {dimension_numbers = #tpu.dot_dimension_numbers<[1], [1], [0], [0], [0, 0, 1, 0], [], []>} : vector<8x8xf32>, vector<8x8xf32>, vector<8x8xf32> -> vector<8x8xf32>
    %cst_33 = arith.constant -1.000000e+04 : f32
    %49 = vector.broadcast %cst_33 : f32 to vector<8x8xf32>
    %50 = arith.select %7, %49, %48 : vector<8x8xi1>, vector<8x8xf32>
    %cst_34 = arith.constant dense<0xFF800000> : vector<8xf32>
    %51 = vector.multi_reduction <maximumf>, %50, %cst_34 [1] : vector<8x8xf32> to vector<8xf32>
    %52 = vector.shape_cast %51 : vector<8xf32> to vector<8x1xf32>
    %53 = vector.broadcast %52 : vector<8x1xf32> to vector<8x8xf32>
    %54 = arith.subf %50, %53 : vector<8x8xf32>
    %55 = math.exp %54 : vector<8x8xf32>
    %cst_35 = arith.constant dense<0.000000e+00> : vector<8xf32>
    %56 = vector.multi_reduction <add>, %55, %cst_35 [1] : vector<8x8xf32> to vector<8xf32>
    %57 = vector.shape_cast %56 : vector<8xf32> to vector<8x1xf32>
    %58 = tpu.reciprocal %57 : vector<8x1xf32> -> vector<8x1xf32>
    %59 = vector.broadcast %58 : vector<8x1xf32> to vector<8x8xf32>
    %60 = arith.mulf %55, %59 : vector<8x8xf32>
    %cst_36 = arith.constant dense<0.000000e+00> : vector<8x8xf32>
    %61 = tpu.matmul %60, %47, %cst_36 {dimension_numbers = #tpu.dot_dimension_numbers<[1], [0], [0], [1], [0, 0, 1, 1], [], []>} : vector<8x8xf32>, vector<8x8xf32>, vector<8x8xf32> -> vector<8x8xf32>
    %62 = vector.extract_strided_slice %25 {offsets = [8, 0], sizes = [8, 32], strides = [1, 1]} : vector<32x32xf32> to vector<8x32xf32>
    %cst_37 = arith.constant dense<0.000000e+00> : vector<8x32xf32>
    %63 = tpu.matmul %61, %62, %cst_37 {dimension_numbers = #tpu.dot_dimension_numbers<[1], [0], [0], [1], [0, 0, 1, 1], [], []>} : vector<8x8xf32>, vector<8x32xf32>, vector<8x32xf32> -> vector<8x32xf32>
    %64 = arith.addf %44, %63 : vector<8x32xf32>
    %65 = vector.extract_strided_slice %16 {offsets = [0, 16], sizes = [8, 8], strides = [1, 1]} : vector<8x32xf32> to vector<8x8xf32>
    %66 = vector.extract_strided_slice %23 {offsets = [0, 16], sizes = [8, 8], strides = [1, 1]} : vector<8x64xf32> to vector<8x8xf32>
    %67 = vector.extract_strided_slice %23 {offsets = [0, 48], sizes = [8, 8], strides = [1, 1]} : vector<8x64xf32> to vector<8x8xf32>
    %cst_38 = arith.constant dense<0.000000e+00> : vector<8x8xf32>
    %68 = tpu.matmul %65, %66, %cst_38 {dimension_numbers = #tpu.dot_dimension_numbers<[1], [1], [0], [0], [0, 0, 1, 0], [], []>} : vector<8x8xf32>, vector<8x8xf32>, vector<8x8xf32> -> vector<8x8xf32>
    %cst_39 = arith.constant -1.000000e+04 : f32
    %69 = vector.broadcast %cst_39 : f32 to vector<8x8xf32>
    %70 = arith.select %7, %69, %68 : vector<8x8xi1>, vector<8x8xf32>
    %cst_40 = arith.constant dense<0xFF800000> : vector<8xf32>
    %71 = vector.multi_reduction <maximumf>, %70, %cst_40 [1] : vector<8x8xf32> to vector<8xf32>
    %72 = vector.shape_cast %71 : vector<8xf32> to vector<8x1xf32>
    %73 = vector.broadcast %72 : vector<8x1xf32> to vector<8x8xf32>
    %74 = arith.subf %70, %73 : vector<8x8xf32>
    %75 = math.exp %74 : vector<8x8xf32>
    %cst_41 = arith.constant dense<0.000000e+00> : vector<8xf32>
    %76 = vector.multi_reduction <add>, %75, %cst_41 [1] : vector<8x8xf32> to vector<8xf32>
    %77 = vector.shape_cast %76 : vector<8xf32> to vector<8x1xf32>
    %78 = tpu.reciprocal %77 : vector<8x1xf32> -> vector<8x1xf32>
    %79 = vector.broadcast %78 : vector<8x1xf32> to vector<8x8xf32>
    %80 = arith.mulf %75, %79 : vector<8x8xf32>
    %cst_42 = arith.constant dense<0.000000e+00> : vector<8x8xf32>
    %81 = tpu.matmul %80, %67, %cst_42 {dimension_numbers = #tpu.dot_dimension_numbers<[1], [0], [0], [1], [0, 0, 1, 1], [], []>} : vector<8x8xf32>, vector<8x8xf32>, vector<8x8xf32> -> vector<8x8xf32>
    %82 = vector.extract_strided_slice %25 {offsets = [16, 0], sizes = [8, 32], strides = [1, 1]} : vector<32x32xf32> to vector<8x32xf32>
    %cst_43 = arith.constant dense<0.000000e+00> : vector<8x32xf32>
    %83 = tpu.matmul %81, %82, %cst_43 {dimension_numbers = #tpu.dot_dimension_numbers<[1], [0], [0], [1], [0, 0, 1, 1], [], []>} : vector<8x8xf32>, vector<8x32xf32>, vector<8x32xf32> -> vector<8x32xf32>
    %84 = arith.addf %64, %83 : vector<8x32xf32>
    %85 = vector.extract_strided_slice %16 {offsets = [0, 24], sizes = [8, 8], strides = [1, 1]} : vector<8x32xf32> to vector<8x8xf32>
    %86 = vector.extract_strided_slice %23 {offsets = [0, 24], sizes = [8, 8], strides = [1, 1]} : vector<8x64xf32> to vector<8x8xf32>
    %87 = vector.extract_strided_slice %23 {offsets = [0, 56], sizes = [8, 8], strides = [1, 1]} : vector<8x64xf32> to vector<8x8xf32>
    %cst_44 = arith.constant dense<0.000000e+00> : vector<8x8xf32>
    %88 = tpu.matmul %85, %86, %cst_44 {dimension_numbers = #tpu.dot_dimension_numbers<[1], [1], [0], [0], [0, 0, 1, 0], [], []>} : vector<8x8xf32>, vector<8x8xf32>, vector<8x8xf32> -> vector<8x8xf32>
    %cst_45 = arith.constant -1.000000e+04 : f32
    %89 = vector.broadcast %cst_45 : f32 to vector<8x8xf32>
    %90 = arith.select %7, %89, %88 : vector<8x8xi1>, vector<8x8xf32>
    %cst_46 = arith.constant dense<0xFF800000> : vector<8xf32>
    %91 = vector.multi_reduction <maximumf>, %90, %cst_46 [1] : vector<8x8xf32> to vector<8xf32>
    %92 = vector.shape_cast %91 : vector<8xf32> to vector<8x1xf32>
    %93 = vector.broadcast %92 : vector<8x1xf32> to vector<8x8xf32>
    %94 = arith.subf %90, %93 : vector<8x8xf32>
    %95 = math.exp %94 : vector<8x8xf32>
    %cst_47 = arith.constant dense<0.000000e+00> : vector<8xf32>
    %96 = vector.multi_reduction <add>, %95, %cst_47 [1] : vector<8x8xf32> to vector<8xf32>
    %97 = vector.shape_cast %96 : vector<8xf32> to vector<8x1xf32>
    %98 = tpu.reciprocal %97 : vector<8x1xf32> -> vector<8x1xf32>
    %99 = vector.broadcast %98 : vector<8x1xf32> to vector<8x8xf32>
    %100 = arith.mulf %95, %99 : vector<8x8xf32>
    %cst_48 = arith.constant dense<0.000000e+00> : vector<8x8xf32>
    %101 = tpu.matmul %100, %87, %cst_48 {dimension_numbers = #tpu.dot_dimension_numbers<[1], [0], [0], [1], [0, 0, 1, 1], [], []>} : vector<8x8xf32>, vector<8x8xf32>, vector<8x8xf32> -> vector<8x8xf32>
    %102 = vector.extract_strided_slice %25 {offsets = [24, 0], sizes = [8, 32], strides = [1, 1]} : vector<32x32xf32> to vector<8x32xf32>
    %cst_49 = arith.constant dense<0.000000e+00> : vector<8x32xf32>
    %103 = tpu.matmul %101, %102, %cst_49 {dimension_numbers = #tpu.dot_dimension_numbers<[1], [0], [0], [1], [0, 0, 1, 1], [], []>} : vector<8x8xf32>, vector<8x32xf32>, vector<8x32xf32> -> vector<8x32xf32>
    %104 = arith.addf %84, %103 : vector<8x32xf32>
    %c0_50 = arith.constant 0 : index
    %c0_51 = arith.constant 0 : index
    %c0_52 = arith.constant 0 : index
    %105 = vector.load %arg8[%c0_50, %c0_51, %c0_52] : memref<2x1x32xf32, #tpu.memory_space<vmem>>, vector<1x1x32xf32>
    %106 = vector.shape_cast %105 : vector<1x1x32xf32> to vector<1x32xf32>
    %107 = vector.broadcast %106 : vector<1x32xf32> to vector<8x32xf32>
    %108 = arith.addf %104, %107 : vector<8x32xf32>
    %109 = arith.addf %1, %108 : vector<8x32xf32>
    %c0_53 = arith.constant 0 : index
    %c0_54 = arith.constant 0 : index
    %c0_55 = arith.constant 0 : index
    %110 = vector.load %arg9[%c0_53, %c0_54, %c0_55] : memref<2x1x32xf32, #tpu.memory_space<vmem>>, vector<1x1x32xf32>
    %111 = vector.shape_cast %110 : vector<1x1x32xf32> to vector<1x32xf32>
    %c0_56 = arith.constant 0 : index
    %c0_57 = arith.constant 0 : index
    %c0_58 = arith.constant 0 : index
    %112 = vector.load %arg10[%c0_56, %c0_57, %c0_58] : memref<2x1x32xf32, #tpu.memory_space<vmem>>, vector<1x1x32xf32>
    %113 = vector.shape_cast %112 : vector<1x1x32xf32> to vector<1x32xf32>
    %cst_59 = arith.constant dense<0.000000e+00> : vector<8xf32>
    %114 = vector.multi_reduction <add>, %109, %cst_59 [1] : vector<8x32xf32> to vector<8xf32>
    %115 = vector.shape_cast %114 : vector<8xf32> to vector<8x1xf32>
    %cst_60 = arith.constant 3.200000e+01 : f32
    %116 = vector.broadcast %cst_60 : f32 to vector<8x1xf32>
    %117 = arith.divf %115, %116 : vector<8x1xf32>
    %118 = vector.broadcast %117 : vector<8x1xf32> to vector<8x32xf32>
    %119 = arith.subf %109, %118 : vector<8x32xf32>
    %120 = arith.mulf %119, %119 : vector<8x32xf32>
    %cst_61 = arith.constant dense<0.000000e+00> : vector<8xf32>
    %121 = vector.multi_reduction <add>, %120, %cst_61 [1] : vector<8x32xf32> to vector<8xf32>
    %122 = vector.shape_cast %121 : vector<8xf32> to vector<8x1xf32>
    %cst_62 = arith.constant 3.200000e+01 : f32
    %123 = vector.broadcast %cst_62 : f32 to vector<8x1xf32>
    %124 = arith.divf %122, %123 : vector<8x1xf32>
    %125 = vector.broadcast %117 : vector<8x1xf32> to vector<8x32xf32>
    %126 = arith.subf %109, %125 : vector<8x32xf32>
    %cst_63 = arith.constant 9.99999996E-13 : f32
    %127 = vector.broadcast %cst_63 : f32 to vector<8x1xf32>
    %128 = arith.addf %124, %127 : vector<8x1xf32>
    %129 = math.rsqrt %128 : vector<8x1xf32>
    %130 = vector.broadcast %129 : vector<8x1xf32> to vector<8x32xf32>
    %131 = arith.mulf %126, %130 : vector<8x32xf32>
    %132 = vector.broadcast %111 : vector<1x32xf32> to vector<8x32xf32>
    %133 = arith.mulf %132, %131 : vector<8x32xf32>
    %134 = vector.broadcast %113 : vector<1x32xf32> to vector<8x32xf32>
    %135 = arith.addf %133, %134 : vector<8x32xf32>
    %c0_64 = arith.constant 0 : index
    %c0_65 = arith.constant 0 : index
    %c0_66 = arith.constant 0 : index
    %136 = vector.load %arg11[%c0_64, %c0_65, %c0_66] : memref<2x32x64xf32, #tpu.memory_space<vmem>>, vector<1x32x64xf32>
    %137 = vector.shape_cast %136 : vector<1x32x64xf32> to vector<32x64xf32>
    %cst_67 = arith.constant dense<0.000000e+00> : vector<8x64xf32>
    %138 = tpu.matmul %135, %137, %cst_67 {dimension_numbers = #tpu.dot_dimension_numbers<[1], [0], [0], [1], [0, 0, 1, 1], [], []>} : vector<8x32xf32>, vector<32x64xf32>, vector<8x64xf32> -> vector<8x64xf32>
    %c0_68 = arith.constant 0 : index
    %c0_69 = arith.constant 0 : index
    %c0_70 = arith.constant 0 : index
    %139 = vector.load %arg12[%c0_68, %c0_69, %c0_70] : memref<2x1x64xf32, #tpu.memory_space<vmem>>, vector<1x1x64xf32>
    %140 = vector.shape_cast %139 : vector<1x1x64xf32> to vector<1x64xf32>
    %141 = vector.broadcast %140 : vector<1x64xf32> to vector<8x64xf32>
    %142 = arith.addf %138, %141 : vector<8x64xf32>
    %cst_71 = arith.constant 0.000000e+00 : f32
    %143 = vector.broadcast %cst_71 : f32 to vector<8x64xf32>
    %144 = arith.maximumf %142, %143 : vector<8x64xf32>
    %c0_72 = arith.constant 0 : index
    %c0_73 = arith.constant 0 : index
    %c0_74 = arith.constant 0 : index
    %145 = vector.load %arg13[%c0_72, %c0_73, %c0_74] : memref<2x64x32xf32, #tpu.memory_space<vmem>>, vector<1x64x32xf32>
    %146 = vector.shape_cast %145 : vector<1x64x32xf32> to vector<64x32xf32>
    %cst_75 = arith.constant dense<0.000000e+00> : vector<8x32xf32>
    %147 = tpu.matmul %144, %146, %cst_75 {dimension_numbers = #tpu.dot_dimension_numbers<[1], [0], [0], [1], [0, 0, 1, 1], [], []>} : vector<8x64xf32>, vector<64x32xf32>, vector<8x32xf32> -> vector<8x32xf32>
    %c0_76 = arith.constant 0 : index
    %c0_77 = arith.constant 0 : index
    %c0_78 = arith.constant 0 : index
    %148 = vector.load %arg14[%c0_76, %c0_77, %c0_78] : memref<2x1x32xf32, #tpu.memory_space<vmem>>, vector<1x1x32xf32>
    %149 = vector.shape_cast %148 : vector<1x1x32xf32> to vector<1x32xf32>
    %150 = vector.broadcast %149 : vector<1x32xf32> to vector<8x32xf32>
    %151 = arith.addf %147, %150 : vector<8x32xf32>
    %152 = arith.addf %135, %151 : vector<8x32xf32>
    %c0_79 = arith.constant 0 : index
    %c0_80 = arith.constant 0 : index
    %c0_81 = arith.constant 0 : index
    %153 = vector.load %arg15[%c0_79, %c0_80, %c0_81] : memref<2x1x32xf32, #tpu.memory_space<vmem>>, vector<1x1x32xf32>
    %154 = vector.shape_cast %153 : vector<1x1x32xf32> to vector<1x32xf32>
    %c0_82 = arith.constant 0 : index
    %c0_83 = arith.constant 0 : index
    %c0_84 = arith.constant 0 : index
    %155 = vector.load %arg16[%c0_82, %c0_83, %c0_84] : memref<2x1x32xf32, #tpu.memory_space<vmem>>, vector<1x1x32xf32>
    %156 = vector.shape_cast %155 : vector<1x1x32xf32> to vector<1x32xf32>
    %cst_85 = arith.constant dense<0.000000e+00> : vector<8xf32>
    %157 = vector.multi_reduction <add>, %152, %cst_85 [1] : vector<8x32xf32> to vector<8xf32>
    %158 = vector.shape_cast %157 : vector<8xf32> to vector<8x1xf32>
    %cst_86 = arith.constant 3.200000e+01 : f32
    %159 = vector.broadcast %cst_86 : f32 to vector<8x1xf32>
    %160 = arith.divf %158, %159 : vector<8x1xf32>
    %161 = vector.broadcast %160 : vector<8x1xf32> to vector<8x32xf32>
    %162 = arith.subf %152, %161 : vector<8x32xf32>
    %163 = arith.mulf %162, %162 : vector<8x32xf32>
    %cst_87 = arith.constant dense<0.000000e+00> : vector<8xf32>
    %164 = vector.multi_reduction <add>, %163, %cst_87 [1] : vector<8x32xf32> to vector<8xf32>
    %165 = vector.shape_cast %164 : vector<8xf32> to vector<8x1xf32>
    %cst_88 = arith.constant 3.200000e+01 : f32
    %166 = vector.broadcast %cst_88 : f32 to vector<8x1xf32>
    %167 = arith.divf %165, %166 : vector<8x1xf32>
    %168 = vector.broadcast %160 : vector<8x1xf32> to vector<8x32xf32>
    %169 = arith.subf %152, %168 : vector<8x32xf32>
    %cst_89 = arith.constant 9.99999996E-13 : f32
    %170 = vector.broadcast %cst_89 : f32 to vector<8x1xf32>
    %171 = arith.addf %167, %170 : vector<8x1xf32>
    %172 = math.rsqrt %171 : vector<8x1xf32>
    %173 = vector.broadcast %172 : vector<8x1xf32> to vector<8x32xf32>
    %174 = arith.mulf %169, %173 : vector<8x32xf32>
    %175 = vector.broadcast %154 : vector<1x32xf32> to vector<8x32xf32>
    %176 = arith.mulf %175, %174 : vector<8x32xf32>
    %177 = vector.broadcast %156 : vector<1x32xf32> to vector<8x32xf32>
    %178 = arith.addf %176, %177 : vector<8x32xf32>
    %c1 = arith.constant 1 : index
    %c0_90 = arith.constant 0 : index
    %c0_91 = arith.constant 0 : index
    %179 = vector.load %arg3[%c1, %c0_90, %c0_91] : memref<2x32x32xf32, #tpu.memory_space<vmem>>, vector<1x32x32xf32>
    %180 = vector.shape_cast %179 : vector<1x32x32xf32> to vector<32x32xf32>
    %cst_92 = arith.constant dense<0.000000e+00> : vector<8x32xf32>
    %181 = tpu.matmul %178, %180, %cst_92 {dimension_numbers = #tpu.dot_dimension_numbers<[1], [0], [0], [1], [0, 0, 1, 1], [], []>} : vector<8x32xf32>, vector<32x32xf32>, vector<8x32xf32> -> vector<8x32xf32>
    %c1_93 = arith.constant 1 : index
    %c0_94 = arith.constant 0 : index
    %c0_95 = arith.constant 0 : index
    %182 = vector.load %arg4[%c1_93, %c0_94, %c0_95] : memref<2x1x32xf32, #tpu.memory_space<vmem>>, vector<1x1x32xf32>
    %183 = vector.shape_cast %182 : vector<1x1x32xf32> to vector<1x32xf32>
    %184 = vector.broadcast %183 : vector<1x32xf32> to vector<8x32xf32>
    %185 = arith.addf %181, %184 : vector<8x32xf32>
    %cst_96 = arith.constant 0.353553385 : f32
    %186 = vector.broadcast %cst_96 : f32 to vector<8x32xf32>
    %187 = arith.mulf %185, %186 : vector<8x32xf32>
    %c1_97 = arith.constant 1 : index
    %c0_98 = arith.constant 0 : index
    %c0_99 = arith.constant 0 : index
    %188 = vector.load %arg5[%c1_97, %c0_98, %c0_99] : memref<2x32x64xf32, #tpu.memory_space<vmem>>, vector<1x32x64xf32>
    %189 = vector.shape_cast %188 : vector<1x32x64xf32> to vector<32x64xf32>
    %cst_100 = arith.constant dense<0.000000e+00> : vector<8x64xf32>
    %190 = tpu.matmul %3, %189, %cst_100 {dimension_numbers = #tpu.dot_dimension_numbers<[1], [0], [0], [1], [0, 0, 1, 1], [], []>} : vector<8x32xf32>, vector<32x64xf32>, vector<8x64xf32> -> vector<8x64xf32>
    %c1_101 = arith.constant 1 : index
    %c0_102 = arith.constant 0 : index
    %c0_103 = arith.constant 0 : index
    %191 = vector.load %arg6[%c1_101, %c0_102, %c0_103] : memref<2x1x64xf32, #tpu.memory_space<vmem>>, vector<1x1x64xf32>
    %192 = vector.shape_cast %191 : vector<1x1x64xf32> to vector<1x64xf32>
    %193 = vector.broadcast %192 : vector<1x64xf32> to vector<8x64xf32>
    %194 = arith.addf %190, %193 : vector<8x64xf32>
    %c1_104 = arith.constant 1 : index
    %c0_105 = arith.constant 0 : index
    %c0_106 = arith.constant 0 : index
    %195 = vector.load %arg7[%c1_104, %c0_105, %c0_106] : memref<2x32x32xf32, #tpu.memory_space<vmem>>, vector<1x32x32xf32>
    %196 = vector.shape_cast %195 : vector<1x32x32xf32> to vector<32x32xf32>
    %197 = vector.extract_strided_slice %187 {offsets = [0, 0], sizes = [8, 8], strides = [1, 1]} : vector<8x32xf32> to vector<8x8xf32>
    %198 = vector.extract_strided_slice %194 {offsets = [0, 0], sizes = [8, 8], strides = [1, 1]} : vector<8x64xf32> to vector<8x8xf32>
    %199 = vector.extract_strided_slice %194 {offsets = [0, 32], sizes = [8, 8], strides = [1, 1]} : vector<8x64xf32> to vector<8x8xf32>
    %cst_107 = arith.constant dense<0.000000e+00> : vector<8x8xf32>
    %200 = tpu.matmul %197, %198, %cst_107 {dimension_numbers = #tpu.dot_dimension_numbers<[1], [1], [0], [0], [0, 0, 1, 0], [], []>} : vector<8x8xf32>, vector<8x8xf32>, vector<8x8xf32> -> vector<8x8xf32>
    %cst_108 = arith.constant -1.000000e+04 : f32
    %201 = vector.broadcast %cst_108 : f32 to vector<8x8xf32>
    %202 = arith.select %7, %201, %200 : vector<8x8xi1>, vector<8x8xf32>
    %cst_109 = arith.constant dense<0xFF800000> : vector<8xf32>
    %203 = vector.multi_reduction <maximumf>, %202, %cst_109 [1] : vector<8x8xf32> to vector<8xf32>
    %204 = vector.shape_cast %203 : vector<8xf32> to vector<8x1xf32>
    %205 = vector.broadcast %204 : vector<8x1xf32> to vector<8x8xf32>
    %206 = arith.subf %202, %205 : vector<8x8xf32>
    %207 = math.exp %206 : vector<8x8xf32>
    %cst_110 = arith.constant dense<0.000000e+00> : vector<8xf32>
    %208 = vector.multi_reduction <add>, %207, %cst_110 [1] : vector<8x8xf32> to vector<8xf32>
    %209 = vector.shape_cast %208 : vector<8xf32> to vector<8x1xf32>
    %210 = tpu.reciprocal %209 : vector<8x1xf32> -> vector<8x1xf32>
    %211 = vector.broadcast %210 : vector<8x1xf32> to vector<8x8xf32>
    %212 = arith.mulf %207, %211 : vector<8x8xf32>
    %cst_111 = arith.constant dense<0.000000e+00> : vector<8x8xf32>
    %213 = tpu.matmul %212, %199, %cst_111 {dimension_numbers = #tpu.dot_dimension_numbers<[1], [0], [0], [1], [0, 0, 1, 1], [], []>} : vector<8x8xf32>, vector<8x8xf32>, vector<8x8xf32> -> vector<8x8xf32>
    %214 = vector.extract_strided_slice %196 {offsets = [0, 0], sizes = [8, 32], strides = [1, 1]} : vector<32x32xf32> to vector<8x32xf32>
    %cst_112 = arith.constant dense<0.000000e+00> : vector<8x32xf32>
    %215 = tpu.matmul %213, %214, %cst_112 {dimension_numbers = #tpu.dot_dimension_numbers<[1], [0], [0], [1], [0, 0, 1, 1], [], []>} : vector<8x8xf32>, vector<8x32xf32>, vector<8x32xf32> -> vector<8x32xf32>
    %216 = vector.extract_strided_slice %187 {offsets = [0, 8], sizes = [8, 8], strides = [1, 1]} : vector<8x32xf32> to vector<8x8xf32>
    %217 = vector.extract_strided_slice %194 {offsets = [0, 8], sizes = [8, 8], strides = [1, 1]} : vector<8x64xf32> to vector<8x8xf32>
    %218 = vector.extract_strided_slice %194 {offsets = [0, 40], sizes = [8, 8], strides = [1, 1]} : vector<8x64xf32> to vector<8x8xf32>
    %cst_113 = arith.constant dense<0.000000e+00> : vector<8x8xf32>
    %219 = tpu.matmul %216, %217, %cst_113 {dimension_numbers = #tpu.dot_dimension_numbers<[1], [1], [0], [0], [0, 0, 1, 0], [], []>} : vector<8x8xf32>, vector<8x8xf32>, vector<8x8xf32> -> vector<8x8xf32>
    %cst_114 = arith.constant -1.000000e+04 : f32
    %220 = vector.broadcast %cst_114 : f32 to vector<8x8xf32>
    %221 = arith.select %7, %220, %219 : vector<8x8xi1>, vector<8x8xf32>
    %cst_115 = arith.constant dense<0xFF800000> : vector<8xf32>
    %222 = vector.multi_reduction <maximumf>, %221, %cst_115 [1] : vector<8x8xf32> to vector<8xf32>
    %223 = vector.shape_cast %222 : vector<8xf32> to vector<8x1xf32>
    %224 = vector.broadcast %223 : vector<8x1xf32> to vector<8x8xf32>
    %225 = arith.subf %221, %224 : vector<8x8xf32>
    %226 = math.exp %225 : vector<8x8xf32>
    %cst_116 = arith.constant dense<0.000000e+00> : vector<8xf32>
    %227 = vector.multi_reduction <add>, %226, %cst_116 [1] : vector<8x8xf32> to vector<8xf32>
    %228 = vector.shape_cast %227 : vector<8xf32> to vector<8x1xf32>
    %229 = tpu.reciprocal %228 : vector<8x1xf32> -> vector<8x1xf32>
    %230 = vector.broadcast %229 : vector<8x1xf32> to vector<8x8xf32>
    %231 = arith.mulf %226, %230 : vector<8x8xf32>
    %cst_117 = arith.constant dense<0.000000e+00> : vector<8x8xf32>
    %232 = tpu.matmul %231, %218, %cst_117 {dimension_numbers = #tpu.dot_dimension_numbers<[1], [0], [0], [1], [0, 0, 1, 1], [], []>} : vector<8x8xf32>, vector<8x8xf32>, vector<8x8xf32> -> vector<8x8xf32>
    %233 = vector.extract_strided_slice %196 {offsets = [8, 0], sizes = [8, 32], strides = [1, 1]} : vector<32x32xf32> to vector<8x32xf32>
    %cst_118 = arith.constant dense<0.000000e+00> : vector<8x32xf32>
    %234 = tpu.matmul %232, %233, %cst_118 {dimension_numbers = #tpu.dot_dimension_numbers<[1], [0], [0], [1], [0, 0, 1, 1], [], []>} : vector<8x8xf32>, vector<8x32xf32>, vector<8x32xf32> -> vector<8x32xf32>
    %235 = arith.addf %215, %234 : vector<8x32xf32>
    %236 = vector.extract_strided_slice %187 {offsets = [0, 16], sizes = [8, 8], strides = [1, 1]} : vector<8x32xf32> to vector<8x8xf32>
    %237 = vector.extract_strided_slice %194 {offsets = [0, 16], sizes = [8, 8], strides = [1, 1]} : vector<8x64xf32> to vector<8x8xf32>
    %238 = vector.extract_strided_slice %194 {offsets = [0, 48], sizes = [8, 8], strides = [1, 1]} : vector<8x64xf32> to vector<8x8xf32>
    %cst_119 = arith.constant dense<0.000000e+00> : vector<8x8xf32>
    %239 = tpu.matmul %236, %237, %cst_119 {dimension_numbers = #tpu.dot_dimension_numbers<[1], [1], [0], [0], [0, 0, 1, 0], [], []>} : vector<8x8xf32>, vector<8x8xf32>, vector<8x8xf32> -> vector<8x8xf32>
    %cst_120 = arith.constant -1.000000e+04 : f32
    %240 = vector.broadcast %cst_120 : f32 to vector<8x8xf32>
    %241 = arith.select %7, %240, %239 : vector<8x8xi1>, vector<8x8xf32>
    %cst_121 = arith.constant dense<0xFF800000> : vector<8xf32>
    %242 = vector.multi_reduction <maximumf>, %241, %cst_121 [1] : vector<8x8xf32> to vector<8xf32>
    %243 = vector.shape_cast %242 : vector<8xf32> to vector<8x1xf32>
    %244 = vector.broadcast %243 : vector<8x1xf32> to vector<8x8xf32>
    %245 = arith.subf %241, %244 : vector<8x8xf32>
    %246 = math.exp %245 : vector<8x8xf32>
    %cst_122 = arith.constant dense<0.000000e+00> : vector<8xf32>
    %247 = vector.multi_reduction <add>, %246, %cst_122 [1] : vector<8x8xf32> to vector<8xf32>
    %248 = vector.shape_cast %247 : vector<8xf32> to vector<8x1xf32>
    %249 = tpu.reciprocal %248 : vector<8x1xf32> -> vector<8x1xf32>
    %250 = vector.broadcast %249 : vector<8x1xf32> to vector<8x8xf32>
    %251 = arith.mulf %246, %250 : vector<8x8xf32>
    %cst_123 = arith.constant dense<0.000000e+00> : vector<8x8xf32>
    %252 = tpu.matmul %251, %238, %cst_123 {dimension_numbers = #tpu.dot_dimension_numbers<[1], [0], [0], [1], [0, 0, 1, 1], [], []>} : vector<8x8xf32>, vector<8x8xf32>, vector<8x8xf32> -> vector<8x8xf32>
    %253 = vector.extract_strided_slice %196 {offsets = [16, 0], sizes = [8, 32], strides = [1, 1]} : vector<32x32xf32> to vector<8x32xf32>
    %cst_124 = arith.constant dense<0.000000e+00> : vector<8x32xf32>
    %254 = tpu.matmul %252, %253, %cst_124 {dimension_numbers = #tpu.dot_dimension_numbers<[1], [0], [0], [1], [0, 0, 1, 1], [], []>} : vector<8x8xf32>, vector<8x32xf32>, vector<8x32xf32> -> vector<8x32xf32>
    %255 = arith.addf %235, %254 : vector<8x32xf32>
    %256 = vector.extract_strided_slice %187 {offsets = [0, 24], sizes = [8, 8], strides = [1, 1]} : vector<8x32xf32> to vector<8x8xf32>
    %257 = vector.extract_strided_slice %194 {offsets = [0, 24], sizes = [8, 8], strides = [1, 1]} : vector<8x64xf32> to vector<8x8xf32>
    %258 = vector.extract_strided_slice %194 {offsets = [0, 56], sizes = [8, 8], strides = [1, 1]} : vector<8x64xf32> to vector<8x8xf32>
    %cst_125 = arith.constant dense<0.000000e+00> : vector<8x8xf32>
    %259 = tpu.matmul %256, %257, %cst_125 {dimension_numbers = #tpu.dot_dimension_numbers<[1], [1], [0], [0], [0, 0, 1, 0], [], []>} : vector<8x8xf32>, vector<8x8xf32>, vector<8x8xf32> -> vector<8x8xf32>
    %cst_126 = arith.constant -1.000000e+04 : f32
    %260 = vector.broadcast %cst_126 : f32 to vector<8x8xf32>
    %261 = arith.select %7, %260, %259 : vector<8x8xi1>, vector<8x8xf32>
    %cst_127 = arith.constant dense<0xFF800000> : vector<8xf32>
    %262 = vector.multi_reduction <maximumf>, %261, %cst_127 [1] : vector<8x8xf32> to vector<8xf32>
    %263 = vector.shape_cast %262 : vector<8xf32> to vector<8x1xf32>
    %264 = vector.broadcast %263 : vector<8x1xf32> to vector<8x8xf32>
    %265 = arith.subf %261, %264 : vector<8x8xf32>
    %266 = math.exp %265 : vector<8x8xf32>
    %cst_128 = arith.constant dense<0.000000e+00> : vector<8xf32>
    %267 = vector.multi_reduction <add>, %266, %cst_128 [1] : vector<8x8xf32> to vector<8xf32>
    %268 = vector.shape_cast %267 : vector<8xf32> to vector<8x1xf32>
    %269 = tpu.reciprocal %268 : vector<8x1xf32> -> vector<8x1xf32>
    %270 = vector.broadcast %269 : vector<8x1xf32> to vector<8x8xf32>
    %271 = arith.mulf %266, %270 : vector<8x8xf32>
    %cst_129 = arith.constant dense<0.000000e+00> : vector<8x8xf32>
    %272 = tpu.matmul %271, %258, %cst_129 {dimension_numbers = #tpu.dot_dimension_numbers<[1], [0], [0], [1], [0, 0, 1, 1], [], []>} : vector<8x8xf32>, vector<8x8xf32>, vector<8x8xf32> -> vector<8x8xf32>
    %273 = vector.extract_strided_slice %196 {offsets = [24, 0], sizes = [8, 32], strides = [1, 1]} : vector<32x32xf32> to vector<8x32xf32>
    %cst_130 = arith.constant dense<0.000000e+00> : vector<8x32xf32>
    %274 = tpu.matmul %272, %273, %cst_130 {dimension_numbers = #tpu.dot_dimension_numbers<[1], [0], [0], [1], [0, 0, 1, 1], [], []>} : vector<8x8xf32>, vector<8x32xf32>, vector<8x32xf32> -> vector<8x32xf32>
    %275 = arith.addf %255, %274 : vector<8x32xf32>
    %c1_131 = arith.constant 1 : index
    %c0_132 = arith.constant 0 : index
    %c0_133 = arith.constant 0 : index
    %276 = vector.load %arg8[%c1_131, %c0_132, %c0_133] : memref<2x1x32xf32, #tpu.memory_space<vmem>>, vector<1x1x32xf32>
    %277 = vector.shape_cast %276 : vector<1x1x32xf32> to vector<1x32xf32>
    %278 = vector.broadcast %277 : vector<1x32xf32> to vector<8x32xf32>
    %279 = arith.addf %275, %278 : vector<8x32xf32>
    %280 = arith.addf %178, %279 : vector<8x32xf32>
    %c1_134 = arith.constant 1 : index
    %c0_135 = arith.constant 0 : index
    %c0_136 = arith.constant 0 : index
    %281 = vector.load %arg9[%c1_134, %c0_135, %c0_136] : memref<2x1x32xf32, #tpu.memory_space<vmem>>, vector<1x1x32xf32>
    %282 = vector.shape_cast %281 : vector<1x1x32xf32> to vector<1x32xf32>
    %c1_137 = arith.constant 1 : index
    %c0_138 = arith.constant 0 : index
    %c0_139 = arith.constant 0 : index
    %283 = vector.load %arg10[%c1_137, %c0_138, %c0_139] : memref<2x1x32xf32, #tpu.memory_space<vmem>>, vector<1x1x32xf32>
    %284 = vector.shape_cast %283 : vector<1x1x32xf32> to vector<1x32xf32>
    %cst_140 = arith.constant dense<0.000000e+00> : vector<8xf32>
    %285 = vector.multi_reduction <add>, %280, %cst_140 [1] : vector<8x32xf32> to vector<8xf32>
    %286 = vector.shape_cast %285 : vector<8xf32> to vector<8x1xf32>
    %cst_141 = arith.constant 3.200000e+01 : f32
    %287 = vector.broadcast %cst_141 : f32 to vector<8x1xf32>
    %288 = arith.divf %286, %287 : vector<8x1xf32>
    %289 = vector.broadcast %288 : vector<8x1xf32> to vector<8x32xf32>
    %290 = arith.subf %280, %289 : vector<8x32xf32>
    %291 = arith.mulf %290, %290 : vector<8x32xf32>
    %cst_142 = arith.constant dense<0.000000e+00> : vector<8xf32>
    %292 = vector.multi_reduction <add>, %291, %cst_142 [1] : vector<8x32xf32> to vector<8xf32>
    %293 = vector.shape_cast %292 : vector<8xf32> to vector<8x1xf32>
    %cst_143 = arith.constant 3.200000e+01 : f32
    %294 = vector.broadcast %cst_143 : f32 to vector<8x1xf32>
    %295 = arith.divf %293, %294 : vector<8x1xf32>
    %296 = vector.broadcast %288 : vector<8x1xf32> to vector<8x32xf32>
    %297 = arith.subf %280, %296 : vector<8x32xf32>
    %cst_144 = arith.constant 9.99999996E-13 : f32
    %298 = vector.broadcast %cst_144 : f32 to vector<8x1xf32>
    %299 = arith.addf %295, %298 : vector<8x1xf32>
    %300 = math.rsqrt %299 : vector<8x1xf32>
    %301 = vector.broadcast %300 : vector<8x1xf32> to vector<8x32xf32>
    %302 = arith.mulf %297, %301 : vector<8x32xf32>
    %303 = vector.broadcast %282 : vector<1x32xf32> to vector<8x32xf32>
    %304 = arith.mulf %303, %302 : vector<8x32xf32>
    %305 = vector.broadcast %284 : vector<1x32xf32> to vector<8x32xf32>
    %306 = arith.addf %304, %305 : vector<8x32xf32>
    %c1_145 = arith.constant 1 : index
    %c0_146 = arith.constant 0 : index
    %c0_147 = arith.constant 0 : index
    %307 = vector.load %arg11[%c1_145, %c0_146, %c0_147] : memref<2x32x64xf32, #tpu.memory_space<vmem>>, vector<1x32x64xf32>
    %308 = vector.shape_cast %307 : vector<1x32x64xf32> to vector<32x64xf32>
    %cst_148 = arith.constant dense<0.000000e+00> : vector<8x64xf32>
    %309 = tpu.matmul %306, %308, %cst_148 {dimension_numbers = #tpu.dot_dimension_numbers<[1], [0], [0], [1], [0, 0, 1, 1], [], []>} : vector<8x32xf32>, vector<32x64xf32>, vector<8x64xf32> -> vector<8x64xf32>
    %c1_149 = arith.constant 1 : index
    %c0_150 = arith.constant 0 : index
    %c0_151 = arith.constant 0 : index
    %310 = vector.load %arg12[%c1_149, %c0_150, %c0_151] : memref<2x1x64xf32, #tpu.memory_space<vmem>>, vector<1x1x64xf32>
    %311 = vector.shape_cast %310 : vector<1x1x64xf32> to vector<1x64xf32>
    %312 = vector.broadcast %311 : vector<1x64xf32> to vector<8x64xf32>
    %313 = arith.addf %309, %312 : vector<8x64xf32>
    %cst_152 = arith.constant 0.000000e+00 : f32
    %314 = vector.broadcast %cst_152 : f32 to vector<8x64xf32>
    %315 = arith.maximumf %313, %314 : vector<8x64xf32>
    %c1_153 = arith.constant 1 : index
    %c0_154 = arith.constant 0 : index
    %c0_155 = arith.constant 0 : index
    %316 = vector.load %arg13[%c1_153, %c0_154, %c0_155] : memref<2x64x32xf32, #tpu.memory_space<vmem>>, vector<1x64x32xf32>
    %317 = vector.shape_cast %316 : vector<1x64x32xf32> to vector<64x32xf32>
    %cst_156 = arith.constant dense<0.000000e+00> : vector<8x32xf32>
    %318 = tpu.matmul %315, %317, %cst_156 {dimension_numbers = #tpu.dot_dimension_numbers<[1], [0], [0], [1], [0, 0, 1, 1], [], []>} : vector<8x64xf32>, vector<64x32xf32>, vector<8x32xf32> -> vector<8x32xf32>
    %c1_157 = arith.constant 1 : index
    %c0_158 = arith.constant 0 : index
    %c0_159 = arith.constant 0 : index
    %319 = vector.load %arg14[%c1_157, %c0_158, %c0_159] : memref<2x1x32xf32, #tpu.memory_space<vmem>>, vector<1x1x32xf32>
    %320 = vector.shape_cast %319 : vector<1x1x32xf32> to vector<1x32xf32>
    %321 = vector.broadcast %320 : vector<1x32xf32> to vector<8x32xf32>
    %322 = arith.addf %318, %321 : vector<8x32xf32>
    %323 = arith.addf %306, %322 : vector<8x32xf32>
    %c1_160 = arith.constant 1 : index
    %c0_161 = arith.constant 0 : index
    %c0_162 = arith.constant 0 : index
    %324 = vector.load %arg15[%c1_160, %c0_161, %c0_162] : memref<2x1x32xf32, #tpu.memory_space<vmem>>, vector<1x1x32xf32>
    %325 = vector.shape_cast %324 : vector<1x1x32xf32> to vector<1x32xf32>
    %c1_163 = arith.constant 1 : index
    %c0_164 = arith.constant 0 : index
    %c0_165 = arith.constant 0 : index
    %326 = vector.load %arg16[%c1_163, %c0_164, %c0_165] : memref<2x1x32xf32, #tpu.memory_space<vmem>>, vector<1x1x32xf32>
    %327 = vector.shape_cast %326 : vector<1x1x32xf32> to vector<1x32xf32>
    %cst_166 = arith.constant dense<0.000000e+00> : vector<8xf32>
    %328 = vector.multi_reduction <add>, %323, %cst_166 [1] : vector<8x32xf32> to vector<8xf32>
    %329 = vector.shape_cast %328 : vector<8xf32> to vector<8x1xf32>
    %cst_167 = arith.constant 3.200000e+01 : f32
    %330 = vector.broadcast %cst_167 : f32 to vector<8x1xf32>
    %331 = arith.divf %329, %330 : vector<8x1xf32>
    %332 = vector.broadcast %331 : vector<8x1xf32> to vector<8x32xf32>
    %333 = arith.subf %323, %332 : vector<8x32xf32>
    %334 = arith.mulf %333, %333 : vector<8x32xf32>
    %cst_168 = arith.constant dense<0.000000e+00> : vector<8xf32>
    %335 = vector.multi_reduction <add>, %334, %cst_168 [1] : vector<8x32xf32> to vector<8xf32>
    %336 = vector.shape_cast %335 : vector<8xf32> to vector<8x1xf32>
    %cst_169 = arith.constant 3.200000e+01 : f32
    %337 = vector.broadcast %cst_169 : f32 to vector<8x1xf32>
    %338 = arith.divf %336, %337 : vector<8x1xf32>
    %339 = vector.broadcast %331 : vector<8x1xf32> to vector<8x32xf32>
    %340 = arith.subf %323, %339 : vector<8x32xf32>
    %cst_170 = arith.constant 9.99999996E-13 : f32
    %341 = vector.broadcast %cst_170 : f32 to vector<8x1xf32>
    %342 = arith.addf %338, %341 : vector<8x1xf32>
    %343 = math.rsqrt %342 : vector<8x1xf32>
    %344 = vector.broadcast %343 : vector<8x1xf32> to vector<8x32xf32>
    %345 = arith.mulf %340, %344 : vector<8x32xf32>
    %346 = vector.broadcast %325 : vector<1x32xf32> to vector<8x32xf32>
    %347 = arith.mulf %346, %345 : vector<8x32xf32>
    %348 = vector.broadcast %327 : vector<1x32xf32> to vector<8x32xf32>
    %349 = arith.addf %347, %348 : vector<8x32xf32>
    %c0_171 = arith.constant 0 : index
    %c0_172 = arith.constant 0 : index
    %c0_173 = arith.constant 0 : index
    %350 = vector.load %arg17[%c0_171, %c0_172, %c0_173] : memref<2x8x32xf32, #tpu.memory_space<vmem>>, vector<1x8x32xf32>
    %351 = vector.shape_cast %350 : vector<1x8x32xf32> to vector<8x32xf32>
    %352 = vector.shape_cast %349 : vector<8x32xf32> to vector<1x8x32xf32>
    tpu.vector_store %arg17[%c0_171, %c0_172, %c0_173], %352 {strides = array<i32>} : memref<2x8x32xf32, #tpu.memory_space<vmem>>, vector<1x8x32xf32>,
    %c1_174 = arith.constant 1 : index
    %c0_175 = arith.constant 0 : index
    %c0_176 = arith.constant 0 : index
    %353 = vector.load %arg0[%c1_174, %c0_175, %c0_176] : memref<2x8x32xf32, #tpu.memory_space<vmem>>, vector<1x8x32xf32>
    %354 = vector.shape_cast %353 : vector<1x8x32xf32> to vector<8x32xf32>
    %c1_177 = arith.constant 1 : index
    %c0_178 = arith.constant 0 : index
    %c0_179 = arith.constant 0 : index
    %355 = vector.load %arg1[%c1_177, %c0_178, %c0_179] : memref<2x8x32xf32, #tpu.memory_space<vmem>>, vector<1x8x32xf32>
    %356 = vector.shape_cast %355 : vector<1x8x32xf32> to vector<8x32xf32>
    %c1_180 = arith.constant 1 : index
    %c0_181 = arith.constant 0 : index
    %c0_182 = arith.constant 0 : index
    %357 = vector.load %arg2[%c1_180, %c0_181, %c0_182] : memref<2x8x8xf32, #tpu.memory_space<vmem>>, vector<1x8x8xf32>
    %358 = vector.shape_cast %357 : vector<1x8x8xf32> to vector<8x8xf32>
    %cst_183 = arith.constant 0.000000e+00 : f32
    %359 = vector.broadcast %cst_183 : f32 to vector<8x8xf32>
    %360 = arith.cmpf oeq, %358, %359 : vector<8x8xf32>
    %c0_184 = arith.constant 0 : index
    %c0_185 = arith.constant 0 : index
    %c0_186 = arith.constant 0 : index
    %361 = vector.load %arg3[%c0_184, %c0_185, %c0_186] : memref<2x32x32xf32, #tpu.memory_space<vmem>>, vector<1x32x32xf32>
    %362 = vector.shape_cast %361 : vector<1x32x32xf32> to vector<32x32xf32>
    %cst_187 = arith.constant dense<0.000000e+00> : vector<8x32xf32>
    %363 = tpu.matmul %354, %362, %cst_187 {dimension_numbers = #tpu.dot_dimension_numbers<[1], [0], [0], [1], [0, 0, 1, 1], [], []>} : vector<8x32xf32>, vector<32x32xf32>, vector<8x32xf32> -> vector<8x32xf32>
    %c0_188 = arith.constant 0 : index
    %c0_189 = arith.constant 0 : index
    %c0_190 = arith.constant 0 : index
    %364 = vector.load %arg4[%c0_188, %c0_189, %c0_190] : memref<2x1x32xf32, #tpu.memory_space<vmem>>, vector<1x1x32xf32>
    %365 = vector.shape_cast %364 : vector<1x1x32xf32> to vector<1x32xf32>
    %366 = vector.broadcast %365 : vector<1x32xf32> to vector<8x32xf32>
    %367 = arith.addf %363, %366 : vector<8x32xf32>
    %cst_191 = arith.constant 0.353553385 : f32
    %368 = vector.broadcast %cst_191 : f32 to vector<8x32xf32>
    %369 = arith.mulf %367, %368 : vector<8x32xf32>
    %c0_192 = arith.constant 0 : index
    %c0_193 = arith.constant 0 : index
    %c0_194 = arith.constant 0 : index
    %370 = vector.load %arg5[%c0_192, %c0_193, %c0_194] : memref<2x32x64xf32, #tpu.memory_space<vmem>>, vector<1x32x64xf32>
    %371 = vector.shape_cast %370 : vector<1x32x64xf32> to vector<32x64xf32>
    %cst_195 = arith.constant dense<0.000000e+00> : vector<8x64xf32>
    %372 = tpu.matmul %356, %371, %cst_195 {dimension_numbers = #tpu.dot_dimension_numbers<[1], [0], [0], [1], [0, 0, 1, 1], [], []>} : vector<8x32xf32>, vector<32x64xf32>, vector<8x64xf32> -> vector<8x64xf32>
    %c0_196 = arith.constant 0 : index
    %c0_197 = arith.constant 0 : index
    %c0_198 = arith.constant 0 : index
    %373 = vector.load %arg6[%c0_196, %c0_197, %c0_198] : memref<2x1x64xf32, #tpu.memory_space<vmem>>, vector<1x1x64xf32>
    %374 = vector.shape_cast %373 : vector<1x1x64xf32> to vector<1x64xf32>
    %375 = vector.broadcast %374 : vector<1x64xf32> to vector<8x64xf32>
    %376 = arith.addf %372, %375 : vector<8x64xf32>
    %c0_199 = arith.constant 0 : index
    %c0_200 = arith.constant 0 : index
    %c0_201 = arith.constant 0 : index
    %377 = vector.load %arg7[%c0_199, %c0_200, %c0_201] : memref<2x32x32xf32, #tpu.memory_space<vmem>>, vector<1x32x32xf32>
    %378 = vector.shape_cast %377 : vector<1x32x32xf32> to vector<32x32xf32>
    %379 = vector.extract_strided_slice %369 {offsets = [0, 0], sizes = [8, 8], strides = [1, 1]} : vector<8x32xf32> to vector<8x8xf32>
    %380 = vector.extract_strided_slice %376 {offsets = [0, 0], sizes = [8, 8], strides = [1, 1]} : vector<8x64xf32> to vector<8x8xf32>
    %381 = vector.extract_strided_slice %376 {offsets = [0, 32], sizes = [8, 8], strides = [1, 1]} : vector<8x64xf32> to vector<8x8xf32>
    %cst_202 = arith.constant dense<0.000000e+00> : vector<8x8xf32>
    %382 = tpu.matmul %379, %380, %cst_202 {dimension_numbers = #tpu.dot_dimension_numbers<[1], [1], [0], [0], [0, 0, 1, 0], [], []>} : vector<8x8xf32>, vector<8x8xf32>, vector<8x8xf32> -> vector<8x8xf32>
    %cst_203 = arith.constant -1.000000e+04 : f32
    %383 = vector.broadcast %cst_203 : f32 to vector<8x8xf32>
    %384 = arith.select %360, %383, %382 : vector<8x8xi1>, vector<8x8xf32>
    %cst_204 = arith.constant dense<0xFF800000> : vector<8xf32>
    %385 = vector.multi_reduction <maximumf>, %384, %cst_204 [1] : vector<8x8xf32> to vector<8xf32>
    %386 = vector.shape_cast %385 : vector<8xf32> to vector<8x1xf32>
    %387 = vector.broadcast %386 : vector<8x1xf32> to vector<8x8xf32>
    %388 = arith.subf %384, %387 : vector<8x8xf32>
    %389 = math.exp %388 : vector<8x8xf32>
    %cst_205 = arith.constant dense<0.000000e+00> : vector<8xf32>
    %390 = vector.multi_reduction <add>, %389, %cst_205 [1] : vector<8x8xf32> to vector<8xf32>
    %391 = vector.shape_cast %390 : vector<8xf32> to vector<8x1xf32>
    %392 = tpu.reciprocal %391 : vector<8x1xf32> -> vector<8x1xf32>
    %393 = vector.broadcast %392 : vector<8x1xf32> to vector<8x8xf32>
    %394 = arith.mulf %389, %393 : vector<8x8xf32>
    %cst_206 = arith.constant dense<0.000000e+00> : vector<8x8xf32>
    %395 = tpu.matmul %394, %381, %cst_206 {dimension_numbers = #tpu.dot_dimension_numbers<[1], [0], [0], [1], [0, 0, 1, 1], [], []>} : vector<8x8xf32>, vector<8x8xf32>, vector<8x8xf32> -> vector<8x8xf32>
    %396 = vector.extract_strided_slice %378 {offsets = [0, 0], sizes = [8, 32], strides = [1, 1]} : vector<32x32xf32> to vector<8x32xf32>
    %cst_207 = arith.constant dense<0.000000e+00> : vector<8x32xf32>
    %397 = tpu.matmul %395, %396, %cst_207 {dimension_numbers = #tpu.dot_dimension_numbers<[1], [0], [0], [1], [0, 0, 1, 1], [], []>} : vector<8x8xf32>, vector<8x32xf32>, vector<8x32xf32> -> vector<8x32xf32>
    %398 = vector.extract_strided_slice %369 {offsets = [0, 8], sizes = [8, 8], strides = [1, 1]} : vector<8x32xf32> to vector<8x8xf32>
    %399 = vector.extract_strided_slice %376 {offsets = [0, 8], sizes = [8, 8], strides = [1, 1]} : vector<8x64xf32> to vector<8x8xf32>
    %400 = vector.extract_strided_slice %376 {offsets = [0, 40], sizes = [8, 8], strides = [1, 1]} : vector<8x64xf32> to vector<8x8xf32>
    %cst_208 = arith.constant dense<0.000000e+00> : vector<8x8xf32>
    %401 = tpu.matmul %398, %399, %cst_208 {dimension_numbers = #tpu.dot_dimension_numbers<[1], [1], [0], [0], [0, 0, 1, 0], [], []>} : vector<8x8xf32>, vector<8x8xf32>, vector<8x8xf32> -> vector<8x8xf32>
    %cst_209 = arith.constant -1.000000e+04 : f32
    %402 = vector.broadcast %cst_209 : f32 to vector<8x8xf32>
    %403 = arith.select %360, %402, %401 : vector<8x8xi1>, vector<8x8xf32>
    %cst_210 = arith.constant dense<0xFF800000> : vector<8xf32>
    %404 = vector.multi_reduction <maximumf>, %403, %cst_210 [1] : vector<8x8xf32> to vector<8xf32>
    %405 = vector.shape_cast %404 : vector<8xf32> to vector<8x1xf32>
    %406 = vector.broadcast %405 : vector<8x1xf32> to vector<8x8xf32>
    %407 = arith.subf %403, %406 : vector<8x8xf32>
    %408 = math.exp %407 : vector<8x8xf32>
    %cst_211 = arith.constant dense<0.000000e+00> : vector<8xf32>
    %409 = vector.multi_reduction <add>, %408, %cst_211 [1] : vector<8x8xf32> to vector<8xf32>
    %410 = vector.shape_cast %409 : vector<8xf32> to vector<8x1xf32>
    %411 = tpu.reciprocal %410 : vector<8x1xf32> -> vector<8x1xf32>
    %412 = vector.broadcast %411 : vector<8x1xf32> to vector<8x8xf32>
    %413 = arith.mulf %408, %412 : vector<8x8xf32>
    %cst_212 = arith.constant dense<0.000000e+00> : vector<8x8xf32>
    %414 = tpu.matmul %413, %400, %cst_212 {dimension_numbers = #tpu.dot_dimension_numbers<[1], [0], [0], [1], [0, 0, 1, 1], [], []>} : vector<8x8xf32>, vector<8x8xf32>, vector<8x8xf32> -> vector<8x8xf32>
    %415 = vector.extract_strided_slice %378 {offsets = [8, 0], sizes = [8, 32], strides = [1, 1]} : vector<32x32xf32> to vector<8x32xf32>
    %cst_213 = arith.constant dense<0.000000e+00> : vector<8x32xf32>
    %416 = tpu.matmul %414, %415, %cst_213 {dimension_numbers = #tpu.dot_dimension_numbers<[1], [0], [0], [1], [0, 0, 1, 1], [], []>} : vector<8x8xf32>, vector<8x32xf32>, vector<8x32xf32> -> vector<8x32xf32>
    %417 = arith.addf %397, %416 : vector<8x32xf32>
    %418 = vector.extract_strided_slice %369 {offsets = [0, 16], sizes = [8, 8], strides = [1, 1]} : vector<8x32xf32> to vector<8x8xf32>
    %419 = vector.extract_strided_slice %376 {offsets = [0, 16], sizes = [8, 8], strides = [1, 1]} : vector<8x64xf32> to vector<8x8xf32>
    %420 = vector.extract_strided_slice %376 {offsets = [0, 48], sizes = [8, 8], strides = [1, 1]} : vector<8x64xf32> to vector<8x8xf32>
    %cst_214 = arith.constant dense<0.000000e+00> : vector<8x8xf32>
    %421 = tpu.matmul %418, %419, %cst_214 {dimension_numbers = #tpu.dot_dimension_numbers<[1], [1], [0], [0], [0, 0, 1, 0], [], []>} : vector<8x8xf32>, vector<8x8xf32>, vector<8x8xf32> -> vector<8x8xf32>
    %cst_215 = arith.constant -1.000000e+04 : f32
    %422 = vector.broadcast %cst_215 : f32 to vector<8x8xf32>
    %423 = arith.select %360, %422, %421 : vector<8x8xi1>, vector<8x8xf32>
    %cst_216 = arith.constant dense<0xFF800000> : vector<8xf32>
    %424 = vector.multi_reduction <maximumf>, %423, %cst_216 [1] : vector<8x8xf32> to vector<8xf32>
    %425 = vector.shape_cast %424 : vector<8xf32> to vector<8x1xf32>
    %426 = vector.broadcast %425 : vector<8x1xf32> to vector<8x8xf32>
    %427 = arith.subf %423, %426 : vector<8x8xf32>
    %428 = math.exp %427 : vector<8x8xf32>
    %cst_217 = arith.constant dense<0.000000e+00> : vector<8xf32>
    %429 = vector.multi_reduction <add>, %428, %cst_217 [1] : vector<8x8xf32> to vector<8xf32>
    %430 = vector.shape_cast %429 : vector<8xf32> to vector<8x1xf32>
    %431 = tpu.reciprocal %430 : vector<8x1xf32> -> vector<8x1xf32>
    %432 = vector.broadcast %431 : vector<8x1xf32> to vector<8x8xf32>
    %433 = arith.mulf %428, %432 : vector<8x8xf32>
    %cst_218 = arith.constant dense<0.000000e+00> : vector<8x8xf32>
    %434 = tpu.matmul %433, %420, %cst_218 {dimension_numbers = #tpu.dot_dimension_numbers<[1], [0], [0], [1], [0, 0, 1, 1], [], []>} : vector<8x8xf32>, vector<8x8xf32>, vector<8x8xf32> -> vector<8x8xf32>
    %435 = vector.extract_strided_slice %378 {offsets = [16, 0], sizes = [8, 32], strides = [1, 1]} : vector<32x32xf32> to vector<8x32xf32>
    %cst_219 = arith.constant dense<0.000000e+00> : vector<8x32xf32>
    %436 = tpu.matmul %434, %435, %cst_219 {dimension_numbers = #tpu.dot_dimension_numbers<[1], [0], [0], [1], [0, 0, 1, 1], [], []>} : vector<8x8xf32>, vector<8x32xf32>, vector<8x32xf32> -> vector<8x32xf32>
    %437 = arith.addf %417, %436 : vector<8x32xf32>
    %438 = vector.extract_strided_slice %369 {offsets = [0, 24], sizes = [8, 8], strides = [1, 1]} : vector<8x32xf32> to vector<8x8xf32>
    %439 = vector.extract_strided_slice %376 {offsets = [0, 24], sizes = [8, 8], strides = [1, 1]} : vector<8x64xf32> to vector<8x8xf32>
    %440 = vector.extract_strided_slice %376 {offsets = [0, 56], sizes = [8, 8], strides = [1, 1]} : vector<8x64xf32> to vector<8x8xf32>
    %cst_220 = arith.constant dense<0.000000e+00> : vector<8x8xf32>
    %441 = tpu.matmul %438, %439, %cst_220 {dimension_numbers = #tpu.dot_dimension_numbers<[1], [1], [0], [0], [0, 0, 1, 0], [], []>} : vector<8x8xf32>, vector<8x8xf32>, vector<8x8xf32> -> vector<8x8xf32>
    %cst_221 = arith.constant -1.000000e+04 : f32
    %442 = vector.broadcast %cst_221 : f32 to vector<8x8xf32>
    %443 = arith.select %360, %442, %441 : vector<8x8xi1>, vector<8x8xf32>
    %cst_222 = arith.constant dense<0xFF800000> : vector<8xf32>
    %444 = vector.multi_reduction <maximumf>, %443, %cst_222 [1] : vector<8x8xf32> to vector<8xf32>
    %445 = vector.shape_cast %444 : vector<8xf32> to vector<8x1xf32>
    %446 = vector.broadcast %445 : vector<8x1xf32> to vector<8x8xf32>
    %447 = arith.subf %443, %446 : vector<8x8xf32>
    %448 = math.exp %447 : vector<8x8xf32>
    %cst_223 = arith.constant dense<0.000000e+00> : vector<8xf32>
    %449 = vector.multi_reduction <add>, %448, %cst_223 [1] : vector<8x8xf32> to vector<8xf32>
    %450 = vector.shape_cast %449 : vector<8xf32> to vector<8x1xf32>
    %451 = tpu.reciprocal %450 : vector<8x1xf32> -> vector<8x1xf32>
    %452 = vector.broadcast %451 : vector<8x1xf32> to vector<8x8xf32>
    %453 = arith.mulf %448, %452 : vector<8x8xf32>
    %cst_224 = arith.constant dense<0.000000e+00> : vector<8x8xf32>
    %454 = tpu.matmul %453, %440, %cst_224 {dimension_numbers = #tpu.dot_dimension_numbers<[1], [0], [0], [1], [0, 0, 1, 1], [], []>} : vector<8x8xf32>, vector<8x8xf32>, vector<8x8xf32> -> vector<8x8xf32>
    %455 = vector.extract_strided_slice %378 {offsets = [24, 0], sizes = [8, 32], strides = [1, 1]} : vector<32x32xf32> to vector<8x32xf32>
    %cst_225 = arith.constant dense<0.000000e+00> : vector<8x32xf32>
    %456 = tpu.matmul %454, %455, %cst_225 {dimension_numbers = #tpu.dot_dimension_numbers<[1], [0], [0], [1], [0, 0, 1, 1], [], []>} : vector<8x8xf32>, vector<8x32xf32>, vector<8x32xf32> -> vector<8x32xf32>
    %457 = arith.addf %437, %456 : vector<8x32xf32>
    %c0_226 = arith.constant 0 : index
    %c0_227 = arith.constant 0 : index
    %c0_228 = arith.constant 0 : index
    %458 = vector.load %arg8[%c0_226, %c0_227, %c0_228] : memref<2x1x32xf32, #tpu.memory_space<vmem>>, vector<1x1x32xf32>
    %459 = vector.shape_cast %458 : vector<1x1x32xf32> to vector<1x32xf32>
    %460 = vector.broadcast %459 : vector<1x32xf32> to vector<8x32xf32>
    %461 = arith.addf %457, %460 : vector<8x32xf32>
    %462 = arith.addf %354, %461 : vector<8x32xf32>
    %c0_229 = arith.constant 0 : index
    %c0_230 = arith.constant 0 : index
    %c0_231 = arith.constant 0 : index
    %463 = vector.load %arg9[%c0_229, %c0_230, %c0_231] : memref<2x1x32xf32, #tpu.memory_space<vmem>>, vector<1x1x32xf32>
    %464 = vector.shape_cast %463 : vector<1x1x32xf32> to vector<1x32xf32>
    %c0_232 = arith.constant 0 : index
    %c0_233 = arith.constant 0 : index
    %c0_234 = arith.constant 0 : index
    %465 = vector.load %arg10[%c0_232, %c0_233, %c0_234] : memref<2x1x32xf32, #tpu.memory_space<vmem>>, vector<1x1x32xf32>
    %466 = vector.shape_cast %465 : vector<1x1x32xf32> to vector<1x32xf32>
    %cst_235 = arith.constant dense<0.000000e+00> : vector<8xf32>
    %467 = vector.multi_reduction <add>, %462, %cst_235 [1] : vector<8x32xf32> to vector<8xf32>
    %468 = vector.shape_cast %467 : vector<8xf32> to vector<8x1xf32>
    %cst_236 = arith.constant 3.200000e+01 : f32
    %469 = vector.broadcast %cst_236 : f32 to vector<8x1xf32>
    %470 = arith.divf %468, %469 : vector<8x1xf32>
    %471 = vector.broadcast %470 : vector<8x1xf32> to vector<8x32xf32>
    %472 = arith.subf %462, %471 : vector<8x32xf32>
    %473 = arith.mulf %472, %472 : vector<8x32xf32>
    %cst_237 = arith.constant dense<0.000000e+00> : vector<8xf32>
    %474 = vector.multi_reduction <add>, %473, %cst_237 [1] : vector<8x32xf32> to vector<8xf32>
    %475 = vector.shape_cast %474 : vector<8xf32> to vector<8x1xf32>
    %cst_238 = arith.constant 3.200000e+01 : f32
    %476 = vector.broadcast %cst_238 : f32 to vector<8x1xf32>
    %477 = arith.divf %475, %476 : vector<8x1xf32>
    %478 = vector.broadcast %470 : vector<8x1xf32> to vector<8x32xf32>
    %479 = arith.subf %462, %478 : vector<8x32xf32>
    %cst_239 = arith.constant 9.99999996E-13 : f32
    %480 = vector.broadcast %cst_239 : f32 to vector<8x1xf32>
    %481 = arith.addf %477, %480 : vector<8x1xf32>
    %482 = math.rsqrt %481 : vector<8x1xf32>
    %483 = vector.broadcast %482 : vector<8x1xf32> to vector<8x32xf32>
    %484 = arith.mulf %479, %483 : vector<8x32xf32>
    %485 = vector.broadcast %464 : vector<1x32xf32> to vector<8x32xf32>
    %486 = arith.mulf %485, %484 : vector<8x32xf32>
    %487 = vector.broadcast %466 : vector<1x32xf32> to vector<8x32xf32>
    %488 = arith.addf %486, %487 : vector<8x32xf32>
    %c0_240 = arith.constant 0 : index
    %c0_241 = arith.constant 0 : index
    %c0_242 = arith.constant 0 : index
    %489 = vector.load %arg11[%c0_240, %c0_241, %c0_242] : memref<2x32x64xf32, #tpu.memory_space<vmem>>, vector<1x32x64xf32>
    %490 = vector.shape_cast %489 : vector<1x32x64xf32> to vector<32x64xf32>
    %cst_243 = arith.constant dense<0.000000e+00> : vector<8x64xf32>
    %491 = tpu.matmul %488, %490, %cst_243 {dimension_numbers = #tpu.dot_dimension_numbers<[1], [0], [0], [1], [0, 0, 1, 1], [], []>} : vector<8x32xf32>, vector<32x64xf32>, vector<8x64xf32> -> vector<8x64xf32>
    %c0_244 = arith.constant 0 : index
    %c0_245 = arith.constant 0 : index
    %c0_246 = arith.constant 0 : index
    %492 = vector.load %arg12[%c0_244, %c0_245, %c0_246] : memref<2x1x64xf32, #tpu.memory_space<vmem>>, vector<1x1x64xf32>
    %493 = vector.shape_cast %492 : vector<1x1x64xf32> to vector<1x64xf32>
    %494 = vector.broadcast %493 : vector<1x64xf32> to vector<8x64xf32>
    %495 = arith.addf %491, %494 : vector<8x64xf32>
    %cst_247 = arith.constant 0.000000e+00 : f32
    %496 = vector.broadcast %cst_247 : f32 to vector<8x64xf32>
    %497 = arith.maximumf %495, %496 : vector<8x64xf32>
    %c0_248 = arith.constant 0 : index
    %c0_249 = arith.constant 0 : index
    %c0_250 = arith.constant 0 : index
    %498 = vector.load %arg13[%c0_248, %c0_249, %c0_250] : memref<2x64x32xf32, #tpu.memory_space<vmem>>, vector<1x64x32xf32>
    %499 = vector.shape_cast %498 : vector<1x64x32xf32> to vector<64x32xf32>
    %cst_251 = arith.constant dense<0.000000e+00> : vector<8x32xf32>
    %500 = tpu.matmul %497, %499, %cst_251 {dimension_numbers = #tpu.dot_dimension_numbers<[1], [0], [0], [1], [0, 0, 1, 1], [], []>} : vector<8x64xf32>, vector<64x32xf32>, vector<8x32xf32> -> vector<8x32xf32>
    %c0_252 = arith.constant 0 : index
    %c0_253 = arith.constant 0 : index
    %c0_254 = arith.constant 0 : index
    %501 = vector.load %arg14[%c0_252, %c0_253, %c0_254] : memref<2x1x32xf32, #tpu.memory_space<vmem>>, vector<1x1x32xf32>
    %502 = vector.shape_cast %501 : vector<1x1x32xf32> to vector<1x32xf32>
    %503 = vector.broadcast %502 : vector<1x32xf32> to vector<8x32xf32>
    %504 = arith.addf %500, %503 : vector<8x32xf32>
    %505 = arith.addf %488, %504 : vector<8x32xf32>
    %c0_255 = arith.constant 0 : index
    %c0_256 = arith.constant 0 : index
    %c0_257 = arith.constant 0 : index
    %506 = vector.load %arg15[%c0_255, %c0_256, %c0_257] : memref<2x1x32xf32, #tpu.memory_space<vmem>>, vector<1x1x32xf32>
    %507 = vector.shape_cast %506 : vector<1x1x32xf32> to vector<1x32xf32>
    %c0_258 = arith.constant 0 : index
    %c0_259 = arith.constant 0 : index
    %c0_260 = arith.constant 0 : index
    %508 = vector.load %arg16[%c0_258, %c0_259, %c0_260] : memref<2x1x32xf32, #tpu.memory_space<vmem>>, vector<1x1x32xf32>
    %509 = vector.shape_cast %508 : vector<1x1x32xf32> to vector<1x32xf32>
    %cst_261 = arith.constant dense<0.000000e+00> : vector<8xf32>
    %510 = vector.multi_reduction <add>, %505, %cst_261 [1] : vector<8x32xf32> to vector<8xf32>
    %511 = vector.shape_cast %510 : vector<8xf32> to vector<8x1xf32>
    %cst_262 = arith.constant 3.200000e+01 : f32
    %512 = vector.broadcast %cst_262 : f32 to vector<8x1xf32>
    %513 = arith.divf %511, %512 : vector<8x1xf32>
    %514 = vector.broadcast %513 : vector<8x1xf32> to vector<8x32xf32>
    %515 = arith.subf %505, %514 : vector<8x32xf32>
    %516 = arith.mulf %515, %515 : vector<8x32xf32>
    %cst_263 = arith.constant dense<0.000000e+00> : vector<8xf32>
    %517 = vector.multi_reduction <add>, %516, %cst_263 [1] : vector<8x32xf32> to vector<8xf32>
    %518 = vector.shape_cast %517 : vector<8xf32> to vector<8x1xf32>
    %cst_264 = arith.constant 3.200000e+01 : f32
    %519 = vector.broadcast %cst_264 : f32 to vector<8x1xf32>
    %520 = arith.divf %518, %519 : vector<8x1xf32>
    %521 = vector.broadcast %513 : vector<8x1xf32> to vector<8x32xf32>
    %522 = arith.subf %505, %521 : vector<8x32xf32>
    %cst_265 = arith.constant 9.99999996E-13 : f32
    %523 = vector.broadcast %cst_265 : f32 to vector<8x1xf32>
    %524 = arith.addf %520, %523 : vector<8x1xf32>
    %525 = math.rsqrt %524 : vector<8x1xf32>
    %526 = vector.broadcast %525 : vector<8x1xf32> to vector<8x32xf32>
    %527 = arith.mulf %522, %526 : vector<8x32xf32>
    %528 = vector.broadcast %507 : vector<1x32xf32> to vector<8x32xf32>
    %529 = arith.mulf %528, %527 : vector<8x32xf32>
    %530 = vector.broadcast %509 : vector<1x32xf32> to vector<8x32xf32>
    %531 = arith.addf %529, %530 : vector<8x32xf32>
    %c1_266 = arith.constant 1 : index
    %c0_267 = arith.constant 0 : index
    %c0_268 = arith.constant 0 : index
    %532 = vector.load %arg3[%c1_266, %c0_267, %c0_268] : memref<2x32x32xf32, #tpu.memory_space<vmem>>, vector<1x32x32xf32>
    %533 = vector.shape_cast %532 : vector<1x32x32xf32> to vector<32x32xf32>
    %cst_269 = arith.constant dense<0.000000e+00> : vector<8x32xf32>
    %534 = tpu.matmul %531, %533, %cst_269 {dimension_numbers = #tpu.dot_dimension_numbers<[1], [0], [0], [1], [0, 0, 1, 1], [], []>} : vector<8x32xf32>, vector<32x32xf32>, vector<8x32xf32> -> vector<8x32xf32>
    %c1_270 = arith.constant 1 : index
    %c0_271 = arith.constant 0 : index
    %c0_272 = arith.constant 0 : index
    %535 = vector.load %arg4[%c1_270, %c0_271, %c0_272] : memref<2x1x32xf32, #tpu.memory_space<vmem>>, vector<1x1x32xf32>
    %536 = vector.shape_cast %535 : vector<1x1x32xf32> to vector<1x32xf32>
    %537 = vector.broadcast %536 : vector<1x32xf32> to vector<8x32xf32>
    %538 = arith.addf %534, %537 : vector<8x32xf32>
    %cst_273 = arith.constant 0.353553385 : f32
    %539 = vector.broadcast %cst_273 : f32 to vector<8x32xf32>
    %540 = arith.mulf %538, %539 : vector<8x32xf32>
    %c1_274 = arith.constant 1 : index
    %c0_275 = arith.constant 0 : index
    %c0_276 = arith.constant 0 : index
    %541 = vector.load %arg5[%c1_274, %c0_275, %c0_276] : memref<2x32x64xf32, #tpu.memory_space<vmem>>, vector<1x32x64xf32>
    %542 = vector.shape_cast %541 : vector<1x32x64xf32> to vector<32x64xf32>
    %cst_277 = arith.constant dense<0.000000e+00> : vector<8x64xf32>
    %543 = tpu.matmul %356, %542, %cst_277 {dimension_numbers = #tpu.dot_dimension_numbers<[1], [0], [0], [1], [0, 0, 1, 1], [], []>} : vector<8x32xf32>, vector<32x64xf32>, vector<8x64xf32> -> vector<8x64xf32>
    %c1_278 = arith.constant 1 : index
    %c0_279 = arith.constant 0 : index
    %c0_280 = arith.constant 0 : index
    %544 = vector.load %arg6[%c1_278, %c0_279, %c0_280] : memref<2x1x64xf32, #tpu.memory_space<vmem>>, vector<1x1x64xf32>
    %545 = vector.shape_cast %544 : vector<1x1x64xf32> to vector<1x64xf32>
    %546 = vector.broadcast %545 : vector<1x64xf32> to vector<8x64xf32>
    %547 = arith.addf %543, %546 : vector<8x64xf32>
    %c1_281 = arith.constant 1 : index
    %c0_282 = arith.constant 0 : index
    %c0_283 = arith.constant 0 : index
    %548 = vector.load %arg7[%c1_281, %c0_282, %c0_283] : memref<2x32x32xf32, #tpu.memory_space<vmem>>, vector<1x32x32xf32>
    %549 = vector.shape_cast %548 : vector<1x32x32xf32> to vector<32x32xf32>
    %550 = vector.extract_strided_slice %540 {offsets = [0, 0], sizes = [8, 8], strides = [1, 1]} : vector<8x32xf32> to vector<8x8xf32>
    %551 = vector.extract_strided_slice %547 {offsets = [0, 0], sizes = [8, 8], strides = [1, 1]} : vector<8x64xf32> to vector<8x8xf32>
    %552 = vector.extract_strided_slice %547 {offsets = [0, 32], sizes = [8, 8], strides = [1, 1]} : vector<8x64xf32> to vector<8x8xf32>
    %cst_284 = arith.constant dense<0.000000e+00> : vector<8x8xf32>
    %553 = tpu.matmul %550, %551, %cst_284 {dimension_numbers = #tpu.dot_dimension_numbers<[1], [1], [0], [0], [0, 0, 1, 0], [], []>} : vector<8x8xf32>, vector<8x8xf32>, vector<8x8xf32> -> vector<8x8xf32>
    %cst_285 = arith.constant -1.000000e+04 : f32
    %554 = vector.broadcast %cst_285 : f32 to vector<8x8xf32>
    %555 = arith.select %360, %554, %553 : vector<8x8xi1>, vector<8x8xf32>
    %cst_286 = arith.constant dense<0xFF800000> : vector<8xf32>
    %556 = vector.multi_reduction <maximumf>, %555, %cst_286 [1] : vector<8x8xf32> to vector<8xf32>
    %557 = vector.shape_cast %556 : vector<8xf32> to vector<8x1xf32>
    %558 = vector.broadcast %557 : vector<8x1xf32> to vector<8x8xf32>
    %559 = arith.subf %555, %558 : vector<8x8xf32>
    %560 = math.exp %559 : vector<8x8xf32>
    %cst_287 = arith.constant dense<0.000000e+00> : vector<8xf32>
    %561 = vector.multi_reduction <add>, %560, %cst_287 [1] : vector<8x8xf32> to vector<8xf32>
    %562 = vector.shape_cast %561 : vector<8xf32> to vector<8x1xf32>
    %563 = tpu.reciprocal %562 : vector<8x1xf32> -> vector<8x1xf32>
    %564 = vector.broadcast %563 : vector<8x1xf32> to vector<8x8xf32>
    %565 = arith.mulf %560, %564 : vector<8x8xf32>
    %cst_288 = arith.constant dense<0.000000e+00> : vector<8x8xf32>
    %566 = tpu.matmul %565, %552, %cst_288 {dimension_numbers = #tpu.dot_dimension_numbers<[1], [0], [0], [1], [0, 0, 1, 1], [], []>} : vector<8x8xf32>, vector<8x8xf32>, vector<8x8xf32> -> vector<8x8xf32>
    %567 = vector.extract_strided_slice %549 {offsets = [0, 0], sizes = [8, 32], strides = [1, 1]} : vector<32x32xf32> to vector<8x32xf32>
    %cst_289 = arith.constant dense<0.000000e+00> : vector<8x32xf32>
    %568 = tpu.matmul %566, %567, %cst_289 {dimension_numbers = #tpu.dot_dimension_numbers<[1], [0], [0], [1], [0, 0, 1, 1], [], []>} : vector<8x8xf32>, vector<8x32xf32>, vector<8x32xf32> -> vector<8x32xf32>
    %569 = vector.extract_strided_slice %540 {offsets = [0, 8], sizes = [8, 8], strides = [1, 1]} : vector<8x32xf32> to vector<8x8xf32>
    %570 = vector.extract_strided_slice %547 {offsets = [0, 8], sizes = [8, 8], strides = [1, 1]} : vector<8x64xf32> to vector<8x8xf32>
    %571 = vector.extract_strided_slice %547 {offsets = [0, 40], sizes = [8, 8], strides = [1, 1]} : vector<8x64xf32> to vector<8x8xf32>
    %cst_290 = arith.constant dense<0.000000e+00> : vector<8x8xf32>
    %572 = tpu.matmul %569, %570, %cst_290 {dimension_numbers = #tpu.dot_dimension_numbers<[1], [1], [0], [0], [0, 0, 1, 0], [], []>} : vector<8x8xf32>, vector<8x8xf32>, vector<8x8xf32> -> vector<8x8xf32>
    %cst_291 = arith.constant -1.000000e+04 : f32
    %573 = vector.broadcast %cst_291 : f32 to vector<8x8xf32>
    %574 = arith.select %360, %573, %572 : vector<8x8xi1>, vector<8x8xf32>
    %cst_292 = arith.constant dense<0xFF800000> : vector<8xf32>
    %575 = vector.multi_reduction <maximumf>, %574, %cst_292 [1] : vector<8x8xf32> to vector<8xf32>
    %576 = vector.shape_cast %575 : vector<8xf32> to vector<8x1xf32>
    %577 = vector.broadcast %576 : vector<8x1xf32> to vector<8x8xf32>
    %578 = arith.subf %574, %577 : vector<8x8xf32>
    %579 = math.exp %578 : vector<8x8xf32>
    %cst_293 = arith.constant dense<0.000000e+00> : vector<8xf32>
    %580 = vector.multi_reduction <add>, %579, %cst_293 [1] : vector<8x8xf32> to vector<8xf32>
    %581 = vector.shape_cast %580 : vector<8xf32> to vector<8x1xf32>
    %582 = tpu.reciprocal %581 : vector<8x1xf32> -> vector<8x1xf32>
    %583 = vector.broadcast %582 : vector<8x1xf32> to vector<8x8xf32>
    %584 = arith.mulf %579, %583 : vector<8x8xf32>
    %cst_294 = arith.constant dense<0.000000e+00> : vector<8x8xf32>
    %585 = tpu.matmul %584, %571, %cst_294 {dimension_numbers = #tpu.dot_dimension_numbers<[1], [0], [0], [1], [0, 0, 1, 1], [], []>} : vector<8x8xf32>, vector<8x8xf32>, vector<8x8xf32> -> vector<8x8xf32>
    %586 = vector.extract_strided_slice %549 {offsets = [8, 0], sizes = [8, 32], strides = [1, 1]} : vector<32x32xf32> to vector<8x32xf32>
    %cst_295 = arith.constant dense<0.000000e+00> : vector<8x32xf32>
    %587 = tpu.matmul %585, %586, %cst_295 {dimension_numbers = #tpu.dot_dimension_numbers<[1], [0], [0], [1], [0, 0, 1, 1], [], []>} : vector<8x8xf32>, vector<8x32xf32>, vector<8x32xf32> -> vector<8x32xf32>
    %588 = arith.addf %568, %587 : vector<8x32xf32>
    %589 = vector.extract_strided_slice %540 {offsets = [0, 16], sizes = [8, 8], strides = [1, 1]} : vector<8x32xf32> to vector<8x8xf32>
    %590 = vector.extract_strided_slice %547 {offsets = [0, 16], sizes = [8, 8], strides = [1, 1]} : vector<8x64xf32> to vector<8x8xf32>
    %591 = vector.extract_strided_slice %547 {offsets = [0, 48], sizes = [8, 8], strides = [1, 1]} : vector<8x64xf32> to vector<8x8xf32>
    %cst_296 = arith.constant dense<0.000000e+00> : vector<8x8xf32>
    %592 = tpu.matmul %589, %590, %cst_296 {dimension_numbers = #tpu.dot_dimension_numbers<[1], [1], [0], [0], [0, 0, 1, 0], [], []>} : vector<8x8xf32>, vector<8x8xf32>, vector<8x8xf32> -> vector<8x8xf32>
    %cst_297 = arith.constant -1.000000e+04 : f32
    %593 = vector.broadcast %cst_297 : f32 to vector<8x8xf32>
    %594 = arith.select %360, %593, %592 : vector<8x8xi1>, vector<8x8xf32>
    %cst_298 = arith.constant dense<0xFF800000> : vector<8xf32>
    %595 = vector.multi_reduction <maximumf>, %594, %cst_298 [1] : vector<8x8xf32> to vector<8xf32>
    %596 = vector.shape_cast %595 : vector<8xf32> to vector<8x1xf32>
    %597 = vector.broadcast %596 : vector<8x1xf32> to vector<8x8xf32>
    %598 = arith.subf %594, %597 : vector<8x8xf32>
    %599 = math.exp %598 : vector<8x8xf32>
    %cst_299 = arith.constant dense<0.000000e+00> : vector<8xf32>
    %600 = vector.multi_reduction <add>, %599, %cst_299 [1] : vector<8x8xf32> to vector<8xf32>
    %601 = vector.shape_cast %600 : vector<8xf32> to vector<8x1xf32>
    %602 = tpu.reciprocal %601 : vector<8x1xf32> -> vector<8x1xf32>
    %603 = vector.broadcast %602 : vector<8x1xf32> to vector<8x8xf32>
    %604 = arith.mulf %599, %603 : vector<8x8xf32>
    %cst_300 = arith.constant dense<0.000000e+00> : vector<8x8xf32>
    %605 = tpu.matmul %604, %591, %cst_300 {dimension_numbers = #tpu.dot_dimension_numbers<[1], [0], [0], [1], [0, 0, 1, 1], [], []>} : vector<8x8xf32>, vector<8x8xf32>, vector<8x8xf32> -> vector<8x8xf32>
    %606 = vector.extract_strided_slice %549 {offsets = [16, 0], sizes = [8, 32], strides = [1, 1]} : vector<32x32xf32> to vector<8x32xf32>
    %cst_301 = arith.constant dense<0.000000e+00> : vector<8x32xf32>
    %607 = tpu.matmul %605, %606, %cst_301 {dimension_numbers = #tpu.dot_dimension_numbers<[1], [0], [0], [1], [0, 0, 1, 1], [], []>} : vector<8x8xf32>, vector<8x32xf32>, vector<8x32xf32> -> vector<8x32xf32>
    %608 = arith.addf %588, %607 : vector<8x32xf32>
    %609 = vector.extract_strided_slice %540 {offsets = [0, 24], sizes = [8, 8], strides = [1, 1]} : vector<8x32xf32> to vector<8x8xf32>
    %610 = vector.extract_strided_slice %547 {offsets = [0, 24], sizes = [8, 8], strides = [1, 1]} : vector<8x64xf32> to vector<8x8xf32>
    %611 = vector.extract_strided_slice %547 {offsets = [0, 56], sizes = [8, 8], strides = [1, 1]} : vector<8x64xf32> to vector<8x8xf32>
    %cst_302 = arith.constant dense<0.000000e+00> : vector<8x8xf32>
    %612 = tpu.matmul %609, %610, %cst_302 {dimension_numbers = #tpu.dot_dimension_numbers<[1], [1], [0], [0], [0, 0, 1, 0], [], []>} : vector<8x8xf32>, vector<8x8xf32>, vector<8x8xf32> -> vector<8x8xf32>
    %cst_303 = arith.constant -1.000000e+04 : f32
    %613 = vector.broadcast %cst_303 : f32 to vector<8x8xf32>
    %614 = arith.select %360, %613, %612 : vector<8x8xi1>, vector<8x8xf32>
    %cst_304 = arith.constant dense<0xFF800000> : vector<8xf32>
    %615 = vector.multi_reduction <maximumf>, %614, %cst_304 [1] : vector<8x8xf32> to vector<8xf32>
    %616 = vector.shape_cast %615 : vector<8xf32> to vector<8x1xf32>
    %617 = vector.broadcast %616 : vector<8x1xf32> to vector<8x8xf32>
    %618 = arith.subf %614, %617 : vector<8x8xf32>
    %619 = math.exp %618 : vector<8x8xf32>
    %cst_305 = arith.constant dense<0.000000e+00> : vector<8xf32>
    %620 = vector.multi_reduction <add>, %619, %cst_305 [1] : vector<8x8xf32> to vector<8xf32>
    %621 = vector.shape_cast %620 : vector<8xf32> to vector<8x1xf32>
    %622 = tpu.reciprocal %621 : vector<8x1xf32> -> vector<8x1xf32>
    %623 = vector.broadcast %622 : vector<8x1xf32> to vector<8x8xf32>
    %624 = arith.mulf %619, %623 : vector<8x8xf32>
    %cst_306 = arith.constant dense<0.000000e+00> : vector<8x8xf32>
    %625 = tpu.matmul %624, %611, %cst_306 {dimension_numbers = #tpu.dot_dimension_numbers<[1], [0], [0], [1], [0, 0, 1, 1], [], []>} : vector<8x8xf32>, vector<8x8xf32>, vector<8x8xf32> -> vector<8x8xf32>
    %626 = vector.extract_strided_slice %549 {offsets = [24, 0], sizes = [8, 32], strides = [1, 1]} : vector<32x32xf32> to vector<8x32xf32>
    %cst_307 = arith.constant dense<0.000000e+00> : vector<8x32xf32>
    %627 = tpu.matmul %625, %626, %cst_307 {dimension_numbers = #tpu.dot_dimension_numbers<[1], [0], [0], [1], [0, 0, 1, 1], [], []>} : vector<8x8xf32>, vector<8x32xf32>, vector<8x32xf32> -> vector<8x32xf32>
    %628 = arith.addf %608, %627 : vector<8x32xf32>
    %c1_308 = arith.constant 1 : index
    %c0_309 = arith.constant 0 : index
    %c0_310 = arith.constant 0 : index
    %629 = vector.load %arg8[%c1_308, %c0_309, %c0_310] : memref<2x1x32xf32, #tpu.memory_space<vmem>>, vector<1x1x32xf32>
    %630 = vector.shape_cast %629 : vector<1x1x32xf32> to vector<1x32xf32>
    %631 = vector.broadcast %630 : vector<1x32xf32> to vector<8x32xf32>
    %632 = arith.addf %628, %631 : vector<8x32xf32>
    %633 = arith.addf %531, %632 : vector<8x32xf32>
    %c1_311 = arith.constant 1 : index
    %c0_312 = arith.constant 0 : index
    %c0_313 = arith.constant 0 : index
    %634 = vector.load %arg9[%c1_311, %c0_312, %c0_313] : memref<2x1x32xf32, #tpu.memory_space<vmem>>, vector<1x1x32xf32>
    %635 = vector.shape_cast %634 : vector<1x1x32xf32> to vector<1x32xf32>
    %c1_314 = arith.constant 1 : index
    %c0_315 = arith.constant 0 : index
    %c0_316 = arith.constant 0 : index
    %636 = vector.load %arg10[%c1_314, %c0_315, %c0_316] : memref<2x1x32xf32, #tpu.memory_space<vmem>>, vector<1x1x32xf32>
    %637 = vector.shape_cast %636 : vector<1x1x32xf32> to vector<1x32xf32>
    %cst_317 = arith.constant dense<0.000000e+00> : vector<8xf32>
    %638 = vector.multi_reduction <add>, %633, %cst_317 [1] : vector<8x32xf32> to vector<8xf32>
    %639 = vector.shape_cast %638 : vector<8xf32> to vector<8x1xf32>
    %cst_318 = arith.constant 3.200000e+01 : f32
    %640 = vector.broadcast %cst_318 : f32 to vector<8x1xf32>
    %641 = arith.divf %639, %640 : vector<8x1xf32>
    %642 = vector.broadcast %641 : vector<8x1xf32> to vector<8x32xf32>
    %643 = arith.subf %633, %642 : vector<8x32xf32>
    %644 = arith.mulf %643, %643 : vector<8x32xf32>
    %cst_319 = arith.constant dense<0.000000e+00> : vector<8xf32>
    %645 = vector.multi_reduction <add>, %644, %cst_319 [1] : vector<8x32xf32> to vector<8xf32>
    %646 = vector.shape_cast %645 : vector<8xf32> to vector<8x1xf32>
    %cst_320 = arith.constant 3.200000e+01 : f32
    %647 = vector.broadcast %cst_320 : f32 to vector<8x1xf32>
    %648 = arith.divf %646, %647 : vector<8x1xf32>
    %649 = vector.broadcast %641 : vector<8x1xf32> to vector<8x32xf32>
    %650 = arith.subf %633, %649 : vector<8x32xf32>
    %cst_321 = arith.constant 9.99999996E-13 : f32
    %651 = vector.broadcast %cst_321 : f32 to vector<8x1xf32>
    %652 = arith.addf %648, %651 : vector<8x1xf32>
    %653 = math.rsqrt %652 : vector<8x1xf32>
    %654 = vector.broadcast %653 : vector<8x1xf32> to vector<8x32xf32>
    %655 = arith.mulf %650, %654 : vector<8x32xf32>
    %656 = vector.broadcast %635 : vector<1x32xf32> to vector<8x32xf32>
    %657 = arith.mulf %656, %655 : vector<8x32xf32>
    %658 = vector.broadcast %637 : vector<1x32xf32> to vector<8x32xf32>
    %659 = arith.addf %657, %658 : vector<8x32xf32>
    %c1_322 = arith.constant 1 : index
    %c0_323 = arith.constant 0 : index
    %c0_324 = arith.constant 0 : index
    %660 = vector.load %arg11[%c1_322, %c0_323, %c0_324] : memref<2x32x64xf32, #tpu.memory_space<vmem>>, vector<1x32x64xf32>
    %661 = vector.shape_cast %660 : vector<1x32x64xf32> to vector<32x64xf32>
    %cst_325 = arith.constant dense<0.000000e+00> : vector<8x64xf32>
    %662 = tpu.matmul %659, %661, %cst_325 {dimension_numbers = #tpu.dot_dimension_numbers<[1], [0], [0], [1], [0, 0, 1, 1], [], []>} : vector<8x32xf32>, vector<32x64xf32>, vector<8x64xf32> -> vector<8x64xf32>
    %c1_326 = arith.constant 1 : index
    %c0_327 = arith.constant 0 : index
    %c0_328 = arith.constant 0 : index
    %663 = vector.load %arg12[%c1_326, %c0_327, %c0_328] : memref<2x1x64xf32, #tpu.memory_space<vmem>>, vector<1x1x64xf32>
    %664 = vector.shape_cast %663 : vector<1x1x64xf32> to vector<1x64xf32>
    %665 = vector.broadcast %664 : vector<1x64xf32> to vector<8x64xf32>
    %666 = arith.addf %662, %665 : vector<8x64xf32>
    %cst_329 = arith.constant 0.000000e+00 : f32
    %667 = vector.broadcast %cst_329 : f32 to vector<8x64xf32>
    %668 = arith.maximumf %666, %667 : vector<8x64xf32>
    %c1_330 = arith.constant 1 : index
    %c0_331 = arith.constant 0 : index
    %c0_332 = arith.constant 0 : index
    %669 = vector.load %arg13[%c1_330, %c0_331, %c0_332] : memref<2x64x32xf32, #tpu.memory_space<vmem>>, vector<1x64x32xf32>
    %670 = vector.shape_cast %669 : vector<1x64x32xf32> to vector<64x32xf32>
    %cst_333 = arith.constant dense<0.000000e+00> : vector<8x32xf32>
    %671 = tpu.matmul %668, %670, %cst_333 {dimension_numbers = #tpu.dot_dimension_numbers<[1], [0], [0], [1], [0, 0, 1, 1], [], []>} : vector<8x64xf32>, vector<64x32xf32>, vector<8x32xf32> -> vector<8x32xf32>
    %c1_334 = arith.constant 1 : index
    %c0_335 = arith.constant 0 : index
    %c0_336 = arith.constant 0 : index
    %672 = vector.load %arg14[%c1_334, %c0_335, %c0_336] : memref<2x1x32xf32, #tpu.memory_space<vmem>>, vector<1x1x32xf32>
    %673 = vector.shape_cast %672 : vector<1x1x32xf32> to vector<1x32xf32>
    %674 = vector.broadcast %673 : vector<1x32xf32> to vector<8x32xf32>
    %675 = arith.addf %671, %674 : vector<8x32xf32>
    %676 = arith.addf %659, %675 : vector<8x32xf32>
    %c1_337 = arith.constant 1 : index
    %c0_338 = arith.constant 0 : index
    %c0_339 = arith.constant 0 : index
    %677 = vector.load %arg15[%c1_337, %c0_338, %c0_339] : memref<2x1x32xf32, #tpu.memory_space<vmem>>, vector<1x1x32xf32>
    %678 = vector.shape_cast %677 : vector<1x1x32xf32> to vector<1x32xf32>
    %c1_340 = arith.constant 1 : index
    %c0_341 = arith.constant 0 : index
    %c0_342 = arith.constant 0 : index
    %679 = vector.load %arg16[%c1_340, %c0_341, %c0_342] : memref<2x1x32xf32, #tpu.memory_space<vmem>>, vector<1x1x32xf32>
    %680 = vector.shape_cast %679 : vector<1x1x32xf32> to vector<1x32xf32>
    %cst_343 = arith.constant dense<0.000000e+00> : vector<8xf32>
    %681 = vector.multi_reduction <add>, %676, %cst_343 [1] : vector<8x32xf32> to vector<8xf32>
    %682 = vector.shape_cast %681 : vector<8xf32> to vector<8x1xf32>
    %cst_344 = arith.constant 3.200000e+01 : f32
    %683 = vector.broadcast %cst_344 : f32 to vector<8x1xf32>
    %684 = arith.divf %682, %683 : vector<8x1xf32>
    %685 = vector.broadcast %684 : vector<8x1xf32> to vector<8x32xf32>
    %686 = arith.subf %676, %685 : vector<8x32xf32>
    %687 = arith.mulf %686, %686 : vector<8x32xf32>
    %cst_345 = arith.constant dense<0.000000e+00> : vector<8xf32>
    %688 = vector.multi_reduction <add>, %687, %cst_345 [1] : vector<8x32xf32> to vector<8xf32>
    %689 = vector.shape_cast %688 : vector<8xf32> to vector<8x1xf32>
    %cst_346 = arith.constant 3.200000e+01 : f32
    %690 = vector.broadcast %cst_346 : f32 to vector<8x1xf32>
    %691 = arith.divf %689, %690 : vector<8x1xf32>
    %692 = vector.broadcast %684 : vector<8x1xf32> to vector<8x32xf32>
    %693 = arith.subf %676, %692 : vector<8x32xf32>
    %cst_347 = arith.constant 9.99999996E-13 : f32
    %694 = vector.broadcast %cst_347 : f32 to vector<8x1xf32>
    %695 = arith.addf %691, %694 : vector<8x1xf32>
    %696 = math.rsqrt %695 : vector<8x1xf32>
    %697 = vector.broadcast %696 : vector<8x1xf32> to vector<8x32xf32>
    %698 = arith.mulf %693, %697 : vector<8x32xf32>
    %699 = vector.broadcast %678 : vector<1x32xf32> to vector<8x32xf32>
    %700 = arith.mulf %699, %698 : vector<8x32xf32>
    %701 = vector.broadcast %680 : vector<1x32xf32> to vector<8x32xf32>
    %702 = arith.addf %700, %701 : vector<8x32xf32>
    %c1_348 = arith.constant 1 : index
    %c0_349 = arith.constant 0 : index
    %c0_350 = arith.constant 0 : index
    %703 = vector.load %arg17[%c1_348, %c0_349, %c0_350] : memref<2x8x32xf32, #tpu.memory_space<vmem>>, vector<1x8x32xf32>
    %704 = vector.shape_cast %703 : vector<1x8x32xf32> to vector<8x32xf32>
    %705 = vector.shape_cast %702 : vector<8x32xf32> to vector<1x8x32xf32>
    tpu.vector_store %arg17[%c1_348, %c0_349, %c0_350], %705 {strides = array<i32>} : memref<2x8x32xf32, #tpu.memory_space<vmem>>, vector<1x8x32xf32>,
    return
  }
}

</mosaic_0001>

<llo_original>
// kernel: tpu_custom_call.1
$region0: #{tpu_custom_call.1}
  #allocation0 [shape = 'u32[]', space=smem, size = 0x4, offset = 0x4, fixed_abs, tag = 'smem constant byte address 0x4 - core index']
  #allocation1 [shape = 'u32[72,128]{1,0:T(1,128)}', space=vmem, size = 0x9000, scoped, tag = 'internal scratch']
  %s0 = inlined_call_operand.hbm [shape: f32[2,8,32], index: 0, kind: input, shape index: {}]
  %s1 = inlined_call_operand.hbm [shape: f32[2,8,32], index: 1, kind: input, shape index: {}]
  %s2 = inlined_call_operand.hbm [shape: f32[2,8,8], index: 2, kind: input, shape index: {}]
  %s3 = inlined_call_operand.vmem [shape: f32[2,32,32], index: 3, kind: input, shape index: {}]
  %s4 = inlined_call_operand.vmem [shape: f32[2,1,32], index: 4, kind: input, shape index: {}]
  %s5 = inlined_call_operand.vmem [shape: f32[2,32,64], index: 5, kind: input, shape index: {}]
  %s6 = inlined_call_operand.vmem [shape: f32[2,1,64], index: 6, kind: input, shape index: {}]
  %s7 = inlined_call_operand.vmem [shape: f32[2,32,32], index: 7, kind: input, shape index: {}]
  %s8 = inlined_call_operand.hbm [shape: f32[2,1,32], index: 8, kind: input, shape index: {}]
  %s9 = inlined_call_operand.vmem [shape: f32[2,1,32], index: 9, kind: input, shape index: {}]
  %s10 = inlined_call_operand.vmem [shape: f32[2,1,32], index: 10, kind: input, shape index: {}]
  %s11 = inlined_call_operand.hbm [shape: f32[2,32,64], index: 11, kind: input, shape index: {}]
  %s12 = inlined_call_operand.vmem [shape: f32[2,1,64], index: 12, kind: input, shape index: {}]
  %s13 = inlined_call_operand.vmem [shape: f32[2,64,32], index: 13, kind: input, shape index: {}]
  %s14 = inlined_call_operand.hbm [shape: f32[2,1,32], index: 14, kind: input, shape index: {}]
  %s15 = inlined_call_operand.vmem [shape: f32[2,1,32], index: 15, kind: input, shape index: {}]
  %s16 = inlined_call_operand.vmem [shape: f32[2,1,32], index: 16, kind: input, shape index: {}]
  %s17 = inlined_call_operand.hbm [shape: f32[2,8,32], index: 17, kind: output, shape index: {}]
  %s18 = sld [smem:[#allocation0]]
  $region102: #{tpu_custom_call.1} parent=0
    _
  %s20 = ssub.s32 1, %s18
  %s21 = scalar_select 0, %s20, %s18
  $region1: #{tpu_custom_call.1} parent=0
    #allocation2 [shape = 'u8[8192]{0}', space=vmem, size = 0x2000, scoped, tag = 'input window, operand 0, single buffered']
    #allocation3 [shape = 's32[1]{0}', space=sflag, size = 0x4, scoped, tag = 'scoped memory for tpu_custom_call.1']
    #allocation4 [shape = 's32[1]{0}', space=sflag, size = 0x4, scoped, tag = 'scoped memory for tpu_custom_call.1']
    #allocation5 [shape = 'u8[8192]{0}', space=vmem, size = 0x2000, scoped, tag = 'input window, operand 1, single buffered']
    #allocation6 [shape = 's32[1]{0}', space=sflag, size = 0x4, scoped, tag = 'scoped memory for tpu_custom_call.1']
    #allocation7 [shape = 'u8[8192]{0}', space=vmem, size = 0x2000, scoped, tag = 'input window, operand 2, single buffered']
    #allocation8 [shape = 'u8[1024]{0}', space=vmem, size = 0x400, scoped, tag = 'input window, operand 8, single buffered']
    #allocation9 [shape = 's32[1]{0}', space=sflag, size = 0x4, scoped, tag = 'scoped memory for tpu_custom_call.1']
    #allocation10 [shape = 'u8[32768]{0}', space=vmem, size = 0x8000, scoped, tag = 'input window, operand 11, single buffered']
    #allocation11 [shape = 'u8[1024]{0}', space=vmem, size = 0x400, scoped, tag = 'input window, operand 14, single buffered']
    #allocation12 [shape = 's32[1]{0}', space=sflag, size = 0x4, scoped, tag = 'scoped memory for tpu_custom_call.1']
    #allocation13 [shape = 'u8[8192]{0}', space=vmem, size = 0x2000, scoped, tag = 'output window, operand 0, single buffered']
    %22 = vsyncpa [#allocation3], 0
    %23 = vsyncpa [#allocation6], 0
    %24 = vsyncpa [#allocation9], 0
    %25 = vsyncpa [#allocation12], 0
    %26 = vsyncpa [#allocation4], 0
    // Predicated region
    $region2: #{tpu_custom_call.1} parent=1 // pred_check
      _
    $region3: #{tpu_custom_call.1} parent=1 // pred_check_branch
      %28 = sbr.rel (0) target = $region5
    $region4: #{tpu_custom_call.1} parent=1 // pred_region
      %30 = vsyncadd [#allocation3], 0
      %s31 = sshll.u32 %s0, 4
      %s32 = int_to_ptr.hbm [resolvable:$true] %s31
      %s33 = sshll.u32 [#allocation2], 4
      %s34 = int_to_ptr.vmem [resolvable:$true] %s33
      %39 = dma.hbm_to_vmem [thread:$0]  %s32, 256, %s34, [#allocation3], 128, 128, 8
    $region5: #{tpu_custom_call.1} parent=1 // pred_fallthru
      _
    // Predicated region
    $region6: #{tpu_custom_call.1} parent=1 // pred_check
      _
    $region7: #{tpu_custom_call.1} parent=1 // pred_check_branch
      %41 = sbr.rel (0) target = $region9
    $region8: #{tpu_custom_call.1} parent=1 // pred_region
      %43 = vsyncadd [#allocation6], 0
      %s44 = sshll.u32 %s1, 4
      %s45 = int_to_ptr.hbm [resolvable:$true] %s44
      %s46 = sshll.u32 [#allocation5], 4
      %s47 = int_to_ptr.vmem [resolvable:$true] %s46
      %52 = dma.hbm_to_vmem [thread:$0]  %s45, 256, %s47, [#allocation6], 128, 128, 8
    $region9: #{tpu_custom_call.1} parent=1 // pred_fallthru
      _
    // Predicated region
    $region10: #{tpu_custom_call.1} parent=1 // pred_check
      _
    $region11: #{tpu_custom_call.1} parent=1 // pred_check_branch
      %54 = sbr.rel (0) target = $region13
    $region12: #{tpu_custom_call.1} parent=1 // pred_region
      %56 = vsyncadd [#allocation6], 0
      %s57 = sshll.u32 %s2, 4
      %s58 = int_to_ptr.hbm [resolvable:$true] %s57
      %s59 = sshll.u32 [#allocation7], 4
      %s60 = int_to_ptr.vmem [resolvable:$true] %s59
      %65 = dma.hbm_to_vmem [thread:$0]  %s58, 256, %s60, [#allocation6], 128, 128, 8
    $region13: #{tpu_custom_call.1} parent=1 // pred_fallthru
      _
    // Predicated region
    $region14: #{tpu_custom_call.1} parent=1 // pred_check
      _
    $region15: #{tpu_custom_call.1} parent=1 // pred_check_branch
      %67 = sbr.rel (0) target = $region17
    $region16: #{tpu_custom_call.1} parent=1 // pred_region
      _
    $region17: #{tpu_custom_call.1} parent=1 // pred_fallthru
      _
    // Predicated region
    $region18: #{tpu_custom_call.1} parent=1 // pred_check
      _
    $region19: #{tpu_custom_call.1} parent=1 // pred_check_branch
      %69 = sbr.rel (0) target = $region21
    $region20: #{tpu_custom_call.1} parent=1 // pred_region
      _
    $region21: #{tpu_custom_call.1} parent=1 // pred_fallthru
      _
    // Predicated region
    $region22: #{tpu_custom_call.1} parent=1 // pred_check
      _
    $region23: #{tpu_custom_call.1} parent=1 // pred_check_branch
      %71 = sbr.rel (0) target = $region25
    $region24: #{tpu_custom_call.1} parent=1 // pred_region
      _
    $region25: #{tpu_custom_call.1} parent=1 // pred_fallthru
      _
    // Predicated region
    $region26: #{tpu_custom_call.1} parent=1 // pred_check
      _
    $region27: #{tpu_custom_call.1} parent=1 // pred_check_branch
      %73 = sbr.rel (0) target = $region29
    $region28: #{tpu_custom_call.1} parent=1 // pred_region
      _
    $region29: #{tpu_custom_call.1} parent=1 // pred_fallthru
      _
    // Predicated region
    $region30: #{tpu_custom_call.1} parent=1 // pred_check
      _
    $region31: #{tpu_custom_call.1} parent=1 // pred_check_branch
      %75 = sbr.rel (0) target = $region33
    $region32: #{tpu_custom_call.1} parent=1 // pred_region
      _
    $region33: #{tpu_custom_call.1} parent=1 // pred_fallthru
      _
    // Predicated region
    $region34: #{tpu_custom_call.1} parent=1 // pred_check
      _
    $region35: #{tpu_custom_call.1} parent=1 // pred_check_branch
      %77 = sbr.rel (0) target = $region37
    $region36: #{tpu_custom_call.1} parent=1 // pred_region
      %79 = vsyncadd [#allocation9], 0
      %s80 = sshll.u32 %s8, 4
      %s81 = int_to_ptr.hbm [resolvable:$true] %s80
      %s82 = sshll.u32 [#allocation8], 4
      %s83 = int_to_ptr.vmem [resolvable:$true] %s82
      %88 = dma.hbm_to_vmem [thread:$0]  %s81, 32, %s83, [#allocation9], 16, 16, 1
    $region37: #{tpu_custom_call.1} parent=1 // pred_fallthru
      _
    // Predicated region
    $region38: #{tpu_custom_call.1} parent=1 // pred_check
      _
    $region39: #{tpu_custom_call.1} parent=1 // pred_check_branch
      %90 = sbr.rel (0) target = $region41
    $region40: #{tpu_custom_call.1} parent=1 // pred_region
      _
    $region41: #{tpu_custom_call.1} parent=1 // pred_fallthru
      _
    // Predicated region
    $region42: #{tpu_custom_call.1} parent=1 // pred_check
      _
    $region43: #{tpu_custom_call.1} parent=1 // pred_check_branch
      %92 = sbr.rel (0) target = $region45
    $region44: #{tpu_custom_call.1} parent=1 // pred_region
      _
    $region45: #{tpu_custom_call.1} parent=1 // pred_fallthru
      _
    // Predicated region
    $region46: #{tpu_custom_call.1} parent=1 // pred_check
      _
    $region47: #{tpu_custom_call.1} parent=1 // pred_check_branch
      %94 = sbr.rel (0) target = $region49
    $region48: #{tpu_custom_call.1} parent=1 // pred_region
      %96 = vsyncadd [#allocation9], 0
      %s97 = sshll.u32 %s11, 4
      %s98 = int_to_ptr.hbm [resolvable:$true] %s97
      %s99 = sshll.u32 [#allocation10], 4
      %s100 = int_to_ptr.vmem [resolvable:$true] %s99
      %105 = dma.hbm_to_vmem [thread:$0]  %s98, 1024, %s100, [#allocation9], 128, 128, 8
    $region49: #{tpu_custom_call.1} parent=1 // pred_fallthru
      _
    // Predicated region
    $region50: #{tpu_custom_call.1} parent=1 // pred_check
      _
    $region51: #{tpu_custom_call.1} parent=1 // pred_check_branch
      %107 = sbr.rel (0) target = $region53
    $region52: #{tpu_custom_call.1} parent=1 // pred_region
      _
    $region53: #{tpu_custom_call.1} parent=1 // pred_fallthru
      _
    // Predicated region
    $region54: #{tpu_custom_call.1} parent=1 // pred_check
      _
    $region55: #{tpu_custom_call.1} parent=1 // pred_check_branch
      %109 = sbr.rel (0) target = $region57
    $region56: #{tpu_custom_call.1} parent=1 // pred_region
      _
    $region57: #{tpu_custom_call.1} parent=1 // pred_fallthru
      _
    // Predicated region
    $region58: #{tpu_custom_call.1} parent=1 // pred_check
      _
    $region59: #{tpu_custom_call.1} parent=1 // pred_check_branch
      %111 = sbr.rel (0) target = $region61
    $region60: #{tpu_custom_call.1} parent=1 // pred_region
      %113 = vsyncadd [#allocation12], 0
      %s114 = sshll.u32 %s14, 4
      %s115 = int_to_ptr.hbm [resolvable:$true] %s114
      %s116 = sshll.u32 [#allocation11], 4
      %s117 = int_to_ptr.vmem [resolvable:$true] %s116
      %122 = dma.hbm_to_vmem [thread:$0]  %s115, 32, %s117, [#allocation12], 16, 16, 1
    $region61: #{tpu_custom_call.1} parent=1 // pred_fallthru
      _
    // Predicated region
    $region62: #{tpu_custom_call.1} parent=1 // pred_check
      _
    $region63: #{tpu_custom_call.1} parent=1 // pred_check_branch
      %124 = sbr.rel (0) target = $region65
    $region64: #{tpu_custom_call.1} parent=1 // pred_region
      _
    $region65: #{tpu_custom_call.1} parent=1 // pred_fallthru
      _
    // Predicated region
    $region66: #{tpu_custom_call.1} parent=1 // pred_check
      _
    $region67: #{tpu_custom_call.1} parent=1 // pred_check_branch
      %126 = sbr.rel (0) target = $region69
    $region68: #{tpu_custom_call.1} parent=1 // pred_region
      _
    $region69: #{tpu_custom_call.1} parent=1 // pred_fallthru
      _
    // Predicated region
    $region70: #{tpu_custom_call.1} parent=1 // pred_check
      _
    $region71: #{tpu_custom_call.1} parent=1 // pred_check_branch
      %128 = sbr.rel (0) target = $region73
    $region72: #{tpu_custom_call.1} parent=1 // pred_region
      %130 = dma.done [#allocation3], 256
    $region73: #{tpu_custom_call.1} parent=1 // pred_fallthru
      _
    // Predicated region
    $region74: #{tpu_custom_call.1} parent=1 // pred_check
      _
    $region75: #{tpu_custom_call.1} parent=1 // pred_check_branch
      %132 = sbr.rel (0) target = $region77
    $region76: #{tpu_custom_call.1} parent=1 // pred_region
      %134 = dma.done [#allocation6], 256
    $region77: #{tpu_custom_call.1} parent=1 // pred_fallthru
      _
    // Predicated region
    $region78: #{tpu_custom_call.1} parent=1 // pred_check
      _
    $region79: #{tpu_custom_call.1} parent=1 // pred_check_branch
      %136 = sbr.rel (0) target = $region81
    $region80: #{tpu_custom_call.1} parent=1 // pred_region
      %138 = dma.done [#allocation6], 256
    $region81: #{tpu_custom_call.1} parent=1 // pred_fallthru
      _
    // Predicated region
    $region82: #{tpu_custom_call.1} parent=1 // pred_check
      _
    $region83: #{tpu_custom_call.1} parent=1 // pred_check_branch
      %140 = sbr.rel (0) target = $region85
    $region84: #{tpu_custom_call.1} parent=1 // pred_region
      %142 = dma.done [#allocation9], 32
    $region85: #{tpu_custom_call.1} parent=1 // pred_fallthru
      _
    // Predicated region
    $region86: #{tpu_custom_call.1} parent=1 // pred_check
      _
    $region87: #{tpu_custom_call.1} parent=1 // pred_check_branch
      %144 = sbr.rel (0) target = $region89
    $region88: #{tpu_custom_call.1} parent=1 // pred_region
      %146 = dma.done [#allocation9], 1024
    $region89: #{tpu_custom_call.1} parent=1 // pred_fallthru
      _
    // Predicated region
    $region90: #{tpu_custom_call.1} parent=1 // pred_check
      _
    $region91: #{tpu_custom_call.1} parent=1 // pred_check_branch
      %148 = sbr.rel (0) target = $region93
    $region92: #{tpu_custom_call.1} parent=1 // pred_region
      %150 = dma.done [#allocation12], 32
    $region93: #{tpu_custom_call.1} parent=1 // pred_fallthru
      _
    %v151 = vld [vmem:[#allocation2] sm:$0xff]
    %v152 = vld [vmem:[#allocation5] sm:$0xff]
    %v153 = vld [vmem:[#allocation7] sm:$0xff]
    %vm154 = vcmp.eq.f32.partialorder %v153, 0.0
    %v155 = vld [vmem:[%s3] sm:$0xff]
    %v156 = vld [vmem:[%s3 + $0x8] sm:$0xff]
    %v157 = vld [vmem:[%s3 + $0x10] sm:$0xff]
    %v158 = vld [vmem:[%s3 + $0x18] sm:$0xff]
    %v159 = vld [vmem:[%s4] sm:$0x1]
    %v161 = vperm.slane %v159, 0
    %vm163 = vcmask 261120
    %v165 = vsel %vm163, %v151, 0
    %167 = vmatpush.msra.mxu0 0.0
    %168 = vmatpush.msra.mxu0 0.0
    %169 = vmatpush.msra.mxu0 0.0
    %170 = vmatpush.msra.mxu0 0.0
    %171 = vmatpush.msra.mxu0 0.0
    %172 = vmatpush.msra.mxu0 0.0
    %173 = vmatpush.msra.mxu0 0.0
    %174 = vmatpush.msra.mxu0 0.0
    %175 = vmatpush.msra.mxu0 0.0
    %176 = vmatpush.msra.mxu0 0.0
    %177 = vmatpush.msra.mxu0 0.0
    %178 = vmatpush.msra.mxu0 0.0
    %179 = vmatpush.msra.mxu0 %v158
    %180 = vmatpush.msra.mxu0 %v157
    %181 = vmatpush.msra.mxu0 %v156
    %182 = vmatpush.msra.mxu0 %v155
    %183 = vmatmul.f32.gmra.mxu0 %v165
    %v184 = vpop.f32.mrf.mxu0
    %v185 = vadd.f32 %v161, %v184
    %186 = vdwg.mxu0
    %v187 = vmul.f32 %v185, 0.35355338
    %v188 = vld [vmem:[%s5] sm:$0xff]
    %v189 = vld [vmem:[%s5 + $0x8] sm:$0xff]
    %v190 = vld [vmem:[%s5 + $0x10] sm:$0xff]
    %v191 = vld [vmem:[%s5 + $0x18] sm:$0xff]
    %v192 = vld [vmem:[%s6] sm:$0x1]
    %v194 = vperm.slane %v192, 0
    %v197 = vsel %vm163, %v152, 0
    %199 = vmatpush.msra.mxu0 0.0
    %200 = vmatpush.msra.mxu0 0.0
    %201 = vmatpush.msra.mxu0 0.0
    %202 = vmatpush.msra.mxu0 0.0
    %203 = vmatpush.msra.mxu0 0.0
    %204 = vmatpush.msra.mxu0 0.0
    %205 = vmatpush.msra.mxu0 0.0
    %206 = vmatpush.msra.mxu0 0.0
    %207 = vmatpush.msra.mxu0 0.0
    %208 = vmatpush.msra.mxu0 0.0
    %209 = vmatpush.msra.mxu0 0.0
    %210 = vmatpush.msra.mxu0 0.0
    %211 = vmatpush.msra.mxu0 %v191
    %212 = vmatpush.msra.mxu0 %v190
    %213 = vmatpush.msra.mxu0 %v189
    %214 = vmatpush.msra.mxu0 %v188
    %215 = vmatmul.f32.gmra.mxu0 %v197
    %v216 = vpop.f32.mrf.mxu0
    %v217 = vadd.f32 %v194, %v216
    %218 = vdwg.mxu0
    %v219 = vld [vmem:[%s7] sm:$0xff]
    %v220 = vld [vmem:[%s7 + $0x8] sm:$0xff]
    %v221 = vld [vmem:[%s7 + $0x10] sm:$0xff]
    %v222 = vld [vmem:[%s7 + $0x18] sm:$0xff]
    %vm223 = vcmask 64512
    %v225 = vsel %vm223, %v187, 0
    %v228 = vsel %vm223, %v217, 0
    %230 = vmatpush.xpose.msra.mxu0 0.0
    %231 = vmatpush.xpose.msra.mxu0 0.0
    %232 = vmatpush.xpose.msra.mxu0 0.0
    %233 = vmatpush.xpose.msra.mxu0 0.0
    %234 = vmatpush.xpose.msra.mxu0 0.0
    %235 = vmatpush.xpose.msra.mxu0 0.0
    %236 = vmatpush.xpose.msra.mxu0 0.0
    %237 = vmatpush.xpose.msra.mxu0 0.0
    %238 = vmatpush.xpose.msra.mxu0 0.0
    %239 = vmatpush.xpose.msra.mxu0 0.0
    %240 = vmatpush.xpose.msra.mxu0 0.0
    %241 = vmatpush.xpose.msra.mxu0 0.0
    %242 = vmatpush.xpose.msra.mxu0 0.0
    %243 = vmatpush.xpose.msra.mxu0 0.0
    %244 = vmatpush.xpose.msra.mxu0 0.0
    %245 = vmatpush.xpose.msra.mxu0 %v228
    %246 = vmatmul.f32.gmra.mxu0 %v225
    %v247 = vpop.f32.mrf.mxu0
    %v248 = vadd.f32 0.0, %v247
    %249 = vdwg.mxu0
    %v250 = vsel %vm154, -10000.0, %v248
    %v251 = vsel %vm223, %v250, -inf
    %252 = vmax.xlane.f32.xlu0 %v251
    %v253 = vpop.xlane.xlu0 %252
    %v254 = vsub.f32 %v250, %v253
    %v255 = vmul.f32 %v254, 1.442695
    %v256 = vpow.pop %v255
    %v257 = vsel %vm223, %v256, 0.0
    %258 = vadd.xlane.f32.xlu0 %v257
    %v259 = vpop.xlane.xlu0 %258
    %v260 = vrcp.pop %v259
    %v261 = vmul.f32 %v259, %v260
    %v262 = vsub.f32 1.0, %v261
    %v263 = vmul.f32 %v260, %v262
    %v264 = vadd.f32 %v260, %v263
    %vm265 = vweird.f32 %v259
    %vm266 = vweird.f32 %v260
    %vm267 = vmor %vm265, %vm266
    %v268 = vsel %vm267, %v260, %v264
    %v269 = vand.u32 2147483647, %v259
    %vm270 = vcmp.eq.f32.partialorder %v269, 8.507059e+37
    %v271 = vand.u32 %v259, 2147483648
    %v272 = vor.u32 1.1754944e-38, %v271
    %v273 = vsel %vm270, %v272, %v268
    %v274 = vmul.f32 %v256, %v273
    %275 = vrot.lane.b32.xlu0 %v217, 96
    %v276 = vpop.permute.xlu0 %275
    %v279 = vsel %vm223, %v274, 0
    %281 = vmatpush.msra.mxu0 0.0
    %282 = vmatpush.msra.mxu0 0.0
    %283 = vmatpush.msra.mxu0 0.0
    %284 = vmatpush.msra.mxu0 0.0
    %285 = vmatpush.msra.mxu0 0.0
    %286 = vmatpush.msra.mxu0 0.0
    %287 = vmatpush.msra.mxu0 0.0
    %288 = vmatpush.msra.mxu0 0.0
    %289 = vmatpush.msra.mxu0 0.0
    %290 = vmatpush.msra.mxu0 0.0
    %291 = vmatpush.msra.mxu0 0.0
    %292 = vmatpush.msra.mxu0 0.0
    %293 = vmatpush.msra.mxu0 0.0
    %294 = vmatpush.msra.mxu0 0.0
    %295 = vmatpush.msra.mxu0 0.0
    %296 = vmatpush.msra.mxu0 %v276
    %297 = vmatmul.f32.gmra.mxu0 %v279
    %v298 = vpop.f32.mrf.mxu0
    %v299 = vadd.f32 0.0, %v298
    %300 = vdwg.mxu0
    %301 = vrot.lane.b32.xlu0 %v187, 120
    %v302 = vpop.permute.xlu0 %301
    %303 = vrot.lane.b32.xlu0 %v217, 120
    %v304 = vpop.permute.xlu0 %303
    %v305 = vsel %vm223, %v302, 0
    %v307 = vsel %vm223, %v304, 0
    %309 = vmatpush.xpose.msra.mxu0 0.0
    %310 = vmatpush.xpose.msra.mxu0 0.0
    %311 = vmatpush.xpose.msra.mxu0 0.0
    %312 = vmatpush.xpose.msra.mxu0 0.0
    %313 = vmatpush.xpose.msra.mxu0 0.0
    %314 = vmatpush.xpose.msra.mxu0 0.0
    %315 = vmatpush.xpose.msra.mxu0 0.0
    %316 = vmatpush.xpose.msra.mxu0 0.0
    %317 = vmatpush.xpose.msra.mxu0 0.0
    %318 = vmatpush.xpose.msra.mxu0 0.0
    %319 = vmatpush.xpose.msra.mxu0 0.0
    %320 = vmatpush.xpose.msra.mxu0 0.0
    %321 = vmatpush.xpose.msra.mxu0 0.0
    %322 = vmatpush.xpose.msra.mxu0 0.0
    %323 = vmatpush.xpose.msra.mxu0 0.0
    %324 = vmatpush.xpose.msra.mxu0 %v307
    %325 = vmatmul.f32.gmra.mxu0 %v305
    %v326 = vpop.f32.mrf.mxu0
    %v327 = vadd.f32 0.0, %v326
    %328 = vdwg.mxu0
    %v329 = vsel %vm154, -10000.0, %v327
    %v330 = vsel %vm223, %v329, -inf
    %331 = vmax.xlane.f32.xlu0 %v330
    %v332 = vpop.xlane.xlu0 %331
    %v333 = vsub.f32 %v329, %v332
    %v334 = vmul.f32 %v333, 1.442695
    %v335 = vpow.pop %v334
    %v336 = vsel %vm223, %v335, 0.0
    %337 = vadd.xlane.f32.xlu0 %v336
    %v338 = vpop.xlane.xlu0 %337
    %v339 = vrcp.pop %v338
    %v340 = vmul.f32 %v338, %v339
    %v341 = vsub.f32 1.0, %v340
    %v342 = vmul.f32 %v339, %v341
    %v343 = vadd.f32 %v339, %v342
    %vm344 = vweird.f32 %v338
    %vm345 = vweird.f32 %v339
    %vm346 = vmor %vm344, %vm345
    %v347 = vsel %vm346, %v339, %v343
    %v348 = vand.u32 2147483647, %v338
    %vm349 = vcmp.eq.f32.partialorder %v348, 8.507059e+37
    %v350 = vand.u32 %v338, 2147483648
    %v351 = vor.u32 1.1754944e-38, %v350
    %v352 = vsel %vm349, %v351, %v347
    %v353 = vmul.f32 %v335, %v352
    %354 = vrot.lane.b32.xlu0 %v217, 88
    %v355 = vpop.permute.xlu0 %354
    %v358 = vsel %vm223, %v353, 0
    %360 = vmatpush.msra.mxu0 0.0
    %361 = vmatpush.msra.mxu0 0.0
    %362 = vmatpush.msra.mxu0 0.0
    %363 = vmatpush.msra.mxu0 0.0
    %364 = vmatpush.msra.mxu0 0.0
    %365 = vmatpush.msra.mxu0 0.0
    %366 = vmatpush.msra.mxu0 0.0
    %367 = vmatpush.msra.mxu0 0.0
    %368 = vmatpush.msra.mxu0 0.0
    %369 = vmatpush.msra.mxu0 0.0
    %370 = vmatpush.msra.mxu0 0.0
    %371 = vmatpush.msra.mxu0 0.0
    %372 = vmatpush.msra.mxu0 0.0
    %373 = vmatpush.msra.mxu0 0.0
    %374 = vmatpush.msra.mxu0 0.0
    %375 = vmatpush.msra.mxu0 %v355
    %376 = vmatmul.f32.gmra.mxu0 %v358
    %v377 = vpop.f32.mrf.mxu0
    %v378 = vadd.f32 0.0, %v377
    %379 = vdwg.mxu0
    %v381 = vsel %vm223, %v378, 0
    %383 = vmatpush.msra.mxu0 0.0
    %384 = vmatpush.msra.mxu0 0.0
    %385 = vmatpush.msra.mxu0 0.0
    %386 = vmatpush.msra.mxu0 0.0
    %387 = vmatpush.msra.mxu0 0.0
    %388 = vmatpush.msra.mxu0 0.0
    %389 = vmatpush.msra.mxu0 0.0
    %390 = vmatpush.msra.mxu0 0.0
    %391 = vmatpush.msra.mxu0 0.0
    %392 = vmatpush.msra.mxu0 0.0
    %393 = vmatpush.msra.mxu0 0.0
    %394 = vmatpush.msra.mxu0 0.0
    %395 = vmatpush.msra.mxu0 0.0
    %396 = vmatpush.msra.mxu0 0.0
    %397 = vmatpush.msra.mxu0 0.0
    %398 = vmatpush.msra.mxu0 %v220
    %399 = vmatmul.f32.gmra.mxu0 %v381
    %v400 = vpop.f32.mrf.mxu0
    %v401 = vadd.f32 0.0, %v400
    %402 = vdwg.mxu0
    %v404 = vsel %vm223, %v299, 0
    %406 = vmatpush.msra.mxu0 0.0
    %407 = vmatpush.msra.mxu0 0.0
    %408 = vmatpush.msra.mxu0 0.0
    %409 = vmatpush.msra.mxu0 0.0
    %410 = vmatpush.msra.mxu0 0.0
    %411 = vmatpush.msra.mxu0 0.0
    %412 = vmatpush.msra.mxu0 0.0
    %413 = vmatpush.msra.mxu0 0.0
    %414 = vmatpush.msra.mxu0 0.0
    %415 = vmatpush.msra.mxu0 0.0
    %416 = vmatpush.msra.mxu0 0.0
    %417 = vmatpush.msra.mxu0 0.0
    %418 = vmatpush.msra.mxu0 0.0
    %419 = vmatpush.msra.mxu0 0.0
    %420 = vmatpush.msra.mxu0 0.0
    %421 = vmatpush.msra.mxu0 %v219
    %422 = vmatmul.f32.gmra.mxu0 %v404
    %v423 = vpop.f32.mrf.mxu0
    %v424 = vadd.f32 %v401, %v423
    %425 = vdwg.mxu0
    %426 = vrot.lane.b32.xlu0 %v187, 112
    %v427 = vpop.permute.xlu0 %426
    %428 = vrot.lane.b32.xlu0 %v217, 112
    %v429 = vpop.permute.xlu0 %428
    %v430 = vsel %vm223, %v427, 0
    %v432 = vsel %vm223, %v429, 0
    %434 = vmatpush.xpose.msra.mxu0 0.0
    %435 = vmatpush.xpose.msra.mxu0 0.0
    %436 = vmatpush.xpose.msra.mxu0 0.0
    %437 = vmatpush.xpose.msra.mxu0 0.0
    %438 = vmatpush.xpose.msra.mxu0 0.0
    %439 = vmatpush.xpose.msra.mxu0 0.0
    %440 = vmatpush.xpose.msra.mxu0 0.0
    %441 = vmatpush.xpose.msra.mxu0 0.0
    %442 = vmatpush.xpose.msra.mxu0 0.0
    %443 = vmatpush.xpose.msra.mxu0 0.0
    %444 = vmatpush.xpose.msra.mxu0 0.0
    %445 = vmatpush.xpose.msra.mxu0 0.0
    %446 = vmatpush.xpose.msra.mxu0 0.0
    %447 = vmatpush.xpose.msra.mxu0 0.0
    %448 = vmatpush.xpose.msra.mxu0 0.0
    %449 = vmatpush.xpose.msra.mxu0 %v432
    %450 = vmatmul.f32.gmra.mxu0 %v430
    %v451 = vpop.f32.mrf.mxu0
    %v452 = vadd.f32 0.0, %v451
    %453 = vdwg.mxu0
    %v454 = vsel %vm154, -10000.0, %v452
    %v455 = vsel %vm223, %v454, -inf
    %456 = vmax.xlane.f32.xlu0 %v455
    %v457 = vpop.xlane.xlu0 %456
    %v458 = vsub.f32 %v454, %v457
    %v459 = vmul.f32 %v458, 1.442695
    %v460 = vpow.pop %v459
    %v461 = vsel %vm223, %v460, 0.0
    %462 = vadd.xlane.f32.xlu0 %v461
    %v463 = vpop.xlane.xlu0 %462
    %v464 = vrcp.pop %v463
    %v465 = vmul.f32 %v463, %v464
    %v466 = vsub.f32 1.0, %v465
    %v467 = vmul.f32 %v464, %v466
    %v468 = vadd.f32 %v464, %v467
    %vm469 = vweird.f32 %v463
    %vm470 = vweird.f32 %v464
    %vm471 = vmor %vm469, %vm470
    %v472 = vsel %vm471, %v464, %v468
    %v473 = vand.u32 2147483647, %v463
    %vm474 = vcmp.eq.f32.partialorder %v473, 8.507059e+37
    %v475 = vand.u32 %v463, 2147483648
    %v476 = vor.u32 1.1754944e-38, %v475
    %v477 = vsel %vm474, %v476, %v472
    %v478 = vmul.f32 %v460, %v477
    %479 = vrot.lane.b32.xlu0 %v217, 80
    %v480 = vpop.permute.xlu0 %479
    %v483 = vsel %vm223, %v478, 0
    %485 = vmatpush.msra.mxu0 0.0
    %486 = vmatpush.msra.mxu0 0.0
    %487 = vmatpush.msra.mxu0 0.0
    %488 = vmatpush.msra.mxu0 0.0
    %489 = vmatpush.msra.mxu0 0.0
    %490 = vmatpush.msra.mxu0 0.0
    %491 = vmatpush.msra.mxu0 0.0
    %492 = vmatpush.msra.mxu0 0.0
    %493 = vmatpush.msra.mxu0 0.0
    %494 = vmatpush.msra.mxu0 0.0
    %495 = vmatpush.msra.mxu0 0.0
    %496 = vmatpush.msra.mxu0 0.0
    %497 = vmatpush.msra.mxu0 0.0
    %498 = vmatpush.msra.mxu0 0.0
    %499 = vmatpush.msra.mxu0 0.0
    %500 = vmatpush.msra.mxu0 %v480
    %501 = vmatmul.f32.gmra.mxu0 %v483
    %v502 = vpop.f32.mrf.mxu0
    %v503 = vadd.f32 0.0, %v502
    %504 = vdwg.mxu0
    %v506 = vsel %vm223, %v503, 0
    %508 = vmatpush.msra.mxu0 0.0
    %509 = vmatpush.msra.mxu0 0.0
    %510 = vmatpush.msra.mxu0 0.0
    %511 = vmatpush.msra.mxu0 0.0
    %512 = vmatpush.msra.mxu0 0.0
    %513 = vmatpush.msra.mxu0 0.0
    %514 = vmatpush.msra.mxu0 0.0
    %515 = vmatpush.msra.mxu0 0.0
    %516 = vmatpush.msra.mxu0 0.0
    %517 = vmatpush.msra.mxu0 0.0
    %518 = vmatpush.msra.mxu0 0.0
    %519 = vmatpush.msra.mxu0 0.0
    %520 = vmatpush.msra.mxu0 0.0
    %521 = vmatpush.msra.mxu0 0.0
    %522 = vmatpush.msra.mxu0 0.0
    %523 = vmatpush.msra.mxu0 %v221
    %524 = vmatmul.f32.gmra.mxu0 %v506
    %v525 = vpop.f32.mrf.mxu0
    %v526 = vadd.f32 0.0, %v525
    %527 = vdwg.mxu0
    %v528 = vadd.f32 %v424, %v526
    %529 = vrot.lane.b32.xlu0 %v187, 104
    %v530 = vpop.permute.xlu0 %529
    %531 = vrot.lane.b32.xlu0 %v217, 104
    %v532 = vpop.permute.xlu0 %531
    %v533 = vsel %vm223, %v530, 0
    %v535 = vsel %vm223, %v532, 0
    %537 = vmatpush.xpose.msra.mxu0 0.0
    %538 = vmatpush.xpose.msra.mxu0 0.0
    %539 = vmatpush.xpose.msra.mxu0 0.0
    %540 = vmatpush.xpose.msra.mxu0 0.0
    %541 = vmatpush.xpose.msra.mxu0 0.0
    %542 = vmatpush.xpose.msra.mxu0 0.0
    %543 = vmatpush.xpose.msra.mxu0 0.0
    %544 = vmatpush.xpose.msra.mxu0 0.0
    %545 = vmatpush.xpose.msra.mxu0 0.0
    %546 = vmatpush.xpose.msra.mxu0 0.0
    %547 = vmatpush.xpose.msra.mxu0 0.0
    %548 = vmatpush.xpose.msra.mxu0 0.0
    %549 = vmatpush.xpose.msra.mxu0 0.0
    %550 = vmatpush.xpose.msra.mxu0 0.0
    %551 = vmatpush.xpose.msra.mxu0 0.0
    %552 = vmatpush.xpose.msra.mxu0 %v535
    %553 = vmatmul.f32.gmra.mxu0 %v533
    %v554 = vpop.f32.mrf.mxu0
    %v555 = vadd.f32 0.0, %v554
    %556 = vdwg.mxu0
    %v557 = vsel %vm154, -10000.0, %v555
    %v558 = vsel %vm223, %v557, -inf
    %559 = vmax.xlane.f32.xlu0 %v558
    %v560 = vpop.xlane.xlu0 %559
    %v561 = vsub.f32 %v557, %v560
    %v562 = vmul.f32 %v561, 1.442695
    %v563 = vpow.pop %v562
    %v564 = vsel %vm223, %v563, 0.0
    %565 = vadd.xlane.f32.xlu0 %v564
    %v566 = vpop.xlane.xlu0 %565
    %v567 = vrcp.pop %v566
    %v568 = vmul.f32 %v566, %v567
    %v569 = vsub.f32 1.0, %v568
    %v570 = vmul.f32 %v567, %v569
    %v571 = vadd.f32 %v567, %v570
    %vm572 = vweird.f32 %v566
    %vm573 = vweird.f32 %v567
    %vm574 = vmor %vm572, %vm573
    %v575 = vsel %vm574, %v567, %v571
    %v576 = vand.u32 2147483647, %v566
    %vm577 = vcmp.eq.f32.partialorder %v576, 8.507059e+37
    %v578 = vand.u32 %v566, 2147483648
    %v579 = vor.u32 1.1754944e-38, %v578
    %v580 = vsel %vm577, %v579, %v575
    %v581 = vmul.f32 %v563, %v580
    %582 = vrot.lane.b32.xlu0 %v217, 72
    %v583 = vpop.permute.xlu0 %582
    %v586 = vsel %vm223, %v581, 0
    %588 = vmatpush.msra.mxu0 0.0
    %589 = vmatpush.msra.mxu0 0.0
    %590 = vmatpush.msra.mxu0 0.0
    %591 = vmatpush.msra.mxu0 0.0
    %592 = vmatpush.msra.mxu0 0.0
    %593 = vmatpush.msra.mxu0 0.0
    %594 = vmatpush.msra.mxu0 0.0
    %595 = vmatpush.msra.mxu0 0.0
    %596 = vmatpush.msra.mxu0 0.0
    %597 = vmatpush.msra.mxu0 0.0
    %598 = vmatpush.msra.mxu0 0.0
    %599 = vmatpush.msra.mxu0 0.0
    %600 = vmatpush.msra.mxu0 0.0
    %601 = vmatpush.msra.mxu0 0.0
    %602 = vmatpush.msra.mxu0 0.0
    %603 = vmatpush.msra.mxu0 %v583
    %604 = vmatmul.f32.gmra.mxu0 %v586
    %v605 = vpop.f32.mrf.mxu0
    %v606 = vadd.f32 0.0, %v605
    %607 = vdwg.mxu0
    %v609 = vsel %vm223, %v606, 0
    %611 = vmatpush.msra.mxu0 0.0
    %612 = vmatpush.msra.mxu0 0.0
    %613 = vmatpush.msra.mxu0 0.0
    %614 = vmatpush.msra.mxu0 0.0
    %615 = vmatpush.msra.mxu0 0.0
    %616 = vmatpush.msra.mxu0 0.0
    %617 = vmatpush.msra.mxu0 0.0
    %618 = vmatpush.msra.mxu0 0.0
    %619 = vmatpush.msra.mxu0 0.0
    %620 = vmatpush.msra.mxu0 0.0
    %621 = vmatpush.msra.mxu0 0.0
    %622 = vmatpush.msra.mxu0 0.0
    %623 = vmatpush.msra.mxu0 0.0
    %624 = vmatpush.msra.mxu0 0.0
    %625 = vmatpush.msra.mxu0 0.0
    %626 = vmatpush.msra.mxu0 %v222
    %627 = vmatmul.f32.gmra.mxu0 %v609
    %v628 = vpop.f32.mrf.mxu0
    %v629 = vadd.f32 0.0, %v628
    %630 = vdwg.mxu0
    %v631 = vadd.f32 %v528, %v629
    %v632 = vld [vmem:[#allocation8] sm:$0x1]
    %v634 = vperm.slane %v632, 0
    %v636 = vadd.f32 %v631, %v634
    %v637 = vadd.f32 %v151, %v636
    %v638 = vld [vmem:[%s9] sm:$0x1]
    %v639 = vld [vmem:[%s10] sm:$0x1]
    %v640 = vsel %vm163, %v637, 0.0
    %641 = vadd.xlane.f32.xlu0 %v640
    %v642 = vpop.xlane.xlu0 %641
    %v643 = vrcp.pop 32.0
    %v644 = vmul.f32 32.0, %v643
    %v645 = vsub.f32 1.0, %v644
    %v646 = vmul.f32 %v643, %v645
    %v647 = vadd.f32 %v643, %v646
    %vm648 = vweird.f32 %v643
    %v649 = vsel %vm648, %v643, %v647
    %v650 = vmul.f32 %v642, %v649
    %v651 = vsub.f32 %v637, %v650
    %v652 = vmul.f32 %v651, %v651
    %v653 = vsel %vm163, %v652, 0.0
    %654 = vadd.xlane.f32.xlu0 %v653
    %v655 = vpop.xlane.xlu0 %654
    %v656 = vmul.f32 %v655, %v649
    %v657 = vadd.f32 %v656, 1e-12
    %v658 = vrsqrt.pop %v657
    %v659 = vmul.f32 %v658, %v657
    %v660 = vmul.f32 %v659, %v658
    %v661 = vmul.f32 0.5, %v660
    %v662 = vsub.f32 1.5, %v661
    %v663 = vmul.f32 %v658, %v662
    %vm664 = vweird.f32 %v657
    %vm665 = vweird.f32 %v658
    %vm666 = vmor %vm664, %vm665
    %v667 = vsel %vm666, %v658, %v663
    %v668 = vmul.f32 %v651, %v667
    %v670 = vperm.slane %v638, 0
    %v672 = vmul.f32 %v670, %v668
    %v674 = vperm.slane %v639, 0
    %v676 = vadd.f32 %v672, %v674
    %v677 = vld [vmem:[#allocation10] sm:$0xff]
    %v678 = vld [vmem:[#allocation10 + $0x8] sm:$0xff]
    %v679 = vld [vmem:[#allocation10 + $0x10] sm:$0xff]
    %v680 = vld [vmem:[#allocation10 + $0x18] sm:$0xff]
    %v681 = vld [vmem:[%s12] sm:$0x1]
    %v683 = vperm.slane %v681, 0
    %v686 = vsel %vm163, %v676, 0
    %688 = vmatpush.msra.mxu0 0.0
    %689 = vmatpush.msra.mxu0 0.0
    %690 = vmatpush.msra.mxu0 0.0
    %691 = vmatpush.msra.mxu0 0.0
    %692 = vmatpush.msra.mxu0 0.0
    %693 = vmatpush.msra.mxu0 0.0
    %694 = vmatpush.msra.mxu0 0.0
    %695 = vmatpush.msra.mxu0 0.0
    %696 = vmatpush.msra.mxu0 0.0
    %697 = vmatpush.msra.mxu0 0.0
    %698 = vmatpush.msra.mxu0 0.0
    %699 = vmatpush.msra.mxu0 0.0
    %700 = vmatpush.msra.mxu0 %v680
    %701 = vmatpush.msra.mxu0 %v679
    %702 = vmatpush.msra.mxu0 %v678
    %703 = vmatpush.msra.mxu0 %v677
    %704 = vmatmul.f32.gmra.mxu0 %v686
    %v705 = vpop.f32.mrf.mxu0
    %v706 = vadd.f32 %v683, %v705
    %707 = vdwg.mxu0
    %v708 = vmax.f32 %v706, 0.0
    %v709 = vld [vmem:[%s13] sm:$0xff]
    %v710 = vld [vmem:[%s13 + $0x8] sm:$0xff]
    %v711 = vld [vmem:[%s13 + $0x10] sm:$0xff]
    %v712 = vld [vmem:[%s13 + $0x18] sm:$0xff]
    %v713 = vld [vmem:[%s13 + $0x20] sm:$0xff]
    %v714 = vld [vmem:[%s13 + $0x28] sm:$0xff]
    %v715 = vld [vmem:[%s13 + $0x30] sm:$0xff]
    %v716 = vld [vmem:[%s13 + $0x38] sm:$0xff]
    %v717 = vld [vmem:[#allocation11] sm:$0x1]
    %v719 = vperm.slane %v717, 0
    %vm721 = vcmask 523264
    %v723 = vsel %vm721, %v708, 0
    %725 = vmatpush.msra.mxu0 0.0
    %726 = vmatpush.msra.mxu0 0.0
    %727 = vmatpush.msra.mxu0 0.0
    %728 = vmatpush.msra.mxu0 0.0
    %729 = vmatpush.msra.mxu0 0.0
    %730 = vmatpush.msra.mxu0 0.0
    %731 = vmatpush.msra.mxu0 0.0
    %732 = vmatpush.msra.mxu0 0.0
    %733 = vmatpush.msra.mxu0 %v716
    %734 = vmatpush.msra.mxu0 %v715
    %735 = vmatpush.msra.mxu0 %v714
    %736 = vmatpush.msra.mxu0 %v713
    %737 = vmatpush.msra.mxu0 %v712
    %738 = vmatpush.msra.mxu0 %v711
    %739 = vmatpush.msra.mxu0 %v710
    %740 = vmatpush.msra.mxu0 %v709
    %741 = vmatmul.f32.gmra.mxu0 %v723
    %v742 = vpop.f32.mrf.mxu0
    %v743 = vadd.f32 %v719, %v742
    %744 = vdwg.mxu0
    %v745 = vadd.f32 %v676, %v743
    %v746 = vld [vmem:[%s15] sm:$0x1]
    %v747 = vld [vmem:[%s16] sm:$0x1]
    %v748 = vsel %vm163, %v745, 0.0
    %749 = vadd.xlane.f32.xlu0 %v748
    %v750 = vpop.xlane.xlu0 %749
    %v751 = vmul.f32 %v750, %v649
    %v752 = vsub.f32 %v745, %v751
    %v753 = vmul.f32 %v752, %v752
    %v754 = vsel %vm163, %v753, 0.0
    %755 = vadd.xlane.f32.xlu0 %v754
    %v756 = vpop.xlane.xlu0 %755
    %v757 = vmul.f32 %v756, %v649
    %v758 = vadd.f32 %v757, 1e-12
    %v759 = vrsqrt.pop %v758
    %v760 = vmul.f32 %v759, %v758
    %v761 = vmul.f32 %v760, %v759
    %v762 = vmul.f32 0.5, %v761
    %v763 = vsub.f32 1.5, %v762
    %v764 = vmul.f32 %v759, %v763
    %vm765 = vweird.f32 %v758
    %vm766 = vweird.f32 %v759
    %vm767 = vmor %vm765, %vm766
    %v768 = vsel %vm767, %v759, %v764
    %v769 = vmul.f32 %v752, %v768
    %v771 = vperm.slane %v746, 0
    %v773 = vmul.f32 %v771, %v769
    %v775 = vperm.slane %v747, 0
    %v777 = vadd.f32 %v773, %v775
    %s778 = scalar_lea.vmem %s3, 32
    %v779 = vld [vmem:[%s778] sm:$0xff]
    %v780 = vld [vmem:[%s778 + $0x8] sm:$0xff]
    %v781 = vld [vmem:[%s778 + $0x10] sm:$0xff]
    %v782 = vld [vmem:[%s778 + $0x18] sm:$0xff]
    %s783 = scalar_lea.vmem %s4, 1
    %v784 = vld [vmem:[%s783] sm:$0x1]
    %v786 = vperm.slane %v784, 0
    %v789 = vsel %vm163, %v777, 0
    %791 = vmatpush.msra.mxu0 0.0
    %792 = vmatpush.msra.mxu0 0.0
    %793 = vmatpush.msra.mxu0 0.0
    %794 = vmatpush.msra.mxu0 0.0
    %795 = vmatpush.msra.mxu0 0.0
    %796 = vmatpush.msra.mxu0 0.0
    %797 = vmatpush.msra.mxu0 0.0
    %798 = vmatpush.msra.mxu0 0.0
    %799 = vmatpush.msra.mxu0 0.0
    %800 = vmatpush.msra.mxu0 0.0
    %801 = vmatpush.msra.mxu0 0.0
    %802 = vmatpush.msra.mxu0 0.0
    %803 = vmatpush.msra.mxu0 %v782
    %804 = vmatpush.msra.mxu0 %v781
    %805 = vmatpush.msra.mxu0 %v780
    %806 = vmatpush.msra.mxu0 %v779
    %807 = vmatmul.f32.gmra.mxu0 %v789
    %v808 = vpop.f32.mrf.mxu0
    %v809 = vadd.f32 %v786, %v808
    %810 = vdwg.mxu0
    %v811 = vmul.f32 %v809, 0.35355338
    %s812 = scalar_lea.vmem %s5, 32
    %v813 = vld [vmem:[%s812] sm:$0xff]
    %v814 = vld [vmem:[%s812 + $0x8] sm:$0xff]
    %v815 = vld [vmem:[%s812 + $0x10] sm:$0xff]
    %v816 = vld [vmem:[%s812 + $0x18] sm:$0xff]
    %s817 = scalar_lea.vmem %s6, 1
    %v818 = vld [vmem:[%s817] sm:$0x1]
    %v820 = vperm.slane %v818, 0
    %822 = vmatpush.msra.mxu0 0.0
    %823 = vmatpush.msra.mxu0 0.0
    %824 = vmatpush.msra.mxu0 0.0
    %825 = vmatpush.msra.mxu0 0.0
    %826 = vmatpush.msra.mxu0 0.0
    %827 = vmatpush.msra.mxu0 0.0
    %828 = vmatpush.msra.mxu0 0.0
    %829 = vmatpush.msra.mxu0 0.0
    %830 = vmatpush.msra.mxu0 0.0
    %831 = vmatpush.msra.mxu0 0.0
    %832 = vmatpush.msra.mxu0 0.0
    %833 = vmatpush.msra.mxu0 0.0
    %834 = vmatpush.msra.mxu0 %v816
    %835 = vmatpush.msra.mxu0 %v815
    %836 = vmatpush.msra.mxu0 %v814
    %837 = vmatpush.msra.mxu0 %v813
    %838 = vmatmul.f32.gmra.mxu0 %v197
    %v839 = vpop.f32.mrf.mxu0
    %v840 = vadd.f32 %v820, %v839
    %841 = vdwg.mxu0
    %s842 = scalar_lea.vmem %s7, 32
    %v843 = vld [vmem:[%s842] sm:$0xff]
    %v844 = vld [vmem:[%s842 + $0x8] sm:$0xff]
    %v845 = vld [vmem:[%s842 + $0x10] sm:$0xff]
    %v846 = vld [vmem:[%s842 + $0x18] sm:$0xff]
    %v848 = vsel %vm223, %v811, 0
    %v851 = vsel %vm223, %v840, 0
    %853 = vmatpush.xpose.msra.mxu0 0.0
    %854 = vmatpush.xpose.msra.mxu0 0.0
    %855 = vmatpush.xpose.msra.mxu0 0.0
    %856 = vmatpush.xpose.msra.mxu0 0.0
    %857 = vmatpush.xpose.msra.mxu0 0.0
    %858 = vmatpush.xpose.msra.mxu0 0.0
    %859 = vmatpush.xpose.msra.mxu0 0.0
    %860 = vmatpush.xpose.msra.mxu0 0.0
    %861 = vmatpush.xpose.msra.mxu0 0.0
    %862 = vmatpush.xpose.msra.mxu0 0.0
    %863 = vmatpush.xpose.msra.mxu0 0.0
    %864 = vmatpush.xpose.msra.mxu0 0.0
    %865 = vmatpush.xpose.msra.mxu0 0.0
    %866 = vmatpush.xpose.msra.mxu0 0.0
    %867 = vmatpush.xpose.msra.mxu0 0.0
    %868 = vmatpush.xpose.msra.mxu0 %v851
    %869 = vmatmul.f32.gmra.mxu0 %v848
    %v870 = vpop.f32.mrf.mxu0
    %v871 = vadd.f32 0.0, %v870
    %872 = vdwg.mxu0
    %v873 = vsel %vm154, -10000.0, %v871
    %v874 = vsel %vm223, %v873, -inf
    %875 = vmax.xlane.f32.xlu0 %v874
    %v876 = vpop.xlane.xlu0 %875
    %v877 = vsub.f32 %v873, %v876
    %v878 = vmul.f32 %v877, 1.442695
    %v879 = vpow.pop %v878
    %v880 = vsel %vm223, %v879, 0.0
    %881 = vadd.xlane.f32.xlu0 %v880
    %v882 = vpop.xlane.xlu0 %881
    %v883 = vrcp.pop %v882
    %v884 = vmul.f32 %v882, %v883
    %v885 = vsub.f32 1.0, %v884
    %v886 = vmul.f32 %v883, %v885
    %v887 = vadd.f32 %v883, %v886
    %vm888 = vweird.f32 %v882
    %vm889 = vweird.f32 %v883
    %vm890 = vmor %vm888, %vm889
    %v891 = vsel %vm890, %v883, %v887
    %v892 = vand.u32 2147483647, %v882
    %vm893 = vcmp.eq.f32.partialorder %v892, 8.507059e+37
    %v894 = vand.u32 %v882, 2147483648
    %v895 = vor.u32 1.1754944e-38, %v894
    %v896 = vsel %vm893, %v895, %v891
    %v897 = vmul.f32 %v879, %v896
    %898 = vrot.lane.b32.xlu0 %v840, 96
    %v899 = vpop.permute.xlu0 %898
    %v902 = vsel %vm223, %v897, 0
    %904 = vmatpush.msra.mxu0 0.0
    %905 = vmatpush.msra.mxu0 0.0
    %906 = vmatpush.msra.mxu0 0.0
    %907 = vmatpush.msra.mxu0 0.0
    %908 = vmatpush.msra.mxu0 0.0
    %909 = vmatpush.msra.mxu0 0.0
    %910 = vmatpush.msra.mxu0 0.0
    %911 = vmatpush.msra.mxu0 0.0
    %912 = vmatpush.msra.mxu0 0.0
    %913 = vmatpush.msra.mxu0 0.0
    %914 = vmatpush.msra.mxu0 0.0
    %915 = vmatpush.msra.mxu0 0.0
    %916 = vmatpush.msra.mxu0 0.0
    %917 = vmatpush.msra.mxu0 0.0
    %918 = vmatpush.msra.mxu0 0.0
    %919 = vmatpush.msra.mxu0 %v899
    %920 = vmatmul.f32.gmra.mxu0 %v902
    %v921 = vpop.f32.mrf.mxu0
    %v922 = vadd.f32 0.0, %v921
    %923 = vdwg.mxu0
    %924 = vrot.lane.b32.xlu0 %v811, 120
    %v925 = vpop.permute.xlu0 %924
    %926 = vrot.lane.b32.xlu0 %v840, 120
    %v927 = vpop.permute.xlu0 %926
    %v928 = vsel %vm223, %v925, 0
    %v930 = vsel %vm223, %v927, 0
    %932 = vmatpush.xpose.msra.mxu0 0.0
    %933 = vmatpush.xpose.msra.mxu0 0.0
    %934 = vmatpush.xpose.msra.mxu0 0.0
    %935 = vmatpush.xpose.msra.mxu0 0.0
    %936 = vmatpush.xpose.msra.mxu0 0.0
    %937 = vmatpush.xpose.msra.mxu0 0.0
    %938 = vmatpush.xpose.msra.mxu0 0.0
    %939 = vmatpush.xpose.msra.mxu0 0.0
    %940 = vmatpush.xpose.msra.mxu0 0.0
    %941 = vmatpush.xpose.msra.mxu0 0.0
    %942 = vmatpush.xpose.msra.mxu0 0.0
    %943 = vmatpush.xpose.msra.mxu0 0.0
    %944 = vmatpush.xpose.msra.mxu0 0.0
    %945 = vmatpush.xpose.msra.mxu0 0.0
    %946 = vmatpush.xpose.msra.mxu0 0.0
    %947 = vmatpush.xpose.msra.mxu0 %v930
    %948 = vmatmul.f32.gmra.mxu0 %v928
    %v949 = vpop.f32.mrf.mxu0
    %v950 = vadd.f32 0.0, %v949
    %951 = vdwg.mxu0
    %v952 = vsel %vm154, -10000.0, %v950
    %v953 = vsel %vm223, %v952, -inf
    %954 = vmax.xlane.f32.xlu0 %v953
    %v955 = vpop.xlane.xlu0 %954
    %v956 = vsub.f32 %v952, %v955
    %v957 = vmul.f32 %v956, 1.442695
    %v958 = vpow.pop %v957
    %v959 = vsel %vm223, %v958, 0.0
    %960 = vadd.xlane.f32.xlu0 %v959
    %v961 = vpop.xlane.xlu0 %960
    %v962 = vrcp.pop %v961
    %v963 = vmul.f32 %v961, %v962
    %v964 = vsub.f32 1.0, %v963
    %v965 = vmul.f32 %v962, %v964
    %v966 = vadd.f32 %v962, %v965
    %vm967 = vweird.f32 %v961
    %vm968 = vweird.f32 %v962
    %vm969 = vmor %vm967, %vm968
    %v970 = vsel %vm969, %v962, %v966
    %v971 = vand.u32 2147483647, %v961
    %vm972 = vcmp.eq.f32.partialorder %v971, 8.507059e+37
    %v973 = vand.u32 %v961, 2147483648
    %v974 = vor.u32 1.1754944e-38, %v973
    %v975 = vsel %vm972, %v974, %v970
    %v976 = vmul.f32 %v958, %v975
    %977 = vrot.lane.b32.xlu0 %v840, 88
    %v978 = vpop.permute.xlu0 %977
    %v981 = vsel %vm223, %v976, 0
    %983 = vmatpush.msra.mxu0 0.0
    %984 = vmatpush.msra.mxu0 0.0
    %985 = vmatpush.msra.mxu0 0.0
    %986 = vmatpush.msra.mxu0 0.0
    %987 = vmatpush.msra.mxu0 0.0
    %988 = vmatpush.msra.mxu0 0.0
    %989 = vmatpush.msra.mxu0 0.0
    %990 = vmatpush.msra.mxu0 0.0
    %991 = vmatpush.msra.mxu0 0.0
    %992 = vmatpush.msra.mxu0 0.0
    %993 = vmatpush.msra.mxu0 0.0
    %994 = vmatpush.msra.mxu0 0.0
    %995 = vmatpush.msra.mxu0 0.0
    %996 = vmatpush.msra.mxu0 0.0
    %997 = vmatpush.msra.mxu0 0.0
    %998 = vmatpush.msra.mxu0 %v978
    %999 = vmatmul.f32.gmra.mxu0 %v981
    %v1000 = vpop.f32.mrf.mxu0
    %v1001 = vadd.f32 0.0, %v1000
    %1002 = vdwg.mxu0
    %v1004 = vsel %vm223, %v1001, 0
    %1006 = vmatpush.msra.mxu0 0.0
    %1007 = vmatpush.msra.mxu0 0.0
    %1008 = vmatpush.msra.mxu0 0.0
    %1009 = vmatpush.msra.mxu0 0.0
    %1010 = vmatpush.msra.mxu0 0.0
    %1011 = vmatpush.msra.mxu0 0.0
    %1012 = vmatpush.msra.mxu0 0.0
    %1013 = vmatpush.msra.mxu0 0.0
    %1014 = vmatpush.msra.mxu0 0.0
    %1015 = vmatpush.msra.mxu0 0.0
    %1016 = vmatpush.msra.mxu0 0.0
    %1017 = vmatpush.msra.mxu0 0.0
    %1018 = vmatpush.msra.mxu0 0.0
    %1019 = vmatpush.msra.mxu0 0.0
    %1020 = vmatpush.msra.mxu0 0.0
    %1021 = vmatpush.msra.mxu0 %v844
    %1022 = vmatmul.f32.gmra.mxu0 %v1004
    %v1023 = vpop.f32.mrf.mxu0
    %v1024 = vadd.f32 0.0, %v1023
    %1025 = vdwg.mxu0
    %v1027 = vsel %vm223, %v922, 0
    %1029 = vmatpush.msra.mxu0 0.0
    %1030 = vmatpush.msra.mxu0 0.0
    %1031 = vmatpush.msra.mxu0 0.0
    %1032 = vmatpush.msra.mxu0 0.0
    %1033 = vmatpush.msra.mxu0 0.0
    %1034 = vmatpush.msra.mxu0 0.0
    %1035 = vmatpush.msra.mxu0 0.0
    %1036 = vmatpush.msra.mxu0 0.0
    %1037 = vmatpush.msra.mxu0 0.0
    %1038 = vmatpush.msra.mxu0 0.0
    %1039 = vmatpush.msra.mxu0 0.0
    %1040 = vmatpush.msra.mxu0 0.0
    %1041 = vmatpush.msra.mxu0 0.0
    %1042 = vmatpush.msra.mxu0 0.0
    %1043 = vmatpush.msra.mxu0 0.0
    %1044 = vmatpush.msra.mxu0 %v843
    %1045 = vmatmul.f32.gmra.mxu0 %v1027
    %v1046 = vpop.f32.mrf.mxu0
    %v1047 = vadd.f32 %v1024, %v1046
    %1048 = vdwg.mxu0
    %1049 = vrot.lane.b32.xlu0 %v811, 112
    %v1050 = vpop.permute.xlu0 %1049
    %1051 = vrot.lane.b32.xlu0 %v840, 112
    %v1052 = vpop.permute.xlu0 %1051
    %v1053 = vsel %vm223, %v1050, 0
    %v1055 = vsel %vm223, %v1052, 0
    %1057 = vmatpush.xpose.msra.mxu0 0.0
    %1058 = vmatpush.xpose.msra.mxu0 0.0
    %1059 = vmatpush.xpose.msra.mxu0 0.0
    %1060 = vmatpush.xpose.msra.mxu0 0.0
    %1061 = vmatpush.xpose.msra.mxu0 0.0
    %1062 = vmatpush.xpose.msra.mxu0 0.0
    %1063 = vmatpush.xpose.msra.mxu0 0.0
    %1064 = vmatpush.xpose.msra.mxu0 0.0
    %1065 = vmatpush.xpose.msra.mxu0 0.0
    %1066 = vmatpush.xpose.msra.mxu0 0.0
    %1067 = vmatpush.xpose.msra.mxu0 0.0
    %1068 = vmatpush.xpose.msra.mxu0 0.0
    %1069 = vmatpush.xpose.msra.mxu0 0.0
    %1070 = vmatpush.xpose.msra.mxu0 0.0
    %1071 = vmatpush.xpose.msra.mxu0 0.0
    %1072 = vmatpush.xpose.msra.mxu0 %v1055
    %1073 = vmatmul.f32.gmra.mxu0 %v1053
    %v1074 = vpop.f32.mrf.mxu0
    %v1075 = vadd.f32 0.0, %v1074
    %1076 = vdwg.mxu0
    %v1077 = vsel %vm154, -10000.0, %v1075
    %v1078 = vsel %vm223, %v1077, -inf
    %1079 = vmax.xlane.f32.xlu0 %v1078
    %v1080 = vpop.xlane.xlu0 %1079
    %v1081 = vsub.f32 %v1077, %v1080
    %v1082 = vmul.f32 %v1081, 1.442695
    %v1083 = vpow.pop %v1082
    %v1084 = vsel %vm223, %v1083, 0.0
    %1085 = vadd.xlane.f32.xlu0 %v1084
    %v1086 = vpop.xlane.xlu0 %1085
    %v1087 = vrcp.pop %v1086
    %v1088 = vmul.f32 %v1086, %v1087
    %v1089 = vsub.f32 1.0, %v1088
    %v1090 = vmul.f32 %v1087, %v1089
    %v1091 = vadd.f32 %v1087, %v1090
    %vm1092 = vweird.f32 %v1086
    %vm1093 = vweird.f32 %v1087
    %vm1094 = vmor %vm1092, %vm1093
    %v1095 = vsel %vm1094, %v1087, %v1091
    %v1096 = vand.u32 2147483647, %v1086
    %vm1097 = vcmp.eq.f32.partialorder %v1096, 8.507059e+37
    %v1098 = vand.u32 %v1086, 2147483648
    %v1099 = vor.u32 1.1754944e-38, %v1098
    %v1100 = vsel %vm1097, %v1099, %v1095
    %v1101 = vmul.f32 %v1083, %v1100
    %1102 = vrot.lane.b32.xlu0 %v840, 80
    %v1103 = vpop.permute.xlu0 %1102
    %v1106 = vsel %vm223, %v1101, 0
    %1108 = vmatpush.msra.mxu0 0.0
    %1109 = vmatpush.msra.mxu0 0.0
    %1110 = vmatpush.msra.mxu0 0.0
    %1111 = vmatpush.msra.mxu0 0.0
    %1112 = vmatpush.msra.mxu0 0.0
    %1113 = vmatpush.msra.mxu0 0.0
    %1114 = vmatpush.msra.mxu0 0.0
    %1115 = vmatpush.msra.mxu0 0.0
    %1116 = vmatpush.msra.mxu0 0.0
    %1117 = vmatpush.msra.mxu0 0.0
    %1118 = vmatpush.msra.mxu0 0.0
    %1119 = vmatpush.msra.mxu0 0.0
    %1120 = vmatpush.msra.mxu0 0.0
    %1121 = vmatpush.msra.mxu0 0.0
    %1122 = vmatpush.msra.mxu0 0.0
    %1123 = vmatpush.msra.mxu0 %v1103
    %1124 = vmatmul.f32.gmra.mxu0 %v1106
    %v1125 = vpop.f32.mrf.mxu0
    %v1126 = vadd.f32 0.0, %v1125
    %1127 = vdwg.mxu0
    %v1129 = vsel %vm223, %v1126, 0
    %1131 = vmatpush.msra.mxu0 0.0
    %1132 = vmatpush.msra.mxu0 0.0
    %1133 = vmatpush.msra.mxu0 0.0
    %1134 = vmatpush.msra.mxu0 0.0
    %1135 = vmatpush.msra.mxu0 0.0
    %1136 = vmatpush.msra.mxu0 0.0
    %1137 = vmatpush.msra.mxu0 0.0
    %1138 = vmatpush.msra.mxu0 0.0
    %1139 = vmatpush.msra.mxu0 0.0
    %1140 = vmatpush.msra.mxu0 0.0
    %1141 = vmatpush.msra.mxu0 0.0
    %1142 = vmatpush.msra.mxu0 0.0
    %1143 = vmatpush.msra.mxu0 0.0
    %1144 = vmatpush.msra.mxu0 0.0
    %1145 = vmatpush.msra.mxu0 0.0
    %1146 = vmatpush.msra.mxu0 %v845
    %1147 = vmatmul.f32.gmra.mxu0 %v1129
    %v1148 = vpop.f32.mrf.mxu0
    %v1149 = vadd.f32 0.0, %v1148
    %1150 = vdwg.mxu0
    %v1151 = vadd.f32 %v1047, %v1149
    %1152 = vrot.lane.b32.xlu0 %v811, 104
    %v1153 = vpop.permute.xlu0 %1152
    %1154 = vrot.lane.b32.xlu0 %v840, 104
    %v1155 = vpop.permute.xlu0 %1154
    %v1156 = vsel %vm223, %v1153, 0
    %v1158 = vsel %vm223, %v1155, 0
    %1160 = vmatpush.xpose.msra.mxu0 0.0
    %1161 = vmatpush.xpose.msra.mxu0 0.0
    %1162 = vmatpush.xpose.msra.mxu0 0.0
    %1163 = vmatpush.xpose.msra.mxu0 0.0
    %1164 = vmatpush.xpose.msra.mxu0 0.0
    %1165 = vmatpush.xpose.msra.mxu0 0.0
    %1166 = vmatpush.xpose.msra.mxu0 0.0
    %1167 = vmatpush.xpose.msra.mxu0 0.0
    %1168 = vmatpush.xpose.msra.mxu0 0.0
    %1169 = vmatpush.xpose.msra.mxu0 0.0
    %1170 = vmatpush.xpose.msra.mxu0 0.0
    %1171 = vmatpush.xpose.msra.mxu0 0.0
    %1172 = vmatpush.xpose.msra.mxu0 0.0
    %1173 = vmatpush.xpose.msra.mxu0 0.0
    %1174 = vmatpush.xpose.msra.mxu0 0.0
    %1175 = vmatpush.xpose.msra.mxu0 %v1158
    %1176 = vmatmul.f32.gmra.mxu0 %v1156
    %v1177 = vpop.f32.mrf.mxu0
    %v1178 = vadd.f32 0.0, %v1177
    %1179 = vdwg.mxu0
    %v1180 = vsel %vm154, -10000.0, %v1178
    %v1181 = vsel %vm223, %v1180, -inf
    %1182 = vmax.xlane.f32.xlu0 %v1181
    %v1183 = vpop.xlane.xlu0 %1182
    %v1184 = vsub.f32 %v1180, %v1183
    %v1185 = vmul.f32 %v1184, 1.442695
    %v1186 = vpow.pop %v1185
    %v1187 = vsel %vm223, %v1186, 0.0
    %1188 = vadd.xlane.f32.xlu0 %v1187
    %v1189 = vpop.xlane.xlu0 %1188
    %v1190 = vrcp.pop %v1189
    %v1191 = vmul.f32 %v1189, %v1190
    %v1192 = vsub.f32 1.0, %v1191
    %v1193 = vmul.f32 %v1190, %v1192
    %v1194 = vadd.f32 %v1190, %v1193
    %vm1195 = vweird.f32 %v1189
    %vm1196 = vweird.f32 %v1190
    %vm1197 = vmor %vm1195, %vm1196
    %v1198 = vsel %vm1197, %v1190, %v1194
    %v1199 = vand.u32 2147483647, %v1189
    %vm1200 = vcmp.eq.f32.partialorder %v1199, 8.507059e+37
    %v1201 = vand.u32 %v1189, 2147483648
    %v1202 = vor.u32 1.1754944e-38, %v1201
    %v1203 = vsel %vm1200, %v1202, %v1198
    %v1204 = vmul.f32 %v1186, %v1203
    %1205 = vrot.lane.b32.xlu0 %v840, 72
    %v1206 = vpop.permute.xlu0 %1205
    %v1209 = vsel %vm223, %v1204, 0
    %1211 = vmatpush.msra.mxu0 0.0
    %1212 = vmatpush.msra.mxu0 0.0
    %1213 = vmatpush.msra.mxu0 0.0
    %1214 = vmatpush.msra.mxu0 0.0
    %1215 = vmatpush.msra.mxu0 0.0
    %1216 = vmatpush.msra.mxu0 0.0
    %1217 = vmatpush.msra.mxu0 0.0
    %1218 = vmatpush.msra.mxu0 0.0
    %1219 = vmatpush.msra.mxu0 0.0
    %1220 = vmatpush.msra.mxu0 0.0
    %1221 = vmatpush.msra.mxu0 0.0
    %1222 = vmatpush.msra.mxu0 0.0
    %1223 = vmatpush.msra.mxu0 0.0
    %1224 = vmatpush.msra.mxu0 0.0
    %1225 = vmatpush.msra.mxu0 0.0
    %1226 = vmatpush.msra.mxu0 %v1206
    %1227 = vmatmul.f32.gmra.mxu0 %v1209
    %v1228 = vpop.f32.mrf.mxu0
    %v1229 = vadd.f32 0.0, %v1228
    %1230 = vdwg.mxu0
    %v1232 = vsel %vm223, %v1229, 0
    %1234 = vmatpush.msra.mxu0 0.0
    %1235 = vmatpush.msra.mxu0 0.0
    %1236 = vmatpush.msra.mxu0 0.0
    %1237 = vmatpush.msra.mxu0 0.0
    %1238 = vmatpush.msra.mxu0 0.0
    %1239 = vmatpush.msra.mxu0 0.0
    %1240 = vmatpush.msra.mxu0 0.0
    %1241 = vmatpush.msra.mxu0 0.0
    %1242 = vmatpush.msra.mxu0 0.0
    %1243 = vmatpush.msra.mxu0 0.0
    %1244 = vmatpush.msra.mxu0 0.0
    %1245 = vmatpush.msra.mxu0 0.0
    %1246 = vmatpush.msra.mxu0 0.0
    %1247 = vmatpush.msra.mxu0 0.0
    %1248 = vmatpush.msra.mxu0 0.0
    %1249 = vmatpush.msra.mxu0 %v846
    %1250 = vmatmul.f32.gmra.mxu0 %v1232
    %v1251 = vpop.f32.mrf.mxu0
    %v1252 = vadd.f32 0.0, %v1251
    %1253 = vdwg.mxu0
    %v1254 = vadd.f32 %v1151, %v1252
    %s1255 = scalar_lea.vmem [#allocation8], 1
    %v1256 = vld [vmem:[%s1255] sm:$0x1]
    %v1258 = vperm.slane %v1256, 0
    %v1260 = vadd.f32 %v1254, %v1258
    %v1261 = vadd.f32 %v777, %v1260
    %s1262 = scalar_lea.vmem %s9, 1
    %v1263 = vld [vmem:[%s1262] sm:$0x1]
    %s1264 = scalar_lea.vmem %s10, 1
    %v1265 = vld [vmem:[%s1264] sm:$0x1]
    %v1266 = vsel %vm163, %v1261, 0.0
    %1267 = vadd.xlane.f32.xlu0 %v1266
    %v1268 = vpop.xlane.xlu0 %1267
    %v1269 = vmul.f32 %v1268, %v649
    %v1270 = vsub.f32 %v1261, %v1269
    %v1271 = vmul.f32 %v1270, %v1270
    %v1272 = vsel %vm163, %v1271, 0.0
    %1273 = vadd.xlane.f32.xlu0 %v1272
    %v1274 = vpop.xlane.xlu0 %1273
    %v1275 = vmul.f32 %v1274, %v649
    %v1276 = vadd.f32 %v1275, 1e-12
    %v1277 = vrsqrt.pop %v1276
    %v1278 = vmul.f32 %v1277, %v1276
    %v1279 = vmul.f32 %v1278, %v1277
    %v1280 = vmul.f32 0.5, %v1279
    %v1281 = vsub.f32 1.5, %v1280
    %v1282 = vmul.f32 %v1277, %v1281
    %vm1283 = vweird.f32 %v1276
    %vm1284 = vweird.f32 %v1277
    %vm1285 = vmor %vm1283, %vm1284
    %v1286 = vsel %vm1285, %v1277, %v1282
    %v1287 = vmul.f32 %v1270, %v1286
    %v1289 = vperm.slane %v1263, 0
    %v1291 = vmul.f32 %v1289, %v1287
    %v1293 = vperm.slane %v1265, 0
    %v1295 = vadd.f32 %v1291, %v1293
    %s1296 = scalar_lea.vmem [#allocation10], 32
    %v1297 = vld [vmem:[%s1296] sm:$0xff]
    %v1298 = vld [vmem:[%s1296 + $0x8] sm:$0xff]
    %v1299 = vld [vmem:[%s1296 + $0x10] sm:$0xff]
    %v1300 = vld [vmem:[%s1296 + $0x18] sm:$0xff]
    %s1301 = scalar_lea.vmem %s12, 1
    %v1302 = vld [vmem:[%s1301] sm:$0x1]
    %v1304 = vperm.slane %v1302, 0
    %v1307 = vsel %vm163, %v1295, 0
    %1309 = vmatpush.msra.mxu0 0.0
    %1310 = vmatpush.msra.mxu0 0.0
    %1311 = vmatpush.msra.mxu0 0.0
    %1312 = vmatpush.msra.mxu0 0.0
    %1313 = vmatpush.msra.mxu0 0.0
    %1314 = vmatpush.msra.mxu0 0.0
    %1315 = vmatpush.msra.mxu0 0.0
    %1316 = vmatpush.msra.mxu0 0.0
    %1317 = vmatpush.msra.mxu0 0.0
    %1318 = vmatpush.msra.mxu0 0.0
    %1319 = vmatpush.msra.mxu0 0.0
    %1320 = vmatpush.msra.mxu0 0.0
    %1321 = vmatpush.msra.mxu0 %v1300
    %1322 = vmatpush.msra.mxu0 %v1299
    %1323 = vmatpush.msra.mxu0 %v1298
    %1324 = vmatpush.msra.mxu0 %v1297
    %1325 = vmatmul.f32.gmra.mxu0 %v1307
    %v1326 = vpop.f32.mrf.mxu0
    %v1327 = vadd.f32 %v1304, %v1326
    %1328 = vdwg.mxu0
    %v1329 = vmax.f32 %v1327, 0.0
    %s1330 = scalar_lea.vmem %s13, 64
    %v1331 = vld [vmem:[%s1330] sm:$0xff]
    %v1332 = vld [vmem:[%s1330 + $0x8] sm:$0xff]
    %v1333 = vld [vmem:[%s1330 + $0x10] sm:$0xff]
    %v1334 = vld [vmem:[%s1330 + $0x18] sm:$0xff]
    %v1335 = vld [vmem:[%s1330 + $0x20] sm:$0xff]
    %v1336 = vld [vmem:[%s1330 + $0x28] sm:$0xff]
    %v1337 = vld [vmem:[%s1330 + $0x30] sm:$0xff]
    %v1338 = vld [vmem:[%s1330 + $0x38] sm:$0xff]
    %s1339 = scalar_lea.vmem [#allocation11], 1
    %v1340 = vld [vmem:[%s1339] sm:$0x1]
    %v1342 = vperm.slane %v1340, 0
    %v1345 = vsel %vm721, %v1329, 0
    %1347 = vmatpush.msra.mxu0 0.0
    %1348 = vmatpush.msra.mxu0 0.0
    %1349 = vmatpush.msra.mxu0 0.0
    %1350 = vmatpush.msra.mxu0 0.0
    %1351 = vmatpush.msra.mxu0 0.0
    %1352 = vmatpush.msra.mxu0 0.0
    %1353 = vmatpush.msra.mxu0 0.0
    %1354 = vmatpush.msra.mxu0 0.0
    %1355 = vmatpush.msra.mxu0 %v1338
    %1356 = vmatpush.msra.mxu0 %v1337
    %1357 = vmatpush.msra.mxu0 %v1336
    %1358 = vmatpush.msra.mxu0 %v1335
    %1359 = vmatpush.msra.mxu0 %v1334
    %1360 = vmatpush.msra.mxu0 %v1333
    %1361 = vmatpush.msra.mxu0 %v1332
    %1362 = vmatpush.msra.mxu0 %v1331
    %1363 = vmatmul.f32.gmra.mxu0 %v1345
    %v1364 = vpop.f32.mrf.mxu0
    %v1365 = vadd.f32 %v1342, %v1364
    %1366 = vdwg.mxu0
    %v1367 = vadd.f32 %v1295, %v1365
    %s1368 = scalar_lea.vmem %s15, 1
    %v1369 = vld [vmem:[%s1368] sm:$0x1]
    %s1370 = scalar_lea.vmem %s16, 1
    %v1371 = vld [vmem:[%s1370] sm:$0x1]
    %v1372 = vsel %vm163, %v1367, 0.0
    %1373 = vadd.xlane.f32.xlu0 %v1372
    %v1374 = vpop.xlane.xlu0 %1373
    %v1375 = vmul.f32 %v1374, %v649
    %v1376 = vsub.f32 %v1367, %v1375
    %v1377 = vmul.f32 %v1376, %v1376
    %v1378 = vsel %vm163, %v1377, 0.0
    %1379 = vadd.xlane.f32.xlu0 %v1378
    %v1380 = vpop.xlane.xlu0 %1379
    %v1381 = vmul.f32 %v1380, %v649
    %v1382 = vadd.f32 %v1381, 1e-12
    %v1383 = vrsqrt.pop %v1382
    %v1384 = vmul.f32 %v1383, %v1382
    %v1385 = vmul.f32 %v1384, %v1383
    %v1386 = vmul.f32 0.5, %v1385
    %v1387 = vsub.f32 1.5, %v1386
    %v1388 = vmul.f32 %v1383, %v1387
    %vm1389 = vweird.f32 %v1382
    %vm1390 = vweird.f32 %v1383
    %vm1391 = vmor %vm1389, %vm1390
    %v1392 = vsel %vm1391, %v1383, %v1388
    %v1393 = vmul.f32 %v1376, %v1392
    %v1395 = vperm.slane %v1369, 0
    %v1397 = vmul.f32 %v1395, %v1393
    %v1399 = vperm.slane %v1371, 0
    %v1401 = vadd.f32 %v1397, %v1399
    %1402 = vst.msk [vmem:[#allocation13] sm:$0xff] %vm163, %v1401
    %s1403 = scalar_lea.vmem [#allocation2], 8
    %v1404 = vld [vmem:[%s1403] sm:$0xff]
    %s1405 = scalar_lea.vmem [#allocation5], 8
    %v1406 = vld [vmem:[%s1405] sm:$0xff]
    %s1407 = scalar_lea.vmem [#allocation7], 8
    %v1408 = vld [vmem:[%s1407] sm:$0xff]
    %vm1409 = vcmp.eq.f32.partialorder %v1408, 0.0
    %v1410 = vld [vmem:[%s3] sm:$0xff]
    %v1411 = vld [vmem:[%s3 + $0x8] sm:$0xff]
    %v1412 = vld [vmem:[%s3 + $0x10] sm:$0xff]
    %v1413 = vld [vmem:[%s3 + $0x18] sm:$0xff]
    %v1414 = vld [vmem:[%s4] sm:$0x1]
    %v1416 = vperm.slane %v1414, 0
    %v1419 = vsel %vm163, %v1404, 0
    %1421 = vmatpush.msra.mxu0 0.0
    %1422 = vmatpush.msra.mxu0 0.0
    %1423 = vmatpush.msra.mxu0 0.0
    %1424 = vmatpush.msra.mxu0 0.0
    %1425 = vmatpush.msra.mxu0 0.0
    %1426 = vmatpush.msra.mxu0 0.0
    %1427 = vmatpush.msra.mxu0 0.0
    %1428 = vmatpush.msra.mxu0 0.0
    %1429 = vmatpush.msra.mxu0 0.0
    %1430 = vmatpush.msra.mxu0 0.0
    %1431 = vmatpush.msra.mxu0 0.0
    %1432 = vmatpush.msra.mxu0 0.0
    %1433 = vmatpush.msra.mxu0 %v1413
    %1434 = vmatpush.msra.mxu0 %v1412
    %1435 = vmatpush.msra.mxu0 %v1411
    %1436 = vmatpush.msra.mxu0 %v1410
    %1437 = vmatmul.f32.gmra.mxu0 %v1419
    %v1438 = vpop.f32.mrf.mxu0
    %v1439 = vadd.f32 %v1416, %v1438
    %1440 = vdwg.mxu0
    %v1441 = vmul.f32 %v1439, 0.35355338
    %v1442 = vld [vmem:[%s5] sm:$0xff]
    %v1443 = vld [vmem:[%s5 + $0x8] sm:$0xff]
    %v1444 = vld [vmem:[%s5 + $0x10] sm:$0xff]
    %v1445 = vld [vmem:[%s5 + $0x18] sm:$0xff]
    %v1446 = vld [vmem:[%s6] sm:$0x1]
    %v1448 = vperm.slane %v1446, 0
    %v1451 = vsel %vm163, %v1406, 0
    %1453 = vmatpush.msra.mxu0 0.0
    %1454 = vmatpush.msra.mxu0 0.0
    %1455 = vmatpush.msra.mxu0 0.0
    %1456 = vmatpush.msra.mxu0 0.0
    %1457 = vmatpush.msra.mxu0 0.0
    %1458 = vmatpush.msra.mxu0 0.0
    %1459 = vmatpush.msra.mxu0 0.0
    %1460 = vmatpush.msra.mxu0 0.0
    %1461 = vmatpush.msra.mxu0 0.0
    %1462 = vmatpush.msra.mxu0 0.0
    %1463 = vmatpush.msra.mxu0 0.0
    %1464 = vmatpush.msra.mxu0 0.0
    %1465 = vmatpush.msra.mxu0 %v1445
    %1466 = vmatpush.msra.mxu0 %v1444
    %1467 = vmatpush.msra.mxu0 %v1443
    %1468 = vmatpush.msra.mxu0 %v1442
    %1469 = vmatmul.f32.gmra.mxu0 %v1451
    %v1470 = vpop.f32.mrf.mxu0
    %v1471 = vadd.f32 %v1448, %v1470
    %1472 = vdwg.mxu0
    %v1473 = vld [vmem:[%s7] sm:$0xff]
    %v1474 = vld [vmem:[%s7 + $0x8] sm:$0xff]
    %v1475 = vld [vmem:[%s7 + $0x10] sm:$0xff]
    %v1476 = vld [vmem:[%s7 + $0x18] sm:$0xff]
    %v1478 = vsel %vm223, %v1441, 0
    %v1481 = vsel %vm223, %v1471, 0
    %1483 = vmatpush.xpose.msra.mxu0 0.0
    %1484 = vmatpush.xpose.msra.mxu0 0.0
    %1485 = vmatpush.xpose.msra.mxu0 0.0
    %1486 = vmatpush.xpose.msra.mxu0 0.0
    %1487 = vmatpush.xpose.msra.mxu0 0.0
    %1488 = vmatpush.xpose.msra.mxu0 0.0
    %1489 = vmatpush.xpose.msra.mxu0 0.0
    %1490 = vmatpush.xpose.msra.mxu0 0.0
    %1491 = vmatpush.xpose.msra.mxu0 0.0
    %1492 = vmatpush.xpose.msra.mxu0 0.0
    %1493 = vmatpush.xpose.msra.mxu0 0.0
    %1494 = vmatpush.xpose.msra.mxu0 0.0
    %1495 = vmatpush.xpose.msra.mxu0 0.0
    %1496 = vmatpush.xpose.msra.mxu0 0.0
    %1497 = vmatpush.xpose.msra.mxu0 0.0
    %1498 = vmatpush.xpose.msra.mxu0 %v1481
    %1499 = vmatmul.f32.gmra.mxu0 %v1478
    %v1500 = vpop.f32.mrf.mxu0
    %v1501 = vadd.f32 0.0, %v1500
    %1502 = vdwg.mxu0
    %v1503 = vsel %vm1409, -10000.0, %v1501
    %v1504 = vsel %vm223, %v1503, -inf
    %1505 = vmax.xlane.f32.xlu0 %v1504
    %v1506 = vpop.xlane.xlu0 %1505
    %v1507 = vsub.f32 %v1503, %v1506
    %v1508 = vmul.f32 %v1507, 1.442695
    %v1509 = vpow.pop %v1508
    %v1510 = vsel %vm223, %v1509, 0.0
    %1511 = vadd.xlane.f32.xlu0 %v1510
    %v1512 = vpop.xlane.xlu0 %1511
    %v1513 = vrcp.pop %v1512
    %v1514 = vmul.f32 %v1512, %v1513
    %v1515 = vsub.f32 1.0, %v1514
    %v1516 = vmul.f32 %v1513, %v1515
    %v1517 = vadd.f32 %v1513, %v1516
    %vm1518 = vweird.f32 %v1512
    %vm1519 = vweird.f32 %v1513
    %vm1520 = vmor %vm1518, %vm1519
    %v1521 = vsel %vm1520, %v1513, %v1517
    %v1522 = vand.u32 2147483647, %v1512
    %vm1523 = vcmp.eq.f32.partialorder %v1522, 8.507059e+37
    %v1524 = vand.u32 %v1512, 2147483648
    %v1525 = vor.u32 1.1754944e-38, %v1524
    %v1526 = vsel %vm1523, %v1525, %v1521
    %v1527 = vmul.f32 %v1509, %v1526
    %1528 = vrot.lane.b32.xlu0 %v1471, 96
    %v1529 = vpop.permute.xlu0 %1528
    %v1532 = vsel %vm223, %v1527, 0
    %1534 = vmatpush.msra.mxu0 0.0
    %1535 = vmatpush.msra.mxu0 0.0
    %1536 = vmatpush.msra.mxu0 0.0
    %1537 = vmatpush.msra.mxu0 0.0
    %1538 = vmatpush.msra.mxu0 0.0
    %1539 = vmatpush.msra.mxu0 0.0
    %1540 = vmatpush.msra.mxu0 0.0
    %1541 = vmatpush.msra.mxu0 0.0
    %1542 = vmatpush.msra.mxu0 0.0
    %1543 = vmatpush.msra.mxu0 0.0
    %1544 = vmatpush.msra.mxu0 0.0
    %1545 = vmatpush.msra.mxu0 0.0
    %1546 = vmatpush.msra.mxu0 0.0
    %1547 = vmatpush.msra.mxu0 0.0
    %1548 = vmatpush.msra.mxu0 0.0
    %1549 = vmatpush.msra.mxu0 %v1529
    %1550 = vmatmul.f32.gmra.mxu0 %v1532
    %v1551 = vpop.f32.mrf.mxu0
    %v1552 = vadd.f32 0.0, %v1551
    %1553 = vdwg.mxu0
    %1554 = vrot.lane.b32.xlu0 %v1441, 120
    %v1555 = vpop.permute.xlu0 %1554
    %1556 = vrot.lane.b32.xlu0 %v1471, 120
    %v1557 = vpop.permute.xlu0 %1556
    %v1558 = vsel %vm223, %v1555, 0
    %v1560 = vsel %vm223, %v1557, 0
    %1562 = vmatpush.xpose.msra.mxu0 0.0
    %1563 = vmatpush.xpose.msra.mxu0 0.0
    %1564 = vmatpush.xpose.msra.mxu0 0.0
    %1565 = vmatpush.xpose.msra.mxu0 0.0
    %1566 = vmatpush.xpose.msra.mxu0 0.0
    %1567 = vmatpush.xpose.msra.mxu0 0.0
    %1568 = vmatpush.xpose.msra.mxu0 0.0
    %1569 = vmatpush.xpose.msra.mxu0 0.0
    %1570 = vmatpush.xpose.msra.mxu0 0.0
    %1571 = vmatpush.xpose.msra.mxu0 0.0
    %1572 = vmatpush.xpose.msra.mxu0 0.0
    %1573 = vmatpush.xpose.msra.mxu0 0.0
    %1574 = vmatpush.xpose.msra.mxu0 0.0
    %1575 = vmatpush.xpose.msra.mxu0 0.0
    %1576 = vmatpush.xpose.msra.mxu0 0.0
    %1577 = vmatpush.xpose.msra.mxu0 %v1560
    %1578 = vmatmul.f32.gmra.mxu0 %v1558
    %v1579 = vpop.f32.mrf.mxu0
    %v1580 = vadd.f32 0.0, %v1579
    %1581 = vdwg.mxu0
    %v1582 = vsel %vm1409, -10000.0, %v1580
    %v1583 = vsel %vm223, %v1582, -inf
    %1584 = vmax.xlane.f32.xlu0 %v1583
    %v1585 = vpop.xlane.xlu0 %1584
    %v1586 = vsub.f32 %v1582, %v1585
    %v1587 = vmul.f32 %v1586, 1.442695
    %v1588 = vpow.pop %v1587
    %v1589 = vsel %vm223, %v1588, 0.0
    %1590 = vadd.xlane.f32.xlu0 %v1589
    %v1591 = vpop.xlane.xlu0 %1590
    %v1592 = vrcp.pop %v1591
    %v1593 = vmul.f32 %v1591, %v1592
    %v1594 = vsub.f32 1.0, %v1593
    %v1595 = vmul.f32 %v1592, %v1594
    %v1596 = vadd.f32 %v1592, %v1595
    %vm1597 = vweird.f32 %v1591
    %vm1598 = vweird.f32 %v1592
    %vm1599 = vmor %vm1597, %vm1598
    %v1600 = vsel %vm1599, %v1592, %v1596
    %v1601 = vand.u32 2147483647, %v1591
    %vm1602 = vcmp.eq.f32.partialorder %v1601, 8.507059e+37
    %v1603 = vand.u32 %v1591, 2147483648
    %v1604 = vor.u32 1.1754944e-38, %v1603
    %v1605 = vsel %vm1602, %v1604, %v1600
    %v1606 = vmul.f32 %v1588, %v1605
    %1607 = vrot.lane.b32.xlu0 %v1471, 88
    %v1608 = vpop.permute.xlu0 %1607
    %v1611 = vsel %vm223, %v1606, 0
    %1613 = vmatpush.msra.mxu0 0.0
    %1614 = vmatpush.msra.mxu0 0.0
    %1615 = vmatpush.msra.mxu0 0.0
    %1616 = vmatpush.msra.mxu0 0.0
    %1617 = vmatpush.msra.mxu0 0.0
    %1618 = vmatpush.msra.mxu0 0.0
    %1619 = vmatpush.msra.mxu0 0.0
    %1620 = vmatpush.msra.mxu0 0.0
    %1621 = vmatpush.msra.mxu0 0.0
    %1622 = vmatpush.msra.mxu0 0.0
    %1623 = vmatpush.msra.mxu0 0.0
    %1624 = vmatpush.msra.mxu0 0.0
    %1625 = vmatpush.msra.mxu0 0.0
    %1626 = vmatpush.msra.mxu0 0.0
    %1627 = vmatpush.msra.mxu0 0.0
    %1628 = vmatpush.msra.mxu0 %v1608
    %1629 = vmatmul.f32.gmra.mxu0 %v1611
    %v1630 = vpop.f32.mrf.mxu0
    %v1631 = vadd.f32 0.0, %v1630
    %1632 = vdwg.mxu0
    %v1634 = vsel %vm223, %v1631, 0
    %1636 = vmatpush.msra.mxu0 0.0
    %1637 = vmatpush.msra.mxu0 0.0
    %1638 = vmatpush.msra.mxu0 0.0
    %1639 = vmatpush.msra.mxu0 0.0
    %1640 = vmatpush.msra.mxu0 0.0
    %1641 = vmatpush.msra.mxu0 0.0
    %1642 = vmatpush.msra.mxu0 0.0
    %1643 = vmatpush.msra.mxu0 0.0
    %1644 = vmatpush.msra.mxu0 0.0
    %1645 = vmatpush.msra.mxu0 0.0
    %1646 = vmatpush.msra.mxu0 0.0
    %1647 = vmatpush.msra.mxu0 0.0
    %1648 = vmatpush.msra.mxu0 0.0
    %1649 = vmatpush.msra.mxu0 0.0
    %1650 = vmatpush.msra.mxu0 0.0
    %1651 = vmatpush.msra.mxu0 %v1474
    %1652 = vmatmul.f32.gmra.mxu0 %v1634
    %v1653 = vpop.f32.mrf.mxu0
    %v1654 = vadd.f32 0.0, %v1653
    %1655 = vdwg.mxu0
    %v1657 = vsel %vm223, %v1552, 0
    %1659 = vmatpush.msra.mxu0 0.0
    %1660 = vmatpush.msra.mxu0 0.0
    %1661 = vmatpush.msra.mxu0 0.0
    %1662 = vmatpush.msra.mxu0 0.0
    %1663 = vmatpush.msra.mxu0 0.0
    %1664 = vmatpush.msra.mxu0 0.0
    %1665 = vmatpush.msra.mxu0 0.0
    %1666 = vmatpush.msra.mxu0 0.0
    %1667 = vmatpush.msra.mxu0 0.0
    %1668 = vmatpush.msra.mxu0 0.0
    %1669 = vmatpush.msra.mxu0 0.0
    %1670 = vmatpush.msra.mxu0 0.0
    %1671 = vmatpush.msra.mxu0 0.0
    %1672 = vmatpush.msra.mxu0 0.0
    %1673 = vmatpush.msra.mxu0 0.0
    %1674 = vmatpush.msra.mxu0 %v1473
    %1675 = vmatmul.f32.gmra.mxu0 %v1657
    %v1676 = vpop.f32.mrf.mxu0
    %v1677 = vadd.f32 %v1654, %v1676
    %1678 = vdwg.mxu0
    %1679 = vrot.lane.b32.xlu0 %v1441, 112
    %v1680 = vpop.permute.xlu0 %1679
    %1681 = vrot.lane.b32.xlu0 %v1471, 112
    %v1682 = vpop.permute.xlu0 %1681
    %v1683 = vsel %vm223, %v1680, 0
    %v1685 = vsel %vm223, %v1682, 0
    %1687 = vmatpush.xpose.msra.mxu0 0.0
    %1688 = vmatpush.xpose.msra.mxu0 0.0
    %1689 = vmatpush.xpose.msra.mxu0 0.0
    %1690 = vmatpush.xpose.msra.mxu0 0.0
    %1691 = vmatpush.xpose.msra.mxu0 0.0
    %1692 = vmatpush.xpose.msra.mxu0 0.0
    %1693 = vmatpush.xpose.msra.mxu0 0.0
    %1694 = vmatpush.xpose.msra.mxu0 0.0
    %1695 = vmatpush.xpose.msra.mxu0 0.0
    %1696 = vmatpush.xpose.msra.mxu0 0.0
    %1697 = vmatpush.xpose.msra.mxu0 0.0
    %1698 = vmatpush.xpose.msra.mxu0 0.0
    %1699 = vmatpush.xpose.msra.mxu0 0.0
    %1700 = vmatpush.xpose.msra.mxu0 0.0
    %1701 = vmatpush.xpose.msra.mxu0 0.0
    %1702 = vmatpush.xpose.msra.mxu0 %v1685
    %1703 = vmatmul.f32.gmra.mxu0 %v1683
    %v1704 = vpop.f32.mrf.mxu0
    %v1705 = vadd.f32 0.0, %v1704
    %1706 = vdwg.mxu0
    %v1707 = vsel %vm1409, -10000.0, %v1705
    %v1708 = vsel %vm223, %v1707, -inf
    %1709 = vmax.xlane.f32.xlu0 %v1708
    %v1710 = vpop.xlane.xlu0 %1709
    %v1711 = vsub.f32 %v1707, %v1710
    %v1712 = vmul.f32 %v1711, 1.442695
    %v1713 = vpow.pop %v1712
    %v1714 = vsel %vm223, %v1713, 0.0
    %1715 = vadd.xlane.f32.xlu0 %v1714
    %v1716 = vpop.xlane.xlu0 %1715
    %v1717 = vrcp.pop %v1716
    %v1718 = vmul.f32 %v1716, %v1717
    %v1719 = vsub.f32 1.0, %v1718
    %v1720 = vmul.f32 %v1717, %v1719
    %v1721 = vadd.f32 %v1717, %v1720
    %vm1722 = vweird.f32 %v1716
    %vm1723 = vweird.f32 %v1717
    %vm1724 = vmor %vm1722, %vm1723
    %v1725 = vsel %vm1724, %v1717, %v1721
    %v1726 = vand.u32 2147483647, %v1716
    %vm1727 = vcmp.eq.f32.partialorder %v1726, 8.507059e+37
    %v1728 = vand.u32 %v1716, 2147483648
    %v1729 = vor.u32 1.1754944e-38, %v1728
    %v1730 = vsel %vm1727, %v1729, %v1725
    %v1731 = vmul.f32 %v1713, %v1730
    %1732 = vrot.lane.b32.xlu0 %v1471, 80
    %v1733 = vpop.permute.xlu0 %1732
    %v1736 = vsel %vm223, %v1731, 0
    %1738 = vmatpush.msra.mxu0 0.0
    %1739 = vmatpush.msra.mxu0 0.0
    %1740 = vmatpush.msra.mxu0 0.0
    %1741 = vmatpush.msra.mxu0 0.0
    %1742 = vmatpush.msra.mxu0 0.0
    %1743 = vmatpush.msra.mxu0 0.0
    %1744 = vmatpush.msra.mxu0 0.0
    %1745 = vmatpush.msra.mxu0 0.0
    %1746 = vmatpush.msra.mxu0 0.0
    %1747 = vmatpush.msra.mxu0 0.0
    %1748 = vmatpush.msra.mxu0 0.0
    %1749 = vmatpush.msra.mxu0 0.0
    %1750 = vmatpush.msra.mxu0 0.0
    %1751 = vmatpush.msra.mxu0 0.0
    %1752 = vmatpush.msra.mxu0 0.0
    %1753 = vmatpush.msra.mxu0 %v1733
    %1754 = vmatmul.f32.gmra.mxu0 %v1736
    %v1755 = vpop.f32.mrf.mxu0
    %v1756 = vadd.f32 0.0, %v1755
    %1757 = vdwg.mxu0
    %v1759 = vsel %vm223, %v1756, 0
    %1761 = vmatpush.msra.mxu0 0.0
    %1762 = vmatpush.msra.mxu0 0.0
    %1763 = vmatpush.msra.mxu0 0.0
    %1764 = vmatpush.msra.mxu0 0.0
    %1765 = vmatpush.msra.mxu0 0.0
    %1766 = vmatpush.msra.mxu0 0.0
    %1767 = vmatpush.msra.mxu0 0.0
    %1768 = vmatpush.msra.mxu0 0.0
    %1769 = vmatpush.msra.mxu0 0.0
    %1770 = vmatpush.msra.mxu0 0.0
    %1771 = vmatpush.msra.mxu0 0.0
    %1772 = vmatpush.msra.mxu0 0.0
    %1773 = vmatpush.msra.mxu0 0.0
    %1774 = vmatpush.msra.mxu0 0.0
    %1775 = vmatpush.msra.mxu0 0.0
    %1776 = vmatpush.msra.mxu0 %v1475
    %1777 = vmatmul.f32.gmra.mxu0 %v1759
    %v1778 = vpop.f32.mrf.mxu0
    %v1779 = vadd.f32 0.0, %v1778
    %1780 = vdwg.mxu0
    %v1781 = vadd.f32 %v1677, %v1779
    %1782 = vrot.lane.b32.xlu0 %v1441, 104
    %v1783 = vpop.permute.xlu0 %1782
    %1784 = vrot.lane.b32.xlu0 %v1471, 104
    %v1785 = vpop.permute.xlu0 %1784
    %v1786 = vsel %vm223, %v1783, 0
    %v1788 = vsel %vm223, %v1785, 0
    %1790 = vmatpush.xpose.msra.mxu0 0.0
    %1791 = vmatpush.xpose.msra.mxu0 0.0
    %1792 = vmatpush.xpose.msra.mxu0 0.0
    %1793 = vmatpush.xpose.msra.mxu0 0.0
    %1794 = vmatpush.xpose.msra.mxu0 0.0
    %1795 = vmatpush.xpose.msra.mxu0 0.0
    %1796 = vmatpush.xpose.msra.mxu0 0.0
    %1797 = vmatpush.xpose.msra.mxu0 0.0
    %1798 = vmatpush.xpose.msra.mxu0 0.0
    %1799 = vmatpush.xpose.msra.mxu0 0.0
    %1800 = vmatpush.xpose.msra.mxu0 0.0
    %1801 = vmatpush.xpose.msra.mxu0 0.0
    %1802 = vmatpush.xpose.msra.mxu0 0.0
    %1803 = vmatpush.xpose.msra.mxu0 0.0
    %1804 = vmatpush.xpose.msra.mxu0 0.0
    %1805 = vmatpush.xpose.msra.mxu0 %v1788
    %1806 = vmatmul.f32.gmra.mxu0 %v1786
    %v1807 = vpop.f32.mrf.mxu0
    %v1808 = vadd.f32 0.0, %v1807
    %1809 = vdwg.mxu0
    %v1810 = vsel %vm1409, -10000.0, %v1808
    %v1811 = vsel %vm223, %v1810, -inf
    %1812 = vmax.xlane.f32.xlu0 %v1811
    %v1813 = vpop.xlane.xlu0 %1812
    %v1814 = vsub.f32 %v1810, %v1813
    %v1815 = vmul.f32 %v1814, 1.442695
    %v1816 = vpow.pop %v1815
    %v1817 = vsel %vm223, %v1816, 0.0
    %1818 = vadd.xlane.f32.xlu0 %v1817
    %v1819 = vpop.xlane.xlu0 %1818
    %v1820 = vrcp.pop %v1819
    %v1821 = vmul.f32 %v1819, %v1820
    %v1822 = vsub.f32 1.0, %v1821
    %v1823 = vmul.f32 %v1820, %v1822
    %v1824 = vadd.f32 %v1820, %v1823
    %vm1825 = vweird.f32 %v1819
    %vm1826 = vweird.f32 %v1820
    %vm1827 = vmor %vm1825, %vm1826
    %v1828 = vsel %vm1827, %v1820, %v1824
    %v1829 = vand.u32 2147483647, %v1819
    %vm1830 = vcmp.eq.f32.partialorder %v1829, 8.507059e+37
    %v1831 = vand.u32 %v1819, 2147483648
    %v1832 = vor.u32 1.1754944e-38, %v1831
    %v1833 = vsel %vm1830, %v1832, %v1828
    %v1834 = vmul.f32 %v1816, %v1833
    %1835 = vrot.lane.b32.xlu0 %v1471, 72
    %v1836 = vpop.permute.xlu0 %1835
    %v1839 = vsel %vm223, %v1834, 0
    %1841 = vmatpush.msra.mxu0 0.0
    %1842 = vmatpush.msra.mxu0 0.0
    %1843 = vmatpush.msra.mxu0 0.0
    %1844 = vmatpush.msra.mxu0 0.0
    %1845 = vmatpush.msra.mxu0 0.0
    %1846 = vmatpush.msra.mxu0 0.0
    %1847 = vmatpush.msra.mxu0 0.0
    %1848 = vmatpush.msra.mxu0 0.0
    %1849 = vmatpush.msra.mxu0 0.0
    %1850 = vmatpush.msra.mxu0 0.0
    %1851 = vmatpush.msra.mxu0 0.0
    %1852 = vmatpush.msra.mxu0 0.0
    %1853 = vmatpush.msra.mxu0 0.0
    %1854 = vmatpush.msra.mxu0 0.0
    %1855 = vmatpush.msra.mxu0 0.0
    %1856 = vmatpush.msra.mxu0 %v1836
    %1857 = vmatmul.f32.gmra.mxu0 %v1839
    %v1858 = vpop.f32.mrf.mxu0
    %v1859 = vadd.f32 0.0, %v1858
    %1860 = vdwg.mxu0
    %v1862 = vsel %vm223, %v1859, 0
    %1864 = vmatpush.msra.mxu0 0.0
    %1865 = vmatpush.msra.mxu0 0.0
    %1866 = vmatpush.msra.mxu0 0.0
    %1867 = vmatpush.msra.mxu0 0.0
    %1868 = vmatpush.msra.mxu0 0.0
    %1869 = vmatpush.msra.mxu0 0.0
    %1870 = vmatpush.msra.mxu0 0.0
    %1871 = vmatpush.msra.mxu0 0.0
    %1872 = vmatpush.msra.mxu0 0.0
    %1873 = vmatpush.msra.mxu0 0.0
    %1874 = vmatpush.msra.mxu0 0.0
    %1875 = vmatpush.msra.mxu0 0.0
    %1876 = vmatpush.msra.mxu0 0.0
    %1877 = vmatpush.msra.mxu0 0.0
    %1878 = vmatpush.msra.mxu0 0.0
    %1879 = vmatpush.msra.mxu0 %v1476
    %1880 = vmatmul.f32.gmra.mxu0 %v1862
    %v1881 = vpop.f32.mrf.mxu0
    %v1882 = vadd.f32 0.0, %v1881
    %1883 = vdwg.mxu0
    %v1884 = vadd.f32 %v1781, %v1882
    %v1885 = vld [vmem:[#allocation8] sm:$0x1]
    %v1887 = vperm.slane %v1885, 0
    %v1889 = vadd.f32 %v1884, %v1887
    %v1890 = vadd.f32 %v1404, %v1889
    %v1891 = vld [vmem:[%s9] sm:$0x1]
    %v1892 = vld [vmem:[%s10] sm:$0x1]
    %v1893 = vsel %vm163, %v1890, 0.0
    %1894 = vadd.xlane.f32.xlu0 %v1893
    %v1895 = vpop.xlane.xlu0 %1894
    %v1896 = vmul.f32 %v1895, %v649
    %v1897 = vsub.f32 %v1890, %v1896
    %v1898 = vmul.f32 %v1897, %v1897
    %v1899 = vsel %vm163, %v1898, 0.0
    %1900 = vadd.xlane.f32.xlu0 %v1899
    %v1901 = vpop.xlane.xlu0 %1900
    %v1902 = vmul.f32 %v1901, %v649
    %v1903 = vadd.f32 %v1902, 1e-12
    %v1904 = vrsqrt.pop %v1903
    %v1905 = vmul.f32 %v1904, %v1903
    %v1906 = vmul.f32 %v1905, %v1904
    %v1907 = vmul.f32 0.5, %v1906
    %v1908 = vsub.f32 1.5, %v1907
    %v1909 = vmul.f32 %v1904, %v1908
    %vm1910 = vweird.f32 %v1903
    %vm1911 = vweird.f32 %v1904
    %vm1912 = vmor %vm1910, %vm1911
    %v1913 = vsel %vm1912, %v1904, %v1909
    %v1914 = vmul.f32 %v1897, %v1913
    %v1916 = vperm.slane %v1891, 0
    %v1918 = vmul.f32 %v1916, %v1914
    %v1920 = vperm.slane %v1892, 0
    %v1922 = vadd.f32 %v1918, %v1920
    %v1923 = vld [vmem:[#allocation10] sm:$0xff]
    %v1924 = vld [vmem:[#allocation10 + $0x8] sm:$0xff]
    %v1925 = vld [vmem:[#allocation10 + $0x10] sm:$0xff]
    %v1926 = vld [vmem:[#allocation10 + $0x18] sm:$0xff]
    %v1927 = vld [vmem:[%s12] sm:$0x1]
    %v1929 = vperm.slane %v1927, 0
    %v1932 = vsel %vm163, %v1922, 0
    %1934 = vmatpush.msra.mxu0 0.0
    %1935 = vmatpush.msra.mxu0 0.0
    %1936 = vmatpush.msra.mxu0 0.0
    %1937 = vmatpush.msra.mxu0 0.0
    %1938 = vmatpush.msra.mxu0 0.0
    %1939 = vmatpush.msra.mxu0 0.0
    %1940 = vmatpush.msra.mxu0 0.0
    %1941 = vmatpush.msra.mxu0 0.0
    %1942 = vmatpush.msra.mxu0 0.0
    %1943 = vmatpush.msra.mxu0 0.0
    %1944 = vmatpush.msra.mxu0 0.0
    %1945 = vmatpush.msra.mxu0 0.0
    %1946 = vmatpush.msra.mxu0 %v1926
    %1947 = vmatpush.msra.mxu0 %v1925
    %1948 = vmatpush.msra.mxu0 %v1924
    %1949 = vmatpush.msra.mxu0 %v1923
    %1950 = vmatmul.f32.gmra.mxu0 %v1932
    %v1951 = vpop.f32.mrf.mxu0
    %v1952 = vadd.f32 %v1929, %v1951
    %1953 = vdwg.mxu0
    %v1954 = vmax.f32 %v1952, 0.0
    %v1955 = vld [vmem:[%s13] sm:$0xff]
    %v1956 = vld [vmem:[%s13 + $0x8] sm:$0xff]
    %v1957 = vld [vmem:[%s13 + $0x10] sm:$0xff]
    %v1958 = vld [vmem:[%s13 + $0x18] sm:$0xff]
    %v1959 = vld [vmem:[%s13 + $0x20] sm:$0xff]
    %v1960 = vld [vmem:[%s13 + $0x28] sm:$0xff]
    %v1961 = vld [vmem:[%s13 + $0x30] sm:$0xff]
    %v1962 = vld [vmem:[%s13 + $0x38] sm:$0xff]
    %v1963 = vld [vmem:[#allocation11] sm:$0x1]
    %v1965 = vperm.slane %v1963, 0
    %v1968 = vsel %vm721, %v1954, 0
    %1970 = vmatpush.msra.mxu0 0.0
    %1971 = vmatpush.msra.mxu0 0.0
    %1972 = vmatpush.msra.mxu0 0.0
    %1973 = vmatpush.msra.mxu0 0.0
    %1974 = vmatpush.msra.mxu0 0.0
    %1975 = vmatpush.msra.mxu0 0.0
    %1976 = vmatpush.msra.mxu0 0.0
    %1977 = vmatpush.msra.mxu0 0.0
    %1978 = vmatpush.msra.mxu0 %v1962
    %1979 = vmatpush.msra.mxu0 %v1961
    %1980 = vmatpush.msra.mxu0 %v1960
    %1981 = vmatpush.msra.mxu0 %v1959
    %1982 = vmatpush.msra.mxu0 %v1958
    %1983 = vmatpush.msra.mxu0 %v1957
    %1984 = vmatpush.msra.mxu0 %v1956
    %1985 = vmatpush.msra.mxu0 %v1955
    %1986 = vmatmul.f32.gmra.mxu0 %v1968
    %v1987 = vpop.f32.mrf.mxu0
    %v1988 = vadd.f32 %v1965, %v1987
    %1989 = vdwg.mxu0
    %v1990 = vadd.f32 %v1922, %v1988
    %v1991 = vld [vmem:[%s15] sm:$0x1]
    %v1992 = vld [vmem:[%s16] sm:$0x1]
    %v1993 = vsel %vm163, %v1990, 0.0
    %1994 = vadd.xlane.f32.xlu0 %v1993
    %v1995 = vpop.xlane.xlu0 %1994
    %v1996 = vmul.f32 %v1995, %v649
    %v1997 = vsub.f32 %v1990, %v1996
    %v1998 = vmul.f32 %v1997, %v1997
    %v1999 = vsel %vm163, %v1998, 0.0
    %2000 = vadd.xlane.f32.xlu0 %v1999
    %v2001 = vpop.xlane.xlu0 %2000
    %v2002 = vmul.f32 %v2001, %v649
    %v2003 = vadd.f32 %v2002, 1e-12
    %v2004 = vrsqrt.pop %v2003
    %v2005 = vmul.f32 %v2004, %v2003
    %v2006 = vmul.f32 %v2005, %v2004
    %v2007 = vmul.f32 0.5, %v2006
    %v2008 = vsub.f32 1.5, %v2007
    %v2009 = vmul.f32 %v2004, %v2008
    %vm2010 = vweird.f32 %v2003
    %vm2011 = vweird.f32 %v2004
    %vm2012 = vmor %vm2010, %vm2011
    %v2013 = vsel %vm2012, %v2004, %v2009
    %v2014 = vmul.f32 %v1997, %v2013
    %v2016 = vperm.slane %v1991, 0
    %v2018 = vmul.f32 %v2016, %v2014
    %v2020 = vperm.slane %v1992, 0
    %v2022 = vadd.f32 %v2018, %v2020
    %v2023 = vld [vmem:[%s778] sm:$0xff]
    %v2024 = vld [vmem:[%s778 + $0x8] sm:$0xff]
    %v2025 = vld [vmem:[%s778 + $0x10] sm:$0xff]
    %v2026 = vld [vmem:[%s778 + $0x18] sm:$0xff]
    %v2027 = vld [vmem:[%s783] sm:$0x1]
    %v2029 = vperm.slane %v2027, 0
    %v2032 = vsel %vm163, %v2022, 0
    %2034 = vmatpush.msra.mxu0 0.0
    %2035 = vmatpush.msra.mxu0 0.0
    %2036 = vmatpush.msra.mxu0 0.0
    %2037 = vmatpush.msra.mxu0 0.0
    %2038 = vmatpush.msra.mxu0 0.0
    %2039 = vmatpush.msra.mxu0 0.0
    %2040 = vmatpush.msra.mxu0 0.0
    %2041 = vmatpush.msra.mxu0 0.0
    %2042 = vmatpush.msra.mxu0 0.0
    %2043 = vmatpush.msra.mxu0 0.0
    %2044 = vmatpush.msra.mxu0 0.0
    %2045 = vmatpush.msra.mxu0 0.0
    %2046 = vmatpush.msra.mxu0 %v2026
    %2047 = vmatpush.msra.mxu0 %v2025
    %2048 = vmatpush.msra.mxu0 %v2024
    %2049 = vmatpush.msra.mxu0 %v2023
    %2050 = vmatmul.f32.gmra.mxu0 %v2032
    %v2051 = vpop.f32.mrf.mxu0
    %v2052 = vadd.f32 %v2029, %v2051
    %2053 = vdwg.mxu0
    %v2054 = vmul.f32 %v2052, 0.35355338
    %v2055 = vld [vmem:[%s812] sm:$0xff]
    %v2056 = vld [vmem:[%s812 + $0x8] sm:$0xff]
    %v2057 = vld [vmem:[%s812 + $0x10] sm:$0xff]
    %v2058 = vld [vmem:[%s812 + $0x18] sm:$0xff]
    %v2059 = vld [vmem:[%s817] sm:$0x1]
    %v2061 = vperm.slane %v2059, 0
    %2063 = vmatpush.msra.mxu0 0.0
    %2064 = vmatpush.msra.mxu0 0.0
    %2065 = vmatpush.msra.mxu0 0.0
    %2066 = vmatpush.msra.mxu0 0.0
    %2067 = vmatpush.msra.mxu0 0.0
    %2068 = vmatpush.msra.mxu0 0.0
    %2069 = vmatpush.msra.mxu0 0.0
    %2070 = vmatpush.msra.mxu0 0.0
    %2071 = vmatpush.msra.mxu0 0.0
    %2072 = vmatpush.msra.mxu0 0.0
    %2073 = vmatpush.msra.mxu0 0.0
    %2074 = vmatpush.msra.mxu0 0.0
    %2075 = vmatpush.msra.mxu0 %v2058
    %2076 = vmatpush.msra.mxu0 %v2057
    %2077 = vmatpush.msra.mxu0 %v2056
    %2078 = vmatpush.msra.mxu0 %v2055
    %2079 = vmatmul.f32.gmra.mxu0 %v1451
    %v2080 = vpop.f32.mrf.mxu0
    %v2081 = vadd.f32 %v2061, %v2080
    %2082 = vdwg.mxu0
    %v2083 = vld [vmem:[%s842] sm:$0xff]
    %v2084 = vld [vmem:[%s842 + $0x8] sm:$0xff]
    %v2085 = vld [vmem:[%s842 + $0x10] sm:$0xff]
    %v2086 = vld [vmem:[%s842 + $0x18] sm:$0xff]
    %v2088 = vsel %vm223, %v2054, 0
    %v2091 = vsel %vm223, %v2081, 0
    %2093 = vmatpush.xpose.msra.mxu0 0.0
    %2094 = vmatpush.xpose.msra.mxu0 0.0
    %2095 = vmatpush.xpose.msra.mxu0 0.0
    %2096 = vmatpush.xpose.msra.mxu0 0.0
    %2097 = vmatpush.xpose.msra.mxu0 0.0
    %2098 = vmatpush.xpose.msra.mxu0 0.0
    %2099 = vmatpush.xpose.msra.mxu0 0.0
    %2100 = vmatpush.xpose.msra.mxu0 0.0
    %2101 = vmatpush.xpose.msra.mxu0 0.0
    %2102 = vmatpush.xpose.msra.mxu0 0.0
    %2103 = vmatpush.xpose.msra.mxu0 0.0
    %2104 = vmatpush.xpose.msra.mxu0 0.0
    %2105 = vmatpush.xpose.msra.mxu0 0.0
    %2106 = vmatpush.xpose.msra.mxu0 0.0
    %2107 = vmatpush.xpose.msra.mxu0 0.0
    %2108 = vmatpush.xpose.msra.mxu0 %v2091
    %2109 = vmatmul.f32.gmra.mxu0 %v2088
    %v2110 = vpop.f32.mrf.mxu0
    %v2111 = vadd.f32 0.0, %v2110
    %2112 = vdwg.mxu0
    %v2113 = vsel %vm1409, -10000.0, %v2111
    %v2114 = vsel %vm223, %v2113, -inf
    %2115 = vmax.xlane.f32.xlu0 %v2114
    %v2116 = vpop.xlane.xlu0 %2115
    %v2117 = vsub.f32 %v2113, %v2116
    %v2118 = vmul.f32 %v2117, 1.442695
    %v2119 = vpow.pop %v2118
    %v2120 = vsel %vm223, %v2119, 0.0
    %2121 = vadd.xlane.f32.xlu0 %v2120
    %v2122 = vpop.xlane.xlu0 %2121
    %v2123 = vrcp.pop %v2122
    %v2124 = vmul.f32 %v2122, %v2123
    %v2125 = vsub.f32 1.0, %v2124
    %v2126 = vmul.f32 %v2123, %v2125
    %v2127 = vadd.f32 %v2123, %v2126
    %vm2128 = vweird.f32 %v2122
    %vm2129 = vweird.f32 %v2123
    %vm2130 = vmor %vm2128, %vm2129
    %v2131 = vsel %vm2130, %v2123, %v2127
    %v2132 = vand.u32 2147483647, %v2122
    %vm2133 = vcmp.eq.f32.partialorder %v2132, 8.507059e+37
    %v2134 = vand.u32 %v2122, 2147483648
    %v2135 = vor.u32 1.1754944e-38, %v2134
    %v2136 = vsel %vm2133, %v2135, %v2131
    %v2137 = vmul.f32 %v2119, %v2136
    %2138 = vrot.lane.b32.xlu0 %v2081, 96
    %v2139 = vpop.permute.xlu0 %2138
    %v2142 = vsel %vm223, %v2137, 0
    %2144 = vmatpush.msra.mxu0 0.0
    %2145 = vmatpush.msra.mxu0 0.0
    %2146 = vmatpush.msra.mxu0 0.0
    %2147 = vmatpush.msra.mxu0 0.0
    %2148 = vmatpush.msra.mxu0 0.0
    %2149 = vmatpush.msra.mxu0 0.0
    %2150 = vmatpush.msra.mxu0 0.0
    %2151 = vmatpush.msra.mxu0 0.0
    %2152 = vmatpush.msra.mxu0 0.0
    %2153 = vmatpush.msra.mxu0 0.0
    %2154 = vmatpush.msra.mxu0 0.0
    %2155 = vmatpush.msra.mxu0 0.0
    %2156 = vmatpush.msra.mxu0 0.0
    %2157 = vmatpush.msra.mxu0 0.0
    %2158 = vmatpush.msra.mxu0 0.0
    %2159 = vmatpush.msra.mxu0 %v2139
    %2160 = vmatmul.f32.gmra.mxu0 %v2142
    %v2161 = vpop.f32.mrf.mxu0
    %v2162 = vadd.f32 0.0, %v2161
    %2163 = vdwg.mxu0
    %2164 = vrot.lane.b32.xlu0 %v2054, 120
    %v2165 = vpop.permute.xlu0 %2164
    %2166 = vrot.lane.b32.xlu0 %v2081, 120
    %v2167 = vpop.permute.xlu0 %2166
    %v2168 = vsel %vm223, %v2165, 0
    %v2170 = vsel %vm223, %v2167, 0
    %2172 = vmatpush.xpose.msra.mxu0 0.0
    %2173 = vmatpush.xpose.msra.mxu0 0.0
    %2174 = vmatpush.xpose.msra.mxu0 0.0
    %2175 = vmatpush.xpose.msra.mxu0 0.0
    %2176 = vmatpush.xpose.msra.mxu0 0.0
    %2177 = vmatpush.xpose.msra.mxu0 0.0
    %2178 = vmatpush.xpose.msra.mxu0 0.0
    %2179 = vmatpush.xpose.msra.mxu0 0.0
    %2180 = vmatpush.xpose.msra.mxu0 0.0
    %2181 = vmatpush.xpose.msra.mxu0 0.0
    %2182 = vmatpush.xpose.msra.mxu0 0.0
    %2183 = vmatpush.xpose.msra.mxu0 0.0
    %2184 = vmatpush.xpose.msra.mxu0 0.0
    %2185 = vmatpush.xpose.msra.mxu0 0.0
    %2186 = vmatpush.xpose.msra.mxu0 0.0
    %2187 = vmatpush.xpose.msra.mxu0 %v2170
    %2188 = vmatmul.f32.gmra.mxu0 %v2168
    %v2189 = vpop.f32.mrf.mxu0
    %v2190 = vadd.f32 0.0, %v2189
    %2191 = vdwg.mxu0
    %v2192 = vsel %vm1409, -10000.0, %v2190
    %v2193 = vsel %vm223, %v2192, -inf
    %2194 = vmax.xlane.f32.xlu0 %v2193
    %v2195 = vpop.xlane.xlu0 %2194
    %v2196 = vsub.f32 %v2192, %v2195
    %v2197 = vmul.f32 %v2196, 1.442695
    %v2198 = vpow.pop %v2197
    %v2199 = vsel %vm223, %v2198, 0.0
    %2200 = vadd.xlane.f32.xlu0 %v2199
    %v2201 = vpop.xlane.xlu0 %2200
    %v2202 = vrcp.pop %v2201
    %v2203 = vmul.f32 %v2201, %v2202
    %v2204 = vsub.f32 1.0, %v2203
    %v2205 = vmul.f32 %v2202, %v2204
    %v2206 = vadd.f32 %v2202, %v2205
    %vm2207 = vweird.f32 %v2201
    %vm2208 = vweird.f32 %v2202
    %vm2209 = vmor %vm2207, %vm2208
    %v2210 = vsel %vm2209, %v2202, %v2206
    %v2211 = vand.u32 2147483647, %v2201
    %vm2212 = vcmp.eq.f32.partialorder %v2211, 8.507059e+37
    %v2213 = vand.u32 %v2201, 2147483648
    %v2214 = vor.u32 1.1754944e-38, %v2213
    %v2215 = vsel %vm2212, %v2214, %v2210
    %v2216 = vmul.f32 %v2198, %v2215
    %2217 = vrot.lane.b32.xlu0 %v2081, 88
    %v2218 = vpop.permute.xlu0 %2217
    %v2221 = vsel %vm223, %v2216, 0
    %2223 = vmatpush.msra.mxu0 0.0
    %2224 = vmatpush.msra.mxu0 0.0
    %2225 = vmatpush.msra.mxu0 0.0
    %2226 = vmatpush.msra.mxu0 0.0
    %2227 = vmatpush.msra.mxu0 0.0
    %2228 = vmatpush.msra.mxu0 0.0
    %2229 = vmatpush.msra.mxu0 0.0
    %2230 = vmatpush.msra.mxu0 0.0
    %2231 = vmatpush.msra.mxu0 0.0
    %2232 = vmatpush.msra.mxu0 0.0
    %2233 = vmatpush.msra.mxu0 0.0
    %2234 = vmatpush.msra.mxu0 0.0
    %2235 = vmatpush.msra.mxu0 0.0
    %2236 = vmatpush.msra.mxu0 0.0
    %2237 = vmatpush.msra.mxu0 0.0
    %2238 = vmatpush.msra.mxu0 %v2218
    %2239 = vmatmul.f32.gmra.mxu0 %v2221
    %v2240 = vpop.f32.mrf.mxu0
    %v2241 = vadd.f32 0.0, %v2240
    %2242 = vdwg.mxu0
    %v2244 = vsel %vm223, %v2241, 0
    %2246 = vmatpush.msra.mxu0 0.0
    %2247 = vmatpush.msra.mxu0 0.0
    %2248 = vmatpush.msra.mxu0 0.0
    %2249 = vmatpush.msra.mxu0 0.0
    %2250 = vmatpush.msra.mxu0 0.0
    %2251 = vmatpush.msra.mxu0 0.0
    %2252 = vmatpush.msra.mxu0 0.0
    %2253 = vmatpush.msra.mxu0 0.0
    %2254 = vmatpush.msra.mxu0 0.0
    %2255 = vmatpush.msra.mxu0 0.0
    %2256 = vmatpush.msra.mxu0 0.0
    %2257 = vmatpush.msra.mxu0 0.0
    %2258 = vmatpush.msra.mxu0 0.0
    %2259 = vmatpush.msra.mxu0 0.0
    %2260 = vmatpush.msra.mxu0 0.0
    %2261 = vmatpush.msra.mxu0 %v2084
    %2262 = vmatmul.f32.gmra.mxu0 %v2244
    %v2263 = vpop.f32.mrf.mxu0
    %v2264 = vadd.f32 0.0, %v2263
    %2265 = vdwg.mxu0
    %v2267 = vsel %vm223, %v2162, 0
    %2269 = vmatpush.msra.mxu0 0.0
    %2270 = vmatpush.msra.mxu0 0.0
    %2271 = vmatpush.msra.mxu0 0.0
    %2272 = vmatpush.msra.mxu0 0.0
    %2273 = vmatpush.msra.mxu0 0.0
    %2274 = vmatpush.msra.mxu0 0.0
    %2275 = vmatpush.msra.mxu0 0.0
    %2276 = vmatpush.msra.mxu0 0.0
    %2277 = vmatpush.msra.mxu0 0.0
    %2278 = vmatpush.msra.mxu0 0.0
    %2279 = vmatpush.msra.mxu0 0.0
    %2280 = vmatpush.msra.mxu0 0.0
    %2281 = vmatpush.msra.mxu0 0.0
    %2282 = vmatpush.msra.mxu0 0.0
    %2283 = vmatpush.msra.mxu0 0.0
    %2284 = vmatpush.msra.mxu0 %v2083
    %2285 = vmatmul.f32.gmra.mxu0 %v2267
    %v2286 = vpop.f32.mrf.mxu0
    %v2287 = vadd.f32 %v2264, %v2286
    %2288 = vdwg.mxu0
    %2289 = vrot.lane.b32.xlu0 %v2054, 112
    %v2290 = vpop.permute.xlu0 %2289
    %2291 = vrot.lane.b32.xlu0 %v2081, 112
    %v2292 = vpop.permute.xlu0 %2291
    %v2293 = vsel %vm223, %v2290, 0
    %v2295 = vsel %vm223, %v2292, 0
    %2297 = vmatpush.xpose.msra.mxu0 0.0
    %2298 = vmatpush.xpose.msra.mxu0 0.0
    %2299 = vmatpush.xpose.msra.mxu0 0.0
    %2300 = vmatpush.xpose.msra.mxu0 0.0
    %2301 = vmatpush.xpose.msra.mxu0 0.0
    %2302 = vmatpush.xpose.msra.mxu0 0.0
    %2303 = vmatpush.xpose.msra.mxu0 0.0
    %2304 = vmatpush.xpose.msra.mxu0 0.0
    %2305 = vmatpush.xpose.msra.mxu0 0.0
    %2306 = vmatpush.xpose.msra.mxu0 0.0
    %2307 = vmatpush.xpose.msra.mxu0 0.0
    %2308 = vmatpush.xpose.msra.mxu0 0.0
    %2309 = vmatpush.xpose.msra.mxu0 0.0
    %2310 = vmatpush.xpose.msra.mxu0 0.0
    %2311 = vmatpush.xpose.msra.mxu0 0.0
    %2312 = vmatpush.xpose.msra.mxu0 %v2295
    %2313 = vmatmul.f32.gmra.mxu0 %v2293
    %v2314 = vpop.f32.mrf.mxu0
    %v2315 = vadd.f32 0.0, %v2314
    %2316 = vdwg.mxu0
    %v2317 = vsel %vm1409, -10000.0, %v2315
    %v2318 = vsel %vm223, %v2317, -inf
    %2319 = vmax.xlane.f32.xlu0 %v2318
    %v2320 = vpop.xlane.xlu0 %2319
    %v2321 = vsub.f32 %v2317, %v2320
    %v2322 = vmul.f32 %v2321, 1.442695
    %v2323 = vpow.pop %v2322
    %v2324 = vsel %vm223, %v2323, 0.0
    %2325 = vadd.xlane.f32.xlu0 %v2324
    %v2326 = vpop.xlane.xlu0 %2325
    %v2327 = vrcp.pop %v2326
    %v2328 = vmul.f32 %v2326, %v2327
    %v2329 = vsub.f32 1.0, %v2328
    %v2330 = vmul.f32 %v2327, %v2329
    %v2331 = vadd.f32 %v2327, %v2330
    %vm2332 = vweird.f32 %v2326
    %vm2333 = vweird.f32 %v2327
    %vm2334 = vmor %vm2332, %vm2333
    %v2335 = vsel %vm2334, %v2327, %v2331
    %v2336 = vand.u32 2147483647, %v2326
    %vm2337 = vcmp.eq.f32.partialorder %v2336, 8.507059e+37
    %v2338 = vand.u32 %v2326, 2147483648
    %v2339 = vor.u32 1.1754944e-38, %v2338
    %v2340 = vsel %vm2337, %v2339, %v2335
    %v2341 = vmul.f32 %v2323, %v2340
    %2342 = vrot.lane.b32.xlu0 %v2081, 80
    %v2343 = vpop.permute.xlu0 %2342
    %v2346 = vsel %vm223, %v2341, 0
    %2348 = vmatpush.msra.mxu0 0.0
    %2349 = vmatpush.msra.mxu0 0.0
    %2350 = vmatpush.msra.mxu0 0.0
    %2351 = vmatpush.msra.mxu0 0.0
    %2352 = vmatpush.msra.mxu0 0.0
    %2353 = vmatpush.msra.mxu0 0.0
    %2354 = vmatpush.msra.mxu0 0.0
    %2355 = vmatpush.msra.mxu0 0.0
    %2356 = vmatpush.msra.mxu0 0.0
    %2357 = vmatpush.msra.mxu0 0.0
    %2358 = vmatpush.msra.mxu0 0.0
    %2359 = vmatpush.msra.mxu0 0.0
    %2360 = vmatpush.msra.mxu0 0.0
    %2361 = vmatpush.msra.mxu0 0.0
    %2362 = vmatpush.msra.mxu0 0.0
    %2363 = vmatpush.msra.mxu0 %v2343
    %2364 = vmatmul.f32.gmra.mxu0 %v2346
    %v2365 = vpop.f32.mrf.mxu0
    %v2366 = vadd.f32 0.0, %v2365
    %2367 = vdwg.mxu0
    %v2369 = vsel %vm223, %v2366, 0
    %2371 = vmatpush.msra.mxu0 0.0
    %2372 = vmatpush.msra.mxu0 0.0
    %2373 = vmatpush.msra.mxu0 0.0
    %2374 = vmatpush.msra.mxu0 0.0
    %2375 = vmatpush.msra.mxu0 0.0
    %2376 = vmatpush.msra.mxu0 0.0
    %2377 = vmatpush.msra.mxu0 0.0
    %2378 = vmatpush.msra.mxu0 0.0
    %2379 = vmatpush.msra.mxu0 0.0
    %2380 = vmatpush.msra.mxu0 0.0
    %2381 = vmatpush.msra.mxu0 0.0
    %2382 = vmatpush.msra.mxu0 0.0
    %2383 = vmatpush.msra.mxu0 0.0
    %2384 = vmatpush.msra.mxu0 0.0
    %2385 = vmatpush.msra.mxu0 0.0
    %2386 = vmatpush.msra.mxu0 %v2085
    %2387 = vmatmul.f32.gmra.mxu0 %v2369
    %v2388 = vpop.f32.mrf.mxu0
    %v2389 = vadd.f32 0.0, %v2388
    %2390 = vdwg.mxu0
    %v2391 = vadd.f32 %v2287, %v2389
    %2392 = vrot.lane.b32.xlu0 %v2054, 104
    %v2393 = vpop.permute.xlu0 %2392
    %2394 = vrot.lane.b32.xlu0 %v2081, 104
    %v2395 = vpop.permute.xlu0 %2394
    %v2396 = vsel %vm223, %v2393, 0
    %v2398 = vsel %vm223, %v2395, 0
    %2400 = vmatpush.xpose.msra.mxu0 0.0
    %2401 = vmatpush.xpose.msra.mxu0 0.0
    %2402 = vmatpush.xpose.msra.mxu0 0.0
    %2403 = vmatpush.xpose.msra.mxu0 0.0
    %2404 = vmatpush.xpose.msra.mxu0 0.0
    %2405 = vmatpush.xpose.msra.mxu0 0.0
    %2406 = vmatpush.xpose.msra.mxu0 0.0
    %2407 = vmatpush.xpose.msra.mxu0 0.0
    %2408 = vmatpush.xpose.msra.mxu0 0.0
    %2409 = vmatpush.xpose.msra.mxu0 0.0
    %2410 = vmatpush.xpose.msra.mxu0 0.0
    %2411 = vmatpush.xpose.msra.mxu0 0.0
    %2412 = vmatpush.xpose.msra.mxu0 0.0
    %2413 = vmatpush.xpose.msra.mxu0 0.0
    %2414 = vmatpush.xpose.msra.mxu0 0.0
    %2415 = vmatpush.xpose.msra.mxu0 %v2398
    %2416 = vmatmul.f32.gmra.mxu0 %v2396
    %v2417 = vpop.f32.mrf.mxu0
    %v2418 = vadd.f32 0.0, %v2417
    %2419 = vdwg.mxu0
    %v2420 = vsel %vm1409, -10000.0, %v2418
    %v2421 = vsel %vm223, %v2420, -inf
    %2422 = vmax.xlane.f32.xlu0 %v2421
    %v2423 = vpop.xlane.xlu0 %2422
    %v2424 = vsub.f32 %v2420, %v2423
    %v2425 = vmul.f32 %v2424, 1.442695
    %v2426 = vpow.pop %v2425
    %v2427 = vsel %vm223, %v2426, 0.0
    %2428 = vadd.xlane.f32.xlu0 %v2427
    %v2429 = vpop.xlane.xlu0 %2428
    %v2430 = vrcp.pop %v2429
    %v2431 = vmul.f32 %v2429, %v2430
    %v2432 = vsub.f32 1.0, %v2431
    %v2433 = vmul.f32 %v2430, %v2432
    %v2434 = vadd.f32 %v2430, %v2433
    %vm2435 = vweird.f32 %v2429
    %vm2436 = vweird.f32 %v2430
    %vm2437 = vmor %vm2435, %vm2436
    %v2438 = vsel %vm2437, %v2430, %v2434
    %v2439 = vand.u32 2147483647, %v2429
    %vm2440 = vcmp.eq.f32.partialorder %v2439, 8.507059e+37
    %v2441 = vand.u32 %v2429, 2147483648
    %v2442 = vor.u32 1.1754944e-38, %v2441
    %v2443 = vsel %vm2440, %v2442, %v2438
    %v2444 = vmul.f32 %v2426, %v2443
    %2445 = vrot.lane.b32.xlu0 %v2081, 72
    %v2446 = vpop.permute.xlu0 %2445
    %v2449 = vsel %vm223, %v2444, 0
    %2451 = vmatpush.msra.mxu0 0.0
    %2452 = vmatpush.msra.mxu0 0.0
    %2453 = vmatpush.msra.mxu0 0.0
    %2454 = vmatpush.msra.mxu0 0.0
    %2455 = vmatpush.msra.mxu0 0.0
    %2456 = vmatpush.msra.mxu0 0.0
    %2457 = vmatpush.msra.mxu0 0.0
    %2458 = vmatpush.msra.mxu0 0.0
    %2459 = vmatpush.msra.mxu0 0.0
    %2460 = vmatpush.msra.mxu0 0.0
    %2461 = vmatpush.msra.mxu0 0.0
    %2462 = vmatpush.msra.mxu0 0.0
    %2463 = vmatpush.msra.mxu0 0.0
    %2464 = vmatpush.msra.mxu0 0.0
    %2465 = vmatpush.msra.mxu0 0.0
    %2466 = vmatpush.msra.mxu0 %v2446
    %2467 = vmatmul.f32.gmra.mxu0 %v2449
    %v2468 = vpop.f32.mrf.mxu0
    %v2469 = vadd.f32 0.0, %v2468
    %2470 = vdwg.mxu0
    %v2472 = vsel %vm223, %v2469, 0
    %2474 = vmatpush.msra.mxu0 0.0
    %2475 = vmatpush.msra.mxu0 0.0
    %2476 = vmatpush.msra.mxu0 0.0
    %2477 = vmatpush.msra.mxu0 0.0
    %2478 = vmatpush.msra.mxu0 0.0
    %2479 = vmatpush.msra.mxu0 0.0
    %2480 = vmatpush.msra.mxu0 0.0
    %2481 = vmatpush.msra.mxu0 0.0
    %2482 = vmatpush.msra.mxu0 0.0
    %2483 = vmatpush.msra.mxu0 0.0
    %2484 = vmatpush.msra.mxu0 0.0
    %2485 = vmatpush.msra.mxu0 0.0
    %2486 = vmatpush.msra.mxu0 0.0
    %2487 = vmatpush.msra.mxu0 0.0
    %2488 = vmatpush.msra.mxu0 0.0
    %2489 = vmatpush.msra.mxu0 %v2086
    %2490 = vmatmul.f32.gmra.mxu0 %v2472
    %v2491 = vpop.f32.mrf.mxu0
    %v2492 = vadd.f32 0.0, %v2491
    %2493 = vdwg.mxu0
    %v2494 = vadd.f32 %v2391, %v2492
    %v2495 = vld [vmem:[%s1255] sm:$0x1]
    %v2497 = vperm.slane %v2495, 0
    %v2499 = vadd.f32 %v2494, %v2497
    %v2500 = vadd.f32 %v2022, %v2499
    %v2501 = vld [vmem:[%s1262] sm:$0x1]
    %v2502 = vld [vmem:[%s1264] sm:$0x1]
    %v2503 = vsel %vm163, %v2500, 0.0
    %2504 = vadd.xlane.f32.xlu0 %v2503
    %v2505 = vpop.xlane.xlu0 %2504
    %v2506 = vmul.f32 %v2505, %v649
    %v2507 = vsub.f32 %v2500, %v2506
    %v2508 = vmul.f32 %v2507, %v2507
    %v2509 = vsel %vm163, %v2508, 0.0
    %2510 = vadd.xlane.f32.xlu0 %v2509
    %v2511 = vpop.xlane.xlu0 %2510
    %v2512 = vmul.f32 %v2511, %v649
    %v2513 = vadd.f32 %v2512, 1e-12
    %v2514 = vrsqrt.pop %v2513
    %v2515 = vmul.f32 %v2514, %v2513
    %v2516 = vmul.f32 %v2515, %v2514
    %v2517 = vmul.f32 0.5, %v2516
    %v2518 = vsub.f32 1.5, %v2517
    %v2519 = vmul.f32 %v2514, %v2518
    %vm2520 = vweird.f32 %v2513
    %vm2521 = vweird.f32 %v2514
    %vm2522 = vmor %vm2520, %vm2521
    %v2523 = vsel %vm2522, %v2514, %v2519
    %v2524 = vmul.f32 %v2507, %v2523
    %v2526 = vperm.slane %v2501, 0
    %v2528 = vmul.f32 %v2526, %v2524
    %v2530 = vperm.slane %v2502, 0
    %v2532 = vadd.f32 %v2528, %v2530
    %v2533 = vld [vmem:[%s1296] sm:$0xff]
    %v2534 = vld [vmem:[%s1296 + $0x8] sm:$0xff]
    %v2535 = vld [vmem:[%s1296 + $0x10] sm:$0xff]
    %v2536 = vld [vmem:[%s1296 + $0x18] sm:$0xff]
    %v2537 = vld [vmem:[%s1301] sm:$0x1]
    %v2539 = vperm.slane %v2537, 0
    %v2542 = vsel %vm163, %v2532, 0
    %2544 = vmatpush.msra.mxu0 0.0
    %2545 = vmatpush.msra.mxu0 0.0
    %2546 = vmatpush.msra.mxu0 0.0
    %2547 = vmatpush.msra.mxu0 0.0
    %2548 = vmatpush.msra.mxu0 0.0
    %2549 = vmatpush.msra.mxu0 0.0
    %2550 = vmatpush.msra.mxu0 0.0
    %2551 = vmatpush.msra.mxu0 0.0
    %2552 = vmatpush.msra.mxu0 0.0
    %2553 = vmatpush.msra.mxu0 0.0
    %2554 = vmatpush.msra.mxu0 0.0
    %2555 = vmatpush.msra.mxu0 0.0
    %2556 = vmatpush.msra.mxu0 %v2536
    %2557 = vmatpush.msra.mxu0 %v2535
    %2558 = vmatpush.msra.mxu0 %v2534
    %2559 = vmatpush.msra.mxu0 %v2533
    %2560 = vmatmul.f32.gmra.mxu0 %v2542
    %v2561 = vpop.f32.mrf.mxu0
    %v2562 = vadd.f32 %v2539, %v2561
    %2563 = vdwg.mxu0
    %v2564 = vmax.f32 %v2562, 0.0
    %v2565 = vld [vmem:[%s1330] sm:$0xff]
    %v2566 = vld [vmem:[%s1330 + $0x8] sm:$0xff]
    %v2567 = vld [vmem:[%s1330 + $0x10] sm:$0xff]
    %v2568 = vld [vmem:[%s1330 + $0x18] sm:$0xff]
    %v2569 = vld [vmem:[%s1330 + $0x20] sm:$0xff]
    %v2570 = vld [vmem:[%s1330 + $0x28] sm:$0xff]
    %v2571 = vld [vmem:[%s1330 + $0x30] sm:$0xff]
    %v2572 = vld [vmem:[%s1330 + $0x38] sm:$0xff]
    %v2573 = vld [vmem:[%s1339] sm:$0x1]
    %v2575 = vperm.slane %v2573, 0
    %v2578 = vsel %vm721, %v2564, 0
    %2580 = vmatpush.msra.mxu0 0.0
    %2581 = vmatpush.msra.mxu0 0.0
    %2582 = vmatpush.msra.mxu0 0.0
    %2583 = vmatpush.msra.mxu0 0.0
    %2584 = vmatpush.msra.mxu0 0.0
    %2585 = vmatpush.msra.mxu0 0.0
    %2586 = vmatpush.msra.mxu0 0.0
    %2587 = vmatpush.msra.mxu0 0.0
    %2588 = vmatpush.msra.mxu0 %v2572
    %2589 = vmatpush.msra.mxu0 %v2571
    %2590 = vmatpush.msra.mxu0 %v2570
    %2591 = vmatpush.msra.mxu0 %v2569
    %2592 = vmatpush.msra.mxu0 %v2568
    %2593 = vmatpush.msra.mxu0 %v2567
    %2594 = vmatpush.msra.mxu0 %v2566
    %2595 = vmatpush.msra.mxu0 %v2565
    %2596 = vmatmul.f32.gmra.mxu0 %v2578
    %v2597 = vpop.f32.mrf.mxu0
    %v2598 = vadd.f32 %v2575, %v2597
    %2599 = vdwg.mxu0
    %v2600 = vadd.f32 %v2532, %v2598
    %v2601 = vld [vmem:[%s1368] sm:$0x1]
    %v2602 = vld [vmem:[%s1370] sm:$0x1]
    %v2603 = vsel %vm163, %v2600, 0.0
    %2604 = vadd.xlane.f32.xlu0 %v2603
    %v2605 = vpop.xlane.xlu0 %2604
    %v2606 = vmul.f32 %v2605, %v649
    %v2607 = vsub.f32 %v2600, %v2606
    %v2608 = vmul.f32 %v2607, %v2607
    %v2609 = vsel %vm163, %v2608, 0.0
    %2610 = vadd.xlane.f32.xlu0 %v2609
    %v2611 = vpop.xlane.xlu0 %2610
    %v2612 = vmul.f32 %v2611, %v649
    %v2613 = vadd.f32 %v2612, 1e-12
    %v2614 = vrsqrt.pop %v2613
    %v2615 = vmul.f32 %v2614, %v2613
    %v2616 = vmul.f32 %v2615, %v2614
    %v2617 = vmul.f32 0.5, %v2616
    %v2618 = vsub.f32 1.5, %v2617
    %v2619 = vmul.f32 %v2614, %v2618
    %vm2620 = vweird.f32 %v2613
    %vm2621 = vweird.f32 %v2614
    %vm2622 = vmor %vm2620, %vm2621
    %v2623 = vsel %vm2622, %v2614, %v2619
    %v2624 = vmul.f32 %v2607, %v2623
    %v2626 = vperm.slane %v2601, 0
    %v2628 = vmul.f32 %v2626, %v2624
    %v2630 = vperm.slane %v2602, 0
    %v2632 = vadd.f32 %v2628, %v2630
    %s2633 = scalar_lea.vmem [#allocation13], 8
    %2634 = vst.msk [vmem:[%s2633] sm:$0xff] %vm163, %v2632
    // Predicated region
    $region94: #{tpu_custom_call.1} parent=1 // pred_check
      _
    $region95: #{tpu_custom_call.1} parent=1 // pred_check_branch
      %2636 = sbr.rel (0) target = $region97
    $region96: #{tpu_custom_call.1} parent=1 // pred_region
      %2638 = vsyncadd [#allocation4], 0
      %s2639 = sshll.u32 [#allocation13], 4
      %s2640 = int_to_ptr.vmem [resolvable:$true] %s2639
      %s2641 = sshll.u32 %s17, 4
      %s2642 = int_to_ptr.hbm [resolvable:$true] %s2641
      %2647 = dma.vmem_to_hbm [thread:$0]  %s2640, 256, %s2642, [#allocation4], 128, 128, 8
    $region97: #{tpu_custom_call.1} parent=1 // pred_fallthru
      _
    // Predicated region
    $region98: #{tpu_custom_call.1} parent=1 // pred_check
      _
    $region99: #{tpu_custom_call.1} parent=1 // pred_check_branch
      %2649 = sbr.rel (0) target = $region101
    $region100: #{tpu_custom_call.1} parent=1 // pred_region
      %2651 = dma.done [#allocation4], 256
    $region101: #{tpu_custom_call.1} parent=1 // pred_fallthru
      _
    %2652 = vsyncpa [#allocation3], 1
    %2653 = vsyncpa [#allocation6], 1
    %2654 = vsyncpa [#allocation9], 1
    %2655 = vsyncpa [#allocation12], 1
    %2656 = vsyncpa [#allocation4], 1

</llo_original>
